<compile_context>
chip_gen: v7x
topology: tpu7x:2x2x1
jax: 0.10.0
libtpu: 0.0.40
codegen_flags: <defaults>
</compile_context>

<pallas_src>
import functools

import jax
import jax.numpy as jnp
from jax import lax
from jax.experimental import pallas as pl
from jax.experimental.pallas import tpu as pltpu


def _fused_kernel(scale, eps, heads, dim_head, bt, n,
                  x_ref, e_ref, wqkv_ref, wlk_ref, blk_ref, wlvt_ref, blv_ref,
                  wout_ref, bout_ref, gnw_ref, gnb_ref, mask_ref, o_ref):
    f32 = jnp.float32
    bf16 = jnp.bfloat16
    hidden = heads * dim_head
    L = wlk_ref.shape[1]

    # ---- Shared work for the whole (c, Bt*n) slab --------------------------------------
    x = x_ref[...].astype(bf16)                                          # (c, Bt*n)
    # QKV 1x1 conv for ALL heads and ALL Bt batch elements in ONE MXU pass (bf16 in, f32 acc).
    qkv = jnp.dot(wqkv_ref[...], x, preferred_element_type=f32)          # (3*hidden, Bt*n)

    # Label key/value linears for all Bt elements (tiny dots, kept f32 for accuracy;
    # exact-128-lane tiles, biases added separately -> no 129-lane padding).
    e = e_ref[...].reshape(bt, L).astype(f32)                            # (Bt, L)
    kl_all = lax.dot_general(wlk_ref[...].astype(f32), e, (((1,), (1,)), ((), ())),
                             preferred_element_type=f32) + blk_ref[...].astype(f32)  # (hidden, Bt)
    vl_all = jnp.dot(e, wlvt_ref[...].astype(f32),
                     preferred_element_type=f32) + blv_ref[...].astype(f32)          # (Bt, hidden)

    mask = mask_ref[...]                               # (hidden, hidden) f32 block-diagonal
    wout = wout_ref[...]                               # (c, hidden) bf16
    bout = bout_ref[...].astype(f32)                   # (c, 1)
    gnw = gnw_ref[...].astype(f32)                     # (c, 1)
    gnb = gnb_ref[...].astype(f32)                     # (c, 1)

    # ---- Per batch-element attention / out-conv / GroupNorm (Bt is small & static) -----
    for bi in range(bt):
        lo = bi * n
        q = qkv[0 * hidden:1 * hidden, lo:lo + n]      # (hidden, n)
        k = qkv[1 * hidden:2 * hidden, lo:lo + n]
        v = qkv[2 * hidden:3 * hidden, lo:lo + n]
        kl = kl_all[:, bi:bi + 1]                      # (hidden, 1) label key column
        vl = vl_all[bi:bi + 1, :]                      # (1, hidden) label value row

        # softmax(q) over dim_head within each head, then * scale.
        qh = q.reshape(heads, dim_head, n)
        qm = jnp.max(qh, axis=1, keepdims=True)
        eq = jnp.exp(qh - qm)
        qinv = pl.reciprocal(jnp.sum(eq, axis=1, keepdims=True), approx=True)
        qs = (eq * (qinv * scale)).reshape(hidden, n)

        # softmax(k) over the (n + 1 label) axis; label column folded analytically.
        km = jnp.maximum(jnp.max(k, axis=1, keepdims=True), kl)
        ek = jnp.exp(k - km)
        ekl = jnp.exp(kl - km)
        kinv = pl.reciprocal(jnp.sum(ek, axis=1, keepdims=True) + ekl, approx=True)
        ks = ek * kinv                                 # (hidden, n)
        kls = ekl * kinv                               # (hidden, 1)

        # Context for all heads in one (hidden x hidden) MXU pass (bf16 in, f32 acc);
        # rank-1 label term added, then cross-head blocks zeroed with the hoisted mask.
        ctx = lax.dot_general(ks.astype(bf16), v.astype(bf16),
                              (((1,), (1,)), ((), ())),
                              preferred_element_type=f32)                # (hidden, hidden)
        ctx = (ctx + kls * vl) * mask

        # out[e, n] = sum_d ctx[d, e] * qs[d, n]   (single full-width MXU pass).
        out = lax.dot_general(ctx.astype(bf16), qs.astype(bf16),
                              (((0,), (0,)), ((), ())),
                              preferred_element_type=f32)                # (hidden, n)

        # 1x1 output conv + GroupNorm(1, dim) over the whole (c, n) slab (two-pass stats).
        y = jnp.dot(wout, out.astype(bf16), preferred_element_type=f32) + bout   # (c, n)
        m = jnp.mean(y)
        d0 = y - m
        var = jnp.mean(d0 * d0)
        y = d0 * lax.rsqrt(var + eps)
        y = y * gnw + gnb
        o_ref[:, lo:lo + n] = y.astype(o_ref.dtype)


def _block_diag_mask(heads, dim_head):
    hidden = heads * dim_head
    hid = jnp.arange(hidden, dtype=jnp.int32) // dim_head
    return (hid[:, None] == hid[None, :]).astype(jnp.float32)


def pack_params(params, dim, heads, dim_head, mxu_dtype=jnp.bfloat16):
    """One-time, host-side packing of module parameters into kernel-friendly layouts/dtypes."""
    hidden = heads * dim_head
    f32 = jnp.float32
    return {
        "w_qkv": params["w_qkv"].astype(mxu_dtype),             # (3*hidden, dim) standard (M,K)
        "w_lk": params["w_lk"].astype(f32),                     # (hidden, L)  exact 128 lanes
        "b_lk": params["b_lk"].reshape(hidden, 1).astype(f32),
        "w_lv_t": jnp.transpose(params["w_lv"]).astype(f32),    # (L, hidden)
        "b_lv": params["b_lv"].reshape(1, hidden).astype(f32),
        "w_out": params["w_out"].astype(mxu_dtype),             # (dim, hidden)
        "b_out": params["b_out"].reshape(dim, 1).astype(f32),
        "gn_w": params["gn_w"].reshape(dim, 1).astype(f32),
        "gn_b": params["gn_b"].reshape(dim, 1).astype(f32),
        "mask": _block_diag_mask(heads, dim_head),              # hoisted block-diagonal mask
    }


def _pick_block_batch(b, n, target_lanes=1024):
    """Largest divisor of b whose slab width Bt*n stays near target_lanes lanes."""
    bt = 1
    for d in range(1, b + 1):
        if b % d == 0 and d * n <= max(target_lanes, n):
            bt = d
    return bt


def _vmem_limit_bytes():
    """Generation-aware scoped-VMEM limit: ~3/4 of physical, conservative fallback (v7x)."""
    cap = None
    try:
        cap = getattr(pltpu.get_tpu_info(), "vmem_capacity_bytes", None)
    except Exception:
        cap = None
    if not cap:
        cap = 64 * 1024 * 1024          # v7x per-TensorCore physical VMEM
    return min(int(cap) * 3 // 4, 112 * 1024 * 1024)


def linear_cross_attention(x, label_embedding, packed, *, heads, dim_head, block_batch=None):
    b, c, h, w = x.shape
    n = h * w
    hidden = heads * dim_head
    scale = dim_head ** (-0.5)
    L = label_embedding.shape[-1]

    bt = block_batch if block_batch is not None else _pick_block_batch(b, n)
    assert b % bt == 0
    steps = b // bt

    # Channels-major layout so each step's QKV matmul sees one lane-dense (c, Bt*n) slab.
    x_cn = x.reshape(b, c, n).transpose(1, 0, 2).reshape(c, b * n)       # native dtype
    emb = label_embedding.reshape(b, 1, L)

    kernel = functools.partial(_fused_kernel, scale, 1e-5, heads, dim_head, bt, n)
    y = pl.pallas_call(
        kernel,
        out_shape=jax.ShapeDtypeStruct((c, b * n), x.dtype),
        grid=(steps,),
        in_specs=[
            pl.BlockSpec((c, bt * n), lambda i: (0, i)),          # x slab (channels-major)
            pl.BlockSpec((bt, 1, L), lambda i: (i, 0, 0)),        # label embeddings (128 lanes)
            pl.BlockSpec((3 * hidden, c), lambda i: (0, 0)),      # qkv conv weight (M,K)
            pl.BlockSpec((hidden, L), lambda i: (0, 0)),          # label key weight
            pl.BlockSpec((hidden, 1), lambda i: (0, 0)),          # label key bias
            pl.BlockSpec((L, hidden), lambda i: (0, 0)),          # label value weight (K,N)
            pl.BlockSpec((1, hidden), lambda i: (0, 0)),          # label value bias
            pl.BlockSpec((c, hidden), lambda i: (0, 0)),          # output conv weight
            pl.BlockSpec((c, 1), lambda i: (0, 0)),               # output conv bias
            pl.BlockSpec((c, 1), lambda i: (0, 0)),               # GroupNorm gamma
            pl.BlockSpec((c, 1), lambda i: (0, 0)),               # GroupNorm beta
            pl.BlockSpec((hidden, hidden), lambda i: (0, 0)),     # block-diagonal head mask
        ],
        out_specs=pl.BlockSpec((c, bt * n), lambda i: (0, i)),    # lane-dense output slab
        compiler_params=pltpu.CompilerParams(
            dimension_semantics=("parallel",),
            vmem_limit_bytes=_vmem_limit_bytes()),
    )(x_cn, emb, packed["w_qkv"], packed["w_lk"], packed["b_lk"],
      packed["w_lv_t"], packed["b_lv"], packed["w_out"], packed["b_out"],
      packed["gn_w"], packed["gn_b"], packed["mask"])

    return y.reshape(c, b, n).transpose(1, 0, 2).reshape(b, c, h, w)


def reference(x, emb, params, heads, dim_head):
    """Pure-JAX port of the PyTorch forward, for verification."""
    b, c, h, w = x.shape
    n = h * w
    hidden = heads * dim_head
    scale = dim_head ** (-0.5)
    hp = jax.lax.Precision.HIGHEST
    xf = x.reshape(b, c, n)
    qkv = jnp.einsum('oc,bcn->bon', params["w_qkv"], xf, precision=hp)
    q, k, v = jnp.split(qkv, 3, axis=1)
    rs = lambda t: t.reshape(b, heads, dim_head, n)
    q, k, v = rs(q), rs(k), rs(v)
    lk = (emb @ params["w_lk"].T + params["b_lk"]).reshape(b, heads, dim_head, 1)
    lv = (emb @ params["w_lv"].T + params["b_lv"]).reshape(b, heads, dim_head, 1)
    k = jnp.concatenate([k, lk], axis=-1)
    v = jnp.concatenate([v, lv], axis=-1)
    q = jax.nn.softmax(q, axis=-2) * scale
    k = jax.nn.softmax(k, axis=-1)
    ctx = jnp.einsum('bhdn,bhen->bhde', k, v, precision=hp)
    out = jnp.einsum('bhde,bhdn->bhen', ctx, q, precision=hp)
    out = out.reshape(b, hidden, n)
    y = jnp.einsum('oc,bcn->bon', params["w_out"], out, precision=hp)
    y = y + params["b_out"][None, :, None]
    mean = jnp.mean(y, axis=(1, 2), keepdims=True)
    var = jnp.mean(jnp.square(y - mean), axis=(1, 2), keepdims=True)
    y = (y - mean) / jnp.sqrt(var + 1e-5)
    y = y * params["gn_w"][None, :, None] + params["gn_b"][None, :, None]
    return y.reshape(b, c, h, w)


if __name__ == "__main__":
    # Small shapes consistent with the module defaults.
    b, dim, h, w = 2, 8, 16, 16
    heads, dim_head, label_emb_dim = 4, 32, 128
    hidden = heads * dim_head

    key = jax.random.PRNGKey(0)
    ks = jax.random.split(key, 10)
    x = jax.random.normal(ks[0], (b, dim, h, w), jnp.float32)
    label_embedding = jax.random.normal(ks[1], (b, label_emb_dim), jnp.float32)

    # Deterministic synthetic parameters matching the PyTorch module's shapes.
    params = {
        "w_qkv": 0.1 * jax.random.normal(ks[2], (3 * hidden, dim), jnp.float32),   # Conv2d 1x1, no bias
        "w_out": 0.1 * jax.random.normal(ks[3], (dim, hidden), jnp.float32),       # Conv2d 1x1
        "b_out": 0.1 * jax.random.normal(ks[4], (dim,), jnp.float32),
        "w_lk": 0.1 * jax.random.normal(ks[5], (hidden, label_emb_dim), jnp.float32),
        "b_lk": 0.1 * jax.random.normal(ks[6], (hidden,), jnp.float32),
        "w_lv": 0.1 * jax.random.normal(ks[7], (hidden, label_emb_dim), jnp.float32),
        "b_lv": 0.1 * jax.random.normal(ks[8], (hidden,), jnp.float32),
        "gn_w": 1.0 + 0.1 * jax.random.normal(ks[9], (dim,), jnp.float32),          # GroupNorm affine
        "gn_b": jnp.zeros((dim,), jnp.float32),
    }

    # One-time parameter packing (hoisted out of the forward path).
    packed = pack_params(params, dim, heads, dim_head)

    fwd = jax.jit(functools.partial(linear_cross_attention,
                                    heads=heads, dim_head=dim_head))
    out = jax.block_until_ready(fwd(x, label_embedding, packed))

    ref = reference(x, label_embedding, params, heads, dim_head)
    assert out.shape == (b, dim, h, w)
    err = jnp.abs(out - ref)
    max_err = float(jnp.max(err))
    mean_err = float(jnp.mean(err))
    # bf16 MXU operands (requested by the perf review) set the numerical noise floor;
    # f32 accumulation keeps errors comfortably below these bounds.
    assert max_err < 2e-2 and mean_err < 2e-3, \
        f"mismatch vs reference: max abs err = {max_err}, mean abs err = {mean_err}"
    print("KERNEL_OK")
</pallas_src>

<mosaic_0001>
module attributes {stable_mosaic.version = 11 : i64} {
  func.func @_fused_kernel(%arg0: i32, %arg1: memref<8x512xf32, #tpu.memory_space<vmem>>, %arg2: memref<2x1x128xf32, #tpu.memory_space<vmem>>, %arg3: memref<384x8xbf16, #tpu.memory_space<vmem>>, %arg4: memref<128x128xf32, #tpu.memory_space<vmem>>, %arg5: memref<128x1xf32, #tpu.memory_space<vmem>>, %arg6: memref<128x128xf32, #tpu.memory_space<vmem>>, %arg7: memref<1x128xf32, #tpu.memory_space<vmem>>, %arg8: memref<8x128xbf16, #tpu.memory_space<vmem>>, %arg9: memref<8x1xf32, #tpu.memory_space<vmem>>, %arg10: memref<8x1xf32, #tpu.memory_space<vmem>>, %arg11: memref<8x1xf32, #tpu.memory_space<vmem>>, %arg12: memref<128x128xf32, #tpu.memory_space<vmem>>, %arg13: memref<8x512xf32, #tpu.memory_space<vmem>>) attributes {dimension_semantics = [#tpu.dimension_semantics<parallel>], iteration_bounds = array<i64: 1>, scalar_prefetch = 0 : i64, scratch_operands = 0 : i64, tpu.core_type = #tpu.core_type<tc>, window_params = [{transform_indices = @transform_0, window_bounds = array<i64: 8, 512>}, {transform_indices = @transform_1, window_bounds = array<i64: 2, 1, 128>}, {pipeline_mode = #tpu.pipeline_mode<synchronous>, transform_indices = @transform_2, window_bounds = array<i64: 384, 8>}, {pipeline_mode = #tpu.pipeline_mode<synchronous>, transform_indices = @transform_3, window_bounds = array<i64: 128, 128>}, {pipeline_mode = #tpu.pipeline_mode<synchronous>, transform_indices = @transform_4, window_bounds = array<i64: 128, 1>}, {pipeline_mode = #tpu.pipeline_mode<synchronous>, transform_indices = @transform_5, window_bounds = array<i64: 128, 128>}, {pipeline_mode = #tpu.pipeline_mode<synchronous>, transform_indices = @transform_6, window_bounds = array<i64: 1, 128>}, {pipeline_mode = #tpu.pipeline_mode<synchronous>, transform_indices = @transform_7, window_bounds = array<i64: 8, 128>}, {pipeline_mode = #tpu.pipeline_mode<synchronous>, transform_indices = @transform_8, window_bounds = array<i64: 8, 1>}, {pipeline_mode = #tpu.pipeline_mode<synchronous>, transform_indices = @transform_9, window_bounds = array<i64: 8, 1>}, {pipeline_mode = #tpu.pipeline_mode<synchronous>, transform_indices = @transform_10, window_bounds = array<i64: 8, 1>}, {pipeline_mode = #tpu.pipeline_mode<synchronous>, transform_indices = @transform_11, window_bounds = array<i64: 128, 128>}, {transform_indices = @transform_12, window_bounds = array<i64: 8, 512>}]} {
    %c0 = arith.constant 0 : index
    %c0_0 = arith.constant 0 : index
    %0 = vector.load %arg1[%c0, %c0_0] : memref<8x512xf32, #tpu.memory_space<vmem>>, vector<8x512xf32>
    %1 = arith.truncf %0 : vector<8x512xf32> to vector<8x512xbf16>
    %c0_1 = arith.constant 0 : index
    %c0_2 = arith.constant 0 : index
    %2 = vector.load %arg3[%c0_1, %c0_2] : memref<384x8xbf16, #tpu.memory_space<vmem>>, vector<384x8xbf16>
    %cst = arith.constant dense<0.000000e+00> : vector<384x512xf32>
    %3 = tpu.matmul %2, %1, %cst {dimension_numbers = #tpu.dot_dimension_numbers<[1], [0], [0], [1], [0, 0, 1, 1], [], []>} : vector<384x8xbf16>, vector<8x512xbf16>, vector<384x512xf32> -> vector<384x512xf32>
    %c0_3 = arith.constant 0 : index
    %c0_4 = arith.constant 0 : index
    %c0_5 = arith.constant 0 : index
    %4 = vector.load %arg2[%c0_3, %c0_4, %c0_5] : memref<2x1x128xf32, #tpu.memory_space<vmem>>, vector<2x1x128xf32>
    %5 = vector.shape_cast %4 : vector<2x1x128xf32> to vector<2x128xf32>
    %c0_6 = arith.constant 0 : index
    %c0_7 = arith.constant 0 : index
    %6 = vector.load %arg4[%c0_6, %c0_7] : memref<128x128xf32, #tpu.memory_space<vmem>>, vector<128x128xf32>
    %cst_8 = arith.constant dense<0.000000e+00> : vector<128x2xf32>
    %7 = tpu.matmul %6, %5, %cst_8 {dimension_numbers = #tpu.dot_dimension_numbers<[1], [1], [0], [0], [0, 0, 1, 0], [], []>} : vector<128x128xf32>, vector<2x128xf32>, vector<128x2xf32> -> vector<128x2xf32>
    %c0_9 = arith.constant 0 : index
    %c0_10 = arith.constant 0 : index
    %8 = vector.load %arg5[%c0_9, %c0_10] : memref<128x1xf32, #tpu.memory_space<vmem>>, vector<128x1xf32>
    %9 = vector.broadcast %8 : vector<128x1xf32> to vector<128x2xf32>
    %10 = arith.addf %7, %9 : vector<128x2xf32>
    %c0_11 = arith.constant 0 : index
    %c0_12 = arith.constant 0 : index
    %11 = vector.load %arg6[%c0_11, %c0_12] : memref<128x128xf32, #tpu.memory_space<vmem>>, vector<128x128xf32>
    %cst_13 = arith.constant dense<0.000000e+00> : vector<2x128xf32>
    %12 = tpu.matmul %5, %11, %cst_13 {dimension_numbers = #tpu.dot_dimension_numbers<[1], [0], [0], [1], [0, 0, 1, 1], [], []>} : vector<2x128xf32>, vector<128x128xf32>, vector<2x128xf32> -> vector<2x128xf32>
    %c0_14 = arith.constant 0 : index
    %c0_15 = arith.constant 0 : index
    %13 = vector.load %arg7[%c0_14, %c0_15] : memref<1x128xf32, #tpu.memory_space<vmem>>, vector<1x128xf32>
    %14 = vector.broadcast %13 : vector<1x128xf32> to vector<2x128xf32>
    %15 = arith.addf %12, %14 : vector<2x128xf32>
    %c0_16 = arith.constant 0 : index
    %c0_17 = arith.constant 0 : index
    %16 = vector.load %arg12[%c0_16, %c0_17] : memref<128x128xf32, #tpu.memory_space<vmem>>, vector<128x128xf32>
    %c0_18 = arith.constant 0 : index
    %c0_19 = arith.constant 0 : index
    %17 = vector.load %arg8[%c0_18, %c0_19] : memref<8x128xbf16, #tpu.memory_space<vmem>>, vector<8x128xbf16>
    %c0_20 = arith.constant 0 : index
    %c0_21 = arith.constant 0 : index
    %18 = vector.load %arg9[%c0_20, %c0_21] : memref<8x1xf32, #tpu.memory_space<vmem>>, vector<8x1xf32>
    %c0_22 = arith.constant 0 : index
    %c0_23 = arith.constant 0 : index
    %19 = vector.load %arg10[%c0_22, %c0_23] : memref<8x1xf32, #tpu.memory_space<vmem>>, vector<8x1xf32>
    %c0_24 = arith.constant 0 : index
    %c0_25 = arith.constant 0 : index
    %20 = vector.load %arg11[%c0_24, %c0_25] : memref<8x1xf32, #tpu.memory_space<vmem>>, vector<8x1xf32>
    %21 = vector.extract_strided_slice %3 {offsets = [0, 0], sizes = [128, 256], strides = [1, 1]} : vector<384x512xf32> to vector<128x256xf32>
    %22 = vector.extract_strided_slice %3 {offsets = [128, 0], sizes = [128, 256], strides = [1, 1]} : vector<384x512xf32> to vector<128x256xf32>
    %23 = vector.extract_strided_slice %3 {offsets = [256, 0], sizes = [128, 256], strides = [1, 1]} : vector<384x512xf32> to vector<128x256xf32>
    %24 = vector.extract_strided_slice %10 {offsets = [0, 0], sizes = [128, 1], strides = [1, 1]} : vector<128x2xf32> to vector<128x1xf32>
    %25 = vector.extract_strided_slice %15 {offsets = [0, 0], sizes = [1, 128], strides = [1, 1]} : vector<2x128xf32> to vector<1x128xf32>
    %26 = vector.shape_cast %21 : vector<128x256xf32> to vector<4x32x256xf32>
    %cst_26 = arith.constant dense<0xFF800000> : vector<4x256xf32>
    %27 = vector.multi_reduction <maximumf>, %26, %cst_26 [1] : vector<4x32x256xf32> to vector<4x256xf32>
    %28 = vector.shape_cast %27 : vector<4x256xf32> to vector<4x1x256xf32>
    %29 = vector.broadcast %28 : vector<4x1x256xf32> to vector<4x32x256xf32>
    %30 = arith.subf %26, %29 : vector<4x32x256xf32>
    %31 = math.exp %30 : vector<4x32x256xf32>
    %cst_27 = arith.constant dense<0.000000e+00> : vector<4x256xf32>
    %32 = vector.multi_reduction <add>, %31, %cst_27 [1] : vector<4x32x256xf32> to vector<4x256xf32>
    %33 = vector.shape_cast %32 : vector<4x256xf32> to vector<4x1x256xf32>
    %34 = tpu.reciprocal %33 {approx = true} : vector<4x1x256xf32> -> vector<4x1x256xf32>
    %cst_28 = arith.constant 0.176776692 : f32
    %35 = vector.broadcast %cst_28 : f32 to vector<4x1x256xf32>
    %36 = arith.mulf %34, %35 : vector<4x1x256xf32>
    %37 = vector.broadcast %36 : vector<4x1x256xf32> to vector<4x32x256xf32>
    %38 = arith.mulf %31, %37 : vector<4x32x256xf32>
    %39 = vector.shape_cast %38 : vector<4x32x256xf32> to vector<128x256xf32>
    %cst_29 = arith.constant dense<0xFF800000> : vector<128xf32>
    %40 = vector.multi_reduction <maximumf>, %22, %cst_29 [1] : vector<128x256xf32> to vector<128xf32>
    %41 = vector.shape_cast %40 : vector<128xf32> to vector<128x1xf32>
    %42 = arith.maximumf %41, %24 : vector<128x1xf32>
    %43 = vector.broadcast %42 : vector<128x1xf32> to vector<128x256xf32>
    %44 = arith.subf %22, %43 : vector<128x256xf32>
    %45 = math.exp %44 : vector<128x256xf32>
    %46 = arith.subf %24, %42 : vector<128x1xf32>
    %47 = math.exp %46 : vector<128x1xf32>
    %cst_30 = arith.constant dense<0.000000e+00> : vector<128xf32>
    %48 = vector.multi_reduction <add>, %45, %cst_30 [1] : vector<128x256xf32> to vector<128xf32>
    %49 = vector.shape_cast %48 : vector<128xf32> to vector<128x1xf32>
    %50 = arith.addf %49, %47 : vector<128x1xf32>
    %51 = tpu.reciprocal %50 {approx = true} : vector<128x1xf32> -> vector<128x1xf32>
    %52 = vector.broadcast %51 : vector<128x1xf32> to vector<128x256xf32>
    %53 = arith.mulf %45, %52 : vector<128x256xf32>
    %54 = arith.mulf %47, %51 : vector<128x1xf32>
    %55 = arith.truncf %53 : vector<128x256xf32> to vector<128x256xbf16>
    %56 = arith.truncf %23 : vector<128x256xf32> to vector<128x256xbf16>
    %cst_31 = arith.constant dense<0.000000e+00> : vector<128x128xf32>
    %57 = tpu.matmul %55, %56, %cst_31 {dimension_numbers = #tpu.dot_dimension_numbers<[1], [1], [0], [0], [0, 0, 1, 0], [], []>} : vector<128x256xbf16>, vector<128x256xbf16>, vector<128x128xf32> -> vector<128x128xf32>
    %58 = vector.broadcast %54 : vector<128x1xf32> to vector<128x128xf32>
    %59 = vector.broadcast %25 : vector<1x128xf32> to vector<128x128xf32>
    %60 = arith.mulf %58, %59 : vector<128x128xf32>
    %61 = arith.addf %57, %60 : vector<128x128xf32>
    %62 = arith.mulf %61, %16 : vector<128x128xf32>
    %63 = arith.truncf %62 : vector<128x128xf32> to vector<128x128xbf16>
    %64 = arith.truncf %39 : vector<128x256xf32> to vector<128x256xbf16>
    %cst_32 = arith.constant dense<0.000000e+00> : vector<128x256xf32>
    %65 = tpu.matmul %63, %64, %cst_32 {dimension_numbers = #tpu.dot_dimension_numbers<[0], [0], [1], [1], [0, 1, 1, 1], [], []>} : vector<128x128xbf16>, vector<128x256xbf16>, vector<128x256xf32> -> vector<128x256xf32>
    %66 = arith.truncf %65 : vector<128x256xf32> to vector<128x256xbf16>
    %cst_33 = arith.constant dense<0.000000e+00> : vector<8x256xf32>
    %67 = tpu.matmul %17, %66, %cst_33 {dimension_numbers = #tpu.dot_dimension_numbers<[1], [0], [0], [1], [0, 0, 1, 1], [], []>} : vector<8x128xbf16>, vector<128x256xbf16>, vector<8x256xf32> -> vector<8x256xf32>
    %68 = vector.broadcast %18 : vector<8x1xf32> to vector<8x256xf32>
    %69 = arith.addf %67, %68 : vector<8x256xf32>
    %70 = vector.shape_cast %69 : vector<8x256xf32> to vector<1x8x256xf32>
    %cst_34 = arith.constant dense<0.000000e+00> : vector<1xf32>
    %71 = vector.multi_reduction <add>, %70, %cst_34 [1, 2] : vector<1x8x256xf32> to vector<1xf32>
    %72 = vector.shape_cast %71 : vector<1xf32> to vector<1x1x1xf32>
    %73 = vector.extract %72[0, 0, 0] : f32 from vector<1x1x1xf32>
    %cst_35 = arith.constant 2.048000e+03 : f32
    %74 = arith.divf %73, %cst_35 : f32
    %75 = vector.broadcast %74 : f32 to vector<8x256xf32>
    %76 = arith.subf %69, %75 : vector<8x256xf32>
    %77 = arith.mulf %76, %76 : vector<8x256xf32>
    %78 = vector.shape_cast %77 : vector<8x256xf32> to vector<1x8x256xf32>
    %cst_36 = arith.constant dense<0.000000e+00> : vector<1xf32>
    %79 = vector.multi_reduction <add>, %78, %cst_36 [1, 2] : vector<1x8x256xf32> to vector<1xf32>
    %80 = vector.shape_cast %79 : vector<1xf32> to vector<1x1x1xf32>
    %81 = vector.extract %80[0, 0, 0] : f32 from vector<1x1x1xf32>
    %cst_37 = arith.constant 2.048000e+03 : f32
    %82 = arith.divf %81, %cst_37 : f32
    %cst_38 = arith.constant 9.99999974E-6 : f32
    %83 = arith.addf %82, %cst_38 : f32
    %84 = math.rsqrt %83 : f32
    %85 = vector.broadcast %84 : f32 to vector<8x256xf32>
    %86 = arith.mulf %76, %85 : vector<8x256xf32>
    %87 = vector.broadcast %19 : vector<8x1xf32> to vector<8x256xf32>
    %88 = arith.mulf %86, %87 : vector<8x256xf32>
    %89 = vector.broadcast %20 : vector<8x1xf32> to vector<8x256xf32>
    %90 = arith.addf %88, %89 : vector<8x256xf32>
    %c0_39 = arith.constant 0 : index
    %c0_40 = arith.constant 0 : index
    %91 = vector.load %arg13[%c0_39, %c0_40] : memref<8x512xf32, #tpu.memory_space<vmem>>, vector<8x256xf32>
    tpu.vector_store %arg13[%c0_39, %c0_40], %90 {strides = array<i32>} : memref<8x512xf32, #tpu.memory_space<vmem>>, vector<8x256xf32>,
    %92 = vector.extract_strided_slice %3 {offsets = [0, 256], sizes = [128, 256], strides = [1, 1]} : vector<384x512xf32> to vector<128x256xf32>
    %93 = vector.extract_strided_slice %3 {offsets = [128, 256], sizes = [128, 256], strides = [1, 1]} : vector<384x512xf32> to vector<128x256xf32>
    %94 = vector.extract_strided_slice %3 {offsets = [256, 256], sizes = [128, 256], strides = [1, 1]} : vector<384x512xf32> to vector<128x256xf32>
    %95 = vector.extract_strided_slice %10 {offsets = [0, 1], sizes = [128, 1], strides = [1, 1]} : vector<128x2xf32> to vector<128x1xf32>
    %96 = vector.extract_strided_slice %15 {offsets = [1, 0], sizes = [1, 128], strides = [1, 1]} : vector<2x128xf32> to vector<1x128xf32>
    %97 = vector.shape_cast %92 : vector<128x256xf32> to vector<4x32x256xf32>
    %cst_41 = arith.constant dense<0xFF800000> : vector<4x256xf32>
    %98 = vector.multi_reduction <maximumf>, %97, %cst_41 [1] : vector<4x32x256xf32> to vector<4x256xf32>
    %99 = vector.shape_cast %98 : vector<4x256xf32> to vector<4x1x256xf32>
    %100 = vector.broadcast %99 : vector<4x1x256xf32> to vector<4x32x256xf32>
    %101 = arith.subf %97, %100 : vector<4x32x256xf32>
    %102 = math.exp %101 : vector<4x32x256xf32>
    %cst_42 = arith.constant dense<0.000000e+00> : vector<4x256xf32>
    %103 = vector.multi_reduction <add>, %102, %cst_42 [1] : vector<4x32x256xf32> to vector<4x256xf32>
    %104 = vector.shape_cast %103 : vector<4x256xf32> to vector<4x1x256xf32>
    %105 = tpu.reciprocal %104 {approx = true} : vector<4x1x256xf32> -> vector<4x1x256xf32>
    %cst_43 = arith.constant 0.176776692 : f32
    %106 = vector.broadcast %cst_43 : f32 to vector<4x1x256xf32>
    %107 = arith.mulf %105, %106 : vector<4x1x256xf32>
    %108 = vector.broadcast %107 : vector<4x1x256xf32> to vector<4x32x256xf32>
    %109 = arith.mulf %102, %108 : vector<4x32x256xf32>
    %110 = vector.shape_cast %109 : vector<4x32x256xf32> to vector<128x256xf32>
    %cst_44 = arith.constant dense<0xFF800000> : vector<128xf32>
    %111 = vector.multi_reduction <maximumf>, %93, %cst_44 [1] : vector<128x256xf32> to vector<128xf32>
    %112 = vector.shape_cast %111 : vector<128xf32> to vector<128x1xf32>
    %113 = arith.maximumf %112, %95 : vector<128x1xf32>
    %114 = vector.broadcast %113 : vector<128x1xf32> to vector<128x256xf32>
    %115 = arith.subf %93, %114 : vector<128x256xf32>
    %116 = math.exp %115 : vector<128x256xf32>
    %117 = arith.subf %95, %113 : vector<128x1xf32>
    %118 = math.exp %117 : vector<128x1xf32>
    %cst_45 = arith.constant dense<0.000000e+00> : vector<128xf32>
    %119 = vector.multi_reduction <add>, %116, %cst_45 [1] : vector<128x256xf32> to vector<128xf32>
    %120 = vector.shape_cast %119 : vector<128xf32> to vector<128x1xf32>
    %121 = arith.addf %120, %118 : vector<128x1xf32>
    %122 = tpu.reciprocal %121 {approx = true} : vector<128x1xf32> -> vector<128x1xf32>
    %123 = vector.broadcast %122 : vector<128x1xf32> to vector<128x256xf32>
    %124 = arith.mulf %116, %123 : vector<128x256xf32>
    %125 = arith.mulf %118, %122 : vector<128x1xf32>
    %126 = arith.truncf %124 : vector<128x256xf32> to vector<128x256xbf16>
    %127 = arith.truncf %94 : vector<128x256xf32> to vector<128x256xbf16>
    %cst_46 = arith.constant dense<0.000000e+00> : vector<128x128xf32>
    %128 = tpu.matmul %126, %127, %cst_46 {dimension_numbers = #tpu.dot_dimension_numbers<[1], [1], [0], [0], [0, 0, 1, 0], [], []>} : vector<128x256xbf16>, vector<128x256xbf16>, vector<128x128xf32> -> vector<128x128xf32>
    %129 = vector.broadcast %125 : vector<128x1xf32> to vector<128x128xf32>
    %130 = vector.broadcast %96 : vector<1x128xf32> to vector<128x128xf32>
    %131 = arith.mulf %129, %130 : vector<128x128xf32>
    %132 = arith.addf %128, %131 : vector<128x128xf32>
    %133 = arith.mulf %132, %16 : vector<128x128xf32>
    %134 = arith.truncf %133 : vector<128x128xf32> to vector<128x128xbf16>
    %135 = arith.truncf %110 : vector<128x256xf32> to vector<128x256xbf16>
    %cst_47 = arith.constant dense<0.000000e+00> : vector<128x256xf32>
    %136 = tpu.matmul %134, %135, %cst_47 {dimension_numbers = #tpu.dot_dimension_numbers<[0], [0], [1], [1], [0, 1, 1, 1], [], []>} : vector<128x128xbf16>, vector<128x256xbf16>, vector<128x256xf32> -> vector<128x256xf32>
    %137 = arith.truncf %136 : vector<128x256xf32> to vector<128x256xbf16>
    %cst_48 = arith.constant dense<0.000000e+00> : vector<8x256xf32>
    %138 = tpu.matmul %17, %137, %cst_48 {dimension_numbers = #tpu.dot_dimension_numbers<[1], [0], [0], [1], [0, 0, 1, 1], [], []>} : vector<8x128xbf16>, vector<128x256xbf16>, vector<8x256xf32> -> vector<8x256xf32>
    %139 = vector.broadcast %18 : vector<8x1xf32> to vector<8x256xf32>
    %140 = arith.addf %138, %139 : vector<8x256xf32>
    %141 = vector.shape_cast %140 : vector<8x256xf32> to vector<1x8x256xf32>
    %cst_49 = arith.constant dense<0.000000e+00> : vector<1xf32>
    %142 = vector.multi_reduction <add>, %141, %cst_49 [1, 2] : vector<1x8x256xf32> to vector<1xf32>
    %143 = vector.shape_cast %142 : vector<1xf32> to vector<1x1x1xf32>
    %144 = vector.extract %143[0, 0, 0] : f32 from vector<1x1x1xf32>
    %cst_50 = arith.constant 2.048000e+03 : f32
    %145 = arith.divf %144, %cst_50 : f32
    %146 = vector.broadcast %145 : f32 to vector<8x256xf32>
    %147 = arith.subf %140, %146 : vector<8x256xf32>
    %148 = arith.mulf %147, %147 : vector<8x256xf32>
    %149 = vector.shape_cast %148 : vector<8x256xf32> to vector<1x8x256xf32>
    %cst_51 = arith.constant dense<0.000000e+00> : vector<1xf32>
    %150 = vector.multi_reduction <add>, %149, %cst_51 [1, 2] : vector<1x8x256xf32> to vector<1xf32>
    %151 = vector.shape_cast %150 : vector<1xf32> to vector<1x1x1xf32>
    %152 = vector.extract %151[0, 0, 0] : f32 from vector<1x1x1xf32>
    %cst_52 = arith.constant 2.048000e+03 : f32
    %153 = arith.divf %152, %cst_52 : f32
    %cst_53 = arith.constant 9.99999974E-6 : f32
    %154 = arith.addf %153, %cst_53 : f32
    %155 = math.rsqrt %154 : f32
    %156 = vector.broadcast %155 : f32 to vector<8x256xf32>
    %157 = arith.mulf %147, %156 : vector<8x256xf32>
    %158 = vector.broadcast %19 : vector<8x1xf32> to vector<8x256xf32>
    %159 = arith.mulf %157, %158 : vector<8x256xf32>
    %160 = vector.broadcast %20 : vector<8x1xf32> to vector<8x256xf32>
    %161 = arith.addf %159, %160 : vector<8x256xf32>
    %c0_54 = arith.constant 0 : index
    %c256 = arith.constant 256 : index
    %162 = vector.load %arg13[%c0_54, %c256] : memref<8x512xf32, #tpu.memory_space<vmem>>, vector<8x256xf32>
    tpu.vector_store %arg13[%c0_54, %c256], %161 {strides = array<i32>} : memref<8x512xf32, #tpu.memory_space<vmem>>, vector<8x256xf32>,
    return
  }
  func.func @transform_0(%arg0: i32) -> (i32, i32) {
    %c0_i32 = arith.constant 0 : i32
    %c0_i32_0 = arith.constant 0 : i32
    return %c0_i32, %arg0 : i32, i32
  }
  func.func @transform_1(%arg0: i32) -> (i32, i32, i32) {
    %c0_i32 = arith.constant 0 : i32
    %c0_i32_0 = arith.constant 0 : i32
    %c0_i32_1 = arith.constant 0 : i32
    return %arg0, %c0_i32, %c0_i32_0 : i32, i32, i32
  }
  func.func @transform_2(%arg0: i32) -> (i32, i32) {
    %c0_i32 = arith.constant 0 : i32
    %c0_i32_0 = arith.constant 0 : i32
    %c0_i32_1 = arith.constant 0 : i32
    return %c0_i32, %c0_i32_0 : i32, i32
  }
  func.func @transform_3(%arg0: i32) -> (i32, i32) {
    %c0_i32 = arith.constant 0 : i32
    %c0_i32_0 = arith.constant 0 : i32
    %c0_i32_1 = arith.constant 0 : i32
    return %c0_i32, %c0_i32_0 : i32, i32
  }
  func.func @transform_4(%arg0: i32) -> (i32, i32) {
    %c0_i32 = arith.constant 0 : i32
    %c0_i32_0 = arith.constant 0 : i32
    %c0_i32_1 = arith.constant 0 : i32
    return %c0_i32, %c0_i32_0 : i32, i32
  }
  func.func @transform_5(%arg0: i32) -> (i32, i32) {
    %c0_i32 = arith.constant 0 : i32
    %c0_i32_0 = arith.constant 0 : i32
    %c0_i32_1 = arith.constant 0 : i32
    return %c0_i32, %c0_i32_0 : i32, i32
  }
  func.func @transform_6(%arg0: i32) -> (i32, i32) {
    %c0_i32 = arith.constant 0 : i32
    %c0_i32_0 = arith.constant 0 : i32
    %c0_i32_1 = arith.constant 0 : i32
    return %c0_i32, %c0_i32_0 : i32, i32
  }
  func.func @transform_7(%arg0: i32) -> (i32, i32) {
    %c0_i32 = arith.constant 0 : i32
    %c0_i32_0 = arith.constant 0 : i32
    %c0_i32_1 = arith.constant 0 : i32
    return %c0_i32, %c0_i32_0 : i32, i32
  }
  func.func @transform_8(%arg0: i32) -> (i32, i32) {
    %c0_i32 = arith.constant 0 : i32
    %c0_i32_0 = arith.constant 0 : i32
    %c0_i32_1 = arith.constant 0 : i32
    return %c0_i32, %c0_i32_0 : i32, i32
  }
  func.func @transform_9(%arg0: i32) -> (i32, i32) {
    %c0_i32 = arith.constant 0 : i32
    %c0_i32_0 = arith.constant 0 : i32
    %c0_i32_1 = arith.constant 0 : i32
    return %c0_i32, %c0_i32_0 : i32, i32
  }
  func.func @transform_10(%arg0: i32) -> (i32, i32) {
    %c0_i32 = arith.constant 0 : i32
    %c0_i32_0 = arith.constant 0 : i32
    %c0_i32_1 = arith.constant 0 : i32
    return %c0_i32, %c0_i32_0 : i32, i32
  }
  func.func @transform_11(%arg0: i32) -> (i32, i32) {
    %c0_i32 = arith.constant 0 : i32
    %c0_i32_0 = arith.constant 0 : i32
    %c0_i32_1 = arith.constant 0 : i32
    return %c0_i32, %c0_i32_0 : i32, i32
  }
  func.func @transform_12(%arg0: i32) -> (i32, i32) {
    %c0_i32 = arith.constant 0 : i32
    %c0_i32_0 = arith.constant 0 : i32
    return %c0_i32, %arg0 : i32, i32
  }
}

</mosaic_0001>

<llo_original>
// kernel: linear_cross_attention.1
$region0: #{linear_cross_attention.1}
  #allocation0 [shape = 'u32[]', space=smem, size = 0x4, offset = 0x4, fixed_abs, tag = 'smem constant byte address 0x4 - core index']
  #allocation1 [shape = 'u32[144,128]{1,0:T(1,128)}', space=vmem, size = 0x12000, scoped, tag = 'internal scratch']
  %s0 = inlined_call_operand.vmem [shape: f32[8,512], index: 0, kind: input, shape index: {}]
  %s1 = inlined_call_operand.vmem [shape: f32[2,1,128], index: 1, kind: input, shape index: {}]
  %s2 = inlined_call_operand.vmem [shape: bf16[384,8], index: 2, kind: input, shape index: {}]
  %s3 = inlined_call_operand.vmem [shape: f32[128,128], index: 3, kind: input, shape index: {}]
  %s4 = inlined_call_operand.vmem [shape: f32[128,1], index: 4, kind: input, shape index: {}]
  %s5 = inlined_call_operand.vmem [shape: f32[128,128], index: 5, kind: input, shape index: {}]
  %s6 = inlined_call_operand.vmem [shape: f32[1,128], index: 6, kind: input, shape index: {}]
  %s7 = inlined_call_operand.vmem [shape: bf16[8,128], index: 7, kind: input, shape index: {}]
  %s8 = inlined_call_operand.vmem [shape: f32[8,1], index: 8, kind: input, shape index: {}]
  %s9 = inlined_call_operand.vmem [shape: f32[8,1], index: 9, kind: input, shape index: {}]
  %s10 = inlined_call_operand.vmem [shape: f32[8,1], index: 10, kind: input, shape index: {}]
  %s11 = inlined_call_operand.vmem [shape: f32[128,128], index: 11, kind: input, shape index: {}]
  %s12 = inlined_call_operand.vmem [shape: f32[8,512], index: 12, kind: output, shape index: {}]
  %s13 = sld [smem:[#allocation0]]
  $region58: #{linear_cross_attention.1} parent=0
    _
  %s15 = ssub.s32 1, %s13
  %s16 = scalar_select 0, %s15, %s13
  // Predicated region
  $region2: #{linear_cross_attention.1} parent=0 // pred_check
    _
  $region3: #{linear_cross_attention.1} parent=0 // pred_check_branch
    %18 = sbr.rel (0) target = $region5
  $region4: #{linear_cross_attention.1} parent=0 // pred_region
    _
  $region5: #{linear_cross_attention.1} parent=0 // pred_fallthru
    _
  // Predicated region
  $region6: #{linear_cross_attention.1} parent=0 // pred_check
    _
  $region7: #{linear_cross_attention.1} parent=0 // pred_check_branch
    %20 = sbr.rel (0) target = $region9
  $region8: #{linear_cross_attention.1} parent=0 // pred_region
    _
  $region9: #{linear_cross_attention.1} parent=0 // pred_fallthru
    _
  // Predicated region
  $region10: #{linear_cross_attention.1} parent=0 // pred_check
    _
  $region11: #{linear_cross_attention.1} parent=0 // pred_check_branch
    %22 = sbr.rel (0) target = $region13
  $region12: #{linear_cross_attention.1} parent=0 // pred_region
    _
  $region13: #{linear_cross_attention.1} parent=0 // pred_fallthru
    _
  // Predicated region
  $region14: #{linear_cross_attention.1} parent=0 // pred_check
    _
  $region15: #{linear_cross_attention.1} parent=0 // pred_check_branch
    %24 = sbr.rel (0) target = $region17
  $region16: #{linear_cross_attention.1} parent=0 // pred_region
    _
  $region17: #{linear_cross_attention.1} parent=0 // pred_fallthru
    _
  // Predicated region
  $region18: #{linear_cross_attention.1} parent=0 // pred_check
    _
  $region19: #{linear_cross_attention.1} parent=0 // pred_check_branch
    %26 = sbr.rel (0) target = $region21
  $region20: #{linear_cross_attention.1} parent=0 // pred_region
    _
  $region21: #{linear_cross_attention.1} parent=0 // pred_fallthru
    _
  // Predicated region
  $region22: #{linear_cross_attention.1} parent=0 // pred_check
    _
  $region23: #{linear_cross_attention.1} parent=0 // pred_check_branch
    %28 = sbr.rel (0) target = $region25
  $region24: #{linear_cross_attention.1} parent=0 // pred_region
    _
  $region25: #{linear_cross_attention.1} parent=0 // pred_fallthru
    _
  // Predicated region
  $region26: #{linear_cross_attention.1} parent=0 // pred_check
    _
  $region27: #{linear_cross_attention.1} parent=0 // pred_check_branch
    %30 = sbr.rel (0) target = $region29
  $region28: #{linear_cross_attention.1} parent=0 // pred_region
    _
  $region29: #{linear_cross_attention.1} parent=0 // pred_fallthru
    _
  // Predicated region
  $region30: #{linear_cross_attention.1} parent=0 // pred_check
    _
  $region31: #{linear_cross_attention.1} parent=0 // pred_check_branch
    %32 = sbr.rel (0) target = $region33
  $region32: #{linear_cross_attention.1} parent=0 // pred_region
    _
  $region33: #{linear_cross_attention.1} parent=0 // pred_fallthru
    _
  // Predicated region
  $region34: #{linear_cross_attention.1} parent=0 // pred_check
    _
  $region35: #{linear_cross_attention.1} parent=0 // pred_check_branch
    %34 = sbr.rel (0) target = $region37
  $region36: #{linear_cross_attention.1} parent=0 // pred_region
    _
  $region37: #{linear_cross_attention.1} parent=0 // pred_fallthru
    _
  // Predicated region
  $region38: #{linear_cross_attention.1} parent=0 // pred_check
    _
  $region39: #{linear_cross_attention.1} parent=0 // pred_check_branch
    %36 = sbr.rel (0) target = $region41
  $region40: #{linear_cross_attention.1} parent=0 // pred_region
    _
  $region41: #{linear_cross_attention.1} parent=0 // pred_fallthru
    _
  // Predicated region
  $region42: #{linear_cross_attention.1} parent=0 // pred_check
    _
  $region43: #{linear_cross_attention.1} parent=0 // pred_check_branch
    %38 = sbr.rel (0) target = $region45
  $region44: #{linear_cross_attention.1} parent=0 // pred_region
    _
  $region45: #{linear_cross_attention.1} parent=0 // pred_fallthru
    _
  // Predicated region
  $region46: #{linear_cross_attention.1} parent=0 // pred_check
    _
  $region47: #{linear_cross_attention.1} parent=0 // pred_check_branch
    %40 = sbr.rel (0) target = $region49
  $region48: #{linear_cross_attention.1} parent=0 // pred_region
    _
  $region49: #{linear_cross_attention.1} parent=0 // pred_fallthru
    _
  %v42 = vld [vmem:[%s0] sm:$0xff]
  %v43 = vld [vmem:[%s0 + $0x8] sm:$0xff]
  %v44 = vld [vmem:[%s0 + $0x10] sm:$0xff]
  %v45 = vld [vmem:[%s0 + $0x18] sm:$0xff]
  %v46 = vpack.c.bf16 %v42, %v42
  %v47 = vpack.c.bf16 %v43, %v43
  %v48 = vpack.c.bf16 %v44, %v44
  %v49 = vpack.c.bf16 %v45, %v45
  %v50 = vld [vmem:[%s2] sm:$0xf]
  %v51 = vld [vmem:[%s2 + $0x4] sm:$0xf]
  %v52 = vld [vmem:[%s2 + $0x8] sm:$0xf]
  %v53 = vld [vmem:[%s2 + $0xc] sm:$0xf]
  %v54 = vld [vmem:[%s2 + $0x10] sm:$0xf]
  %v55 = vld [vmem:[%s2 + $0x14] sm:$0xf]
  %v56 = vld [vmem:[%s2 + $0x18] sm:$0xf]
  %v57 = vld [vmem:[%s2 + $0x1c] sm:$0xf]
  %v58 = vld [vmem:[%s2 + $0x20] sm:$0xf]
  %v59 = vld [vmem:[%s2 + $0x24] sm:$0xf]
  %v60 = vld [vmem:[%s2 + $0x28] sm:$0xf]
  %v61 = vld [vmem:[%s2 + $0x2c] sm:$0xf]
  %v62 = vld [vmem:[%s2 + $0x30] sm:$0xf]
  %v63 = vld [vmem:[%s2 + $0x34] sm:$0xf]
  %v64 = vld [vmem:[%s2 + $0x38] sm:$0xf]
  %v65 = vld [vmem:[%s2 + $0x3c] sm:$0xf]
  %v66 = vld [vmem:[%s2 + $0x40] sm:$0xf]
  %v67 = vld [vmem:[%s2 + $0x44] sm:$0xf]
  %v68 = vld [vmem:[%s2 + $0x48] sm:$0xf]
  %v69 = vld [vmem:[%s2 + $0x4c] sm:$0xf]
  %v70 = vld [vmem:[%s2 + $0x50] sm:$0xf]
  %v71 = vld [vmem:[%s2 + $0x54] sm:$0xf]
  %v72 = vld [vmem:[%s2 + $0x58] sm:$0xf]
  %v73 = vld [vmem:[%s2 + $0x5c] sm:$0xf]
  %v74 = vld [vmem:[%s2 + $0x60] sm:$0xf]
  %v75 = vld [vmem:[%s2 + $0x64] sm:$0xf]
  %v76 = vld [vmem:[%s2 + $0x68] sm:$0xf]
  %v77 = vld [vmem:[%s2 + $0x6c] sm:$0xf]
  %v78 = vld [vmem:[%s2 + $0x70] sm:$0xf]
  %v79 = vld [vmem:[%s2 + $0x74] sm:$0xf]
  %v80 = vld [vmem:[%s2 + $0x78] sm:$0xf]
  %v81 = vld [vmem:[%s2 + $0x7c] sm:$0xf]
  %v82 = vld [vmem:[%s2 + $0x80] sm:$0xf]
  %v83 = vld [vmem:[%s2 + $0x84] sm:$0xf]
  %v84 = vld [vmem:[%s2 + $0x88] sm:$0xf]
  %v85 = vld [vmem:[%s2 + $0x8c] sm:$0xf]
  %v86 = vld [vmem:[%s2 + $0x90] sm:$0xf]
  %v87 = vld [vmem:[%s2 + $0x94] sm:$0xf]
  %v88 = vld [vmem:[%s2 + $0x98] sm:$0xf]
  %v89 = vld [vmem:[%s2 + $0x9c] sm:$0xf]
  %v90 = vld [vmem:[%s2 + $0xa0] sm:$0xf]
  %v91 = vld [vmem:[%s2 + $0xa4] sm:$0xf]
  %v92 = vld [vmem:[%s2 + $0xa8] sm:$0xf]
  %v93 = vld [vmem:[%s2 + $0xac] sm:$0xf]
  %v94 = vld [vmem:[%s2 + $0xb0] sm:$0xf]
  %v95 = vld [vmem:[%s2 + $0xb4] sm:$0xf]
  %v96 = vld [vmem:[%s2 + $0xb8] sm:$0xf]
  %v97 = vld [vmem:[%s2 + $0xbc] sm:$0xf]
  %v146 = vunpack.c.l.b16 %v50
  %v147 = vunpack.c.l.b16 %v51
  %v148 = vunpack.c.l.b16 %v52
  %v149 = vunpack.c.l.b16 %v53
  %v150 = vunpack.c.l.b16 %v54
  %v151 = vunpack.c.l.b16 %v55
  %v152 = vunpack.c.l.b16 %v56
  %v153 = vunpack.c.l.b16 %v57
  %v154 = vunpack.c.l.b16 %v58
  %v155 = vunpack.c.l.b16 %v59
  %v156 = vunpack.c.l.b16 %v60
  %v157 = vunpack.c.l.b16 %v61
  %v158 = vunpack.c.l.b16 %v62
  %v159 = vunpack.c.l.b16 %v63
  %v160 = vunpack.c.l.b16 %v64
  %v161 = vunpack.c.l.b16 %v65
  %v162 = vunpack.c.l.b16 %v66
  %v163 = vunpack.c.l.b16 %v67
  %v164 = vunpack.c.l.b16 %v68
  %v165 = vunpack.c.l.b16 %v69
  %v166 = vunpack.c.l.b16 %v70
  %v167 = vunpack.c.l.b16 %v71
  %v168 = vunpack.c.l.b16 %v72
  %v169 = vunpack.c.l.b16 %v73
  %v170 = vunpack.c.l.b16 %v74
  %v171 = vunpack.c.l.b16 %v75
  %v172 = vunpack.c.l.b16 %v76
  %v173 = vunpack.c.l.b16 %v77
  %v174 = vunpack.c.l.b16 %v78
  %v175 = vunpack.c.l.b16 %v79
  %v176 = vunpack.c.l.b16 %v80
  %v177 = vunpack.c.l.b16 %v81
  %v178 = vunpack.c.l.b16 %v82
  %v179 = vunpack.c.l.b16 %v83
  %v180 = vunpack.c.l.b16 %v84
  %v181 = vunpack.c.l.b16 %v85
  %v182 = vunpack.c.l.b16 %v86
  %v183 = vunpack.c.l.b16 %v87
  %v184 = vunpack.c.l.b16 %v88
  %v185 = vunpack.c.l.b16 %v89
  %v186 = vunpack.c.l.b16 %v90
  %v187 = vunpack.c.l.b16 %v91
  %v188 = vunpack.c.l.b16 %v92
  %v189 = vunpack.c.l.b16 %v93
  %v190 = vunpack.c.l.b16 %v94
  %v191 = vunpack.c.l.b16 %v95
  %v192 = vunpack.c.l.b16 %v96
  %v193 = vunpack.c.l.b16 %v97
  %v194 = vpack.c.b16 %v147, %v146
  %v195 = vpack.c.b16 %v149, %v148
  %v196 = vpack.c.b16 %v151, %v150
  %v197 = vpack.c.b16 %v153, %v152
  %v198 = vpack.c.b16 %v155, %v154
  %v199 = vpack.c.b16 %v157, %v156
  %v200 = vpack.c.b16 %v159, %v158
  %v201 = vpack.c.b16 %v161, %v160
  %v202 = vpack.c.b16 %v163, %v162
  %v203 = vpack.c.b16 %v165, %v164
  %v204 = vpack.c.b16 %v167, %v166
  %v205 = vpack.c.b16 %v169, %v168
  %v206 = vpack.c.b16 %v171, %v170
  %v207 = vpack.c.b16 %v173, %v172
  %v208 = vpack.c.b16 %v175, %v174
  %v209 = vpack.c.b16 %v177, %v176
  %v210 = vpack.c.b16 %v179, %v178
  %v211 = vpack.c.b16 %v181, %v180
  %v212 = vpack.c.b16 %v183, %v182
  %v213 = vpack.c.b16 %v185, %v184
  %v214 = vpack.c.b16 %v187, %v186
  %v215 = vpack.c.b16 %v189, %v188
  %v216 = vpack.c.b16 %v191, %v190
  %v217 = vpack.c.b16 %v193, %v192
  %vm218 = vcmask 64512
  %v220 = vsel %vm218, %v194, 0
  %v223 = vsel %vm218, %v195, 0
  %v226 = vsel %vm218, %v196, 0
  %v229 = vsel %vm218, %v197, 0
  %v232 = vsel %vm218, %v198, 0
  %v235 = vsel %vm218, %v199, 0
  %v238 = vsel %vm218, %v200, 0
  %v241 = vsel %vm218, %v201, 0
  %v244 = vsel %vm218, %v202, 0
  %v247 = vsel %vm218, %v203, 0
  %v250 = vsel %vm218, %v204, 0
  %v253 = vsel %vm218, %v205, 0
  %v256 = vsel %vm218, %v206, 0
  %v259 = vsel %vm218, %v207, 0
  %v262 = vsel %vm218, %v208, 0
  %v265 = vsel %vm218, %v209, 0
  %v268 = vsel %vm218, %v210, 0
  %v271 = vsel %vm218, %v211, 0
  %v274 = vsel %vm218, %v212, 0
  %v277 = vsel %vm218, %v213, 0
  %v280 = vsel %vm218, %v214, 0
  %v283 = vsel %vm218, %v215, 0
  %v286 = vsel %vm218, %v216, 0
  %v289 = vsel %vm218, %v217, 0
  %vm291 = vcmask 1043456
  %v293 = vsel %vm291, %v46, 0
  %v296 = vsel %vm291, %v47, 0
  %v299 = vsel %vm291, %v48, 0
  %v302 = vsel %vm291, %v49, 0
  %304 = vmatprep.subr.bf16.mxu0 %v296
  %305 = vmatpush1.bf16.msra.mxu0 %v293
  %306 = vmatprep.subr.bf16.mxu0 0
  %307 = vmatpush1.bf16.msra.mxu0 0
  %308 = vmatprep.subr.bf16.mxu0 0
  %309 = vmatpush1.bf16.msra.mxu0 0
  %310 = vmatprep.subr.bf16.mxu0 0
  %311 = vmatpush1.bf16.msra.mxu0 0
  %312 = vmatprep.subr.bf16.mxu0 0
  %313 = vmatpush1.bf16.msra.mxu0 0
  %314 = vmatprep.subr.bf16.mxu0 0
  %315 = vmatpush1.bf16.msra.mxu0 0
  %316 = vmatprep.subr.bf16.mxu0 0
  %317 = vmatpush1.bf16.msra.mxu0 0
  %318 = vmatprep.subr.bf16.mxu0 0
  %319 = vmatpush1.bf16.msra.mxu0 0
  %320 = vmatprep.subr.bf16.mxu0 0
  %321 = vmatpush1.bf16.msra.mxu0 0
  %322 = vmatprep.subr.bf16.mxu0 0
  %323 = vmatpush1.bf16.msra.mxu0 0
  %324 = vmatprep.subr.bf16.mxu0 0
  %325 = vmatpush1.bf16.msra.mxu0 0
  %326 = vmatprep.subr.bf16.mxu0 0
  %327 = vmatpush1.bf16.msra.mxu0 0
  %328 = vmatprep.subr.bf16.mxu0 0
  %329 = vmatpush1.bf16.msra.mxu0 0
  %330 = vmatprep.subr.bf16.mxu0 0
  %331 = vmatpush1.bf16.msra.mxu0 0
  %332 = vmatprep.subr.bf16.mxu0 0
  %333 = vmatpush1.bf16.msra.mxu0 0
  %334 = vmatprep.subr.bf16.mxu0 0
  %335 = vmatpush1.bf16.msra.mxu0 0
  %336 = vmatprep.mubr.bf16.mxu0 0
  %337 = vmatmul.mubr.bf16.gmra.mrb[0].mxu0 %v220
  %v338 = vpop.f32.mrb[0].mxu0
  %v339 = vadd.f32 0.0, %v338
  %v340 = vpop.f32.mrb[0].mxu0
  %v341 = vadd.f32 0.0, %v340
  %v342 = vpop.f32.mrb[0].mxu0
  %v343 = vadd.f32 0.0, %v342
  %v344 = vpop.f32.mrb[0].mxu0
  %v345 = vadd.f32 0.0, %v344
  %346 = vmatprep.mubr.bf16.mxu0 0
  %347 = vmatmul.mubr.bf16.gmra.mrb[0].mxu0 %v223
  %v348 = vpop.f32.mrb[0].mxu0
  %v349 = vadd.f32 0.0, %v348
  %v350 = vpop.f32.mrb[0].mxu0
  %v351 = vadd.f32 0.0, %v350
  %v352 = vpop.f32.mrb[0].mxu0
  %v353 = vadd.f32 0.0, %v352
  %v354 = vpop.f32.mrb[0].mxu0
  %v355 = vadd.f32 0.0, %v354
  %356 = vmatprep.mubr.bf16.mxu0 0
  %357 = vmatmul.mubr.bf16.gmra.mrb[0].mxu0 %v226
  %v358 = vpop.f32.mrb[0].mxu0
  %v359 = vadd.f32 0.0, %v358
  %v360 = vpop.f32.mrb[0].mxu0
  %v361 = vadd.f32 0.0, %v360
  %v362 = vpop.f32.mrb[0].mxu0
  %v363 = vadd.f32 0.0, %v362
  %v364 = vpop.f32.mrb[0].mxu0
  %v365 = vadd.f32 0.0, %v364
  %366 = vmatprep.mubr.bf16.mxu0 0
  %367 = vmatmul.mubr.bf16.gmra.mrb[0].mxu0 %v229
  %v368 = vpop.f32.mrb[0].mxu0
  %v369 = vadd.f32 0.0, %v368
  %v370 = vpop.f32.mrb[0].mxu0
  %v371 = vadd.f32 0.0, %v370
  %v372 = vpop.f32.mrb[0].mxu0
  %v373 = vadd.f32 0.0, %v372
  %v374 = vpop.f32.mrb[0].mxu0
  %v375 = vadd.f32 0.0, %v374
  %376 = vmatprep.mubr.bf16.mxu0 0
  %377 = vmatmul.mubr.bf16.gmra.mrb[0].mxu0 %v232
  %v378 = vpop.f32.mrb[0].mxu0
  %v379 = vadd.f32 0.0, %v378
  %v380 = vpop.f32.mrb[0].mxu0
  %v381 = vadd.f32 0.0, %v380
  %v382 = vpop.f32.mrb[0].mxu0
  %v383 = vadd.f32 0.0, %v382
  %v384 = vpop.f32.mrb[0].mxu0
  %v385 = vadd.f32 0.0, %v384
  %386 = vmatprep.mubr.bf16.mxu0 0
  %387 = vmatmul.mubr.bf16.gmra.mrb[0].mxu0 %v235
  %v388 = vpop.f32.mrb[0].mxu0
  %v389 = vadd.f32 0.0, %v388
  %v390 = vpop.f32.mrb[0].mxu0
  %v391 = vadd.f32 0.0, %v390
  %v392 = vpop.f32.mrb[0].mxu0
  %v393 = vadd.f32 0.0, %v392
  %v394 = vpop.f32.mrb[0].mxu0
  %v395 = vadd.f32 0.0, %v394
  %396 = vmatprep.mubr.bf16.mxu0 0
  %397 = vmatmul.mubr.bf16.gmra.mrb[0].mxu0 %v238
  %v398 = vpop.f32.mrb[0].mxu0
  %v399 = vadd.f32 0.0, %v398
  %v400 = vpop.f32.mrb[0].mxu0
  %v401 = vadd.f32 0.0, %v400
  %v402 = vpop.f32.mrb[0].mxu0
  %v403 = vadd.f32 0.0, %v402
  %v404 = vpop.f32.mrb[0].mxu0
  %v405 = vadd.f32 0.0, %v404
  %406 = vmatprep.mubr.bf16.mxu0 0
  %407 = vmatmul.mubr.bf16.gmra.mrb[0].mxu0 %v241
  %v408 = vpop.f32.mrb[0].mxu0
  %v409 = vadd.f32 0.0, %v408
  %v410 = vpop.f32.mrb[0].mxu0
  %v411 = vadd.f32 0.0, %v410
  %v412 = vpop.f32.mrb[0].mxu0
  %v413 = vadd.f32 0.0, %v412
  %v414 = vpop.f32.mrb[0].mxu0
  %v415 = vadd.f32 0.0, %v414
  %416 = vmatprep.mubr.bf16.mxu0 0
  %417 = vmatmul.mubr.bf16.gmra.mrb[0].mxu0 %v244
  %v418 = vpop.f32.mrb[0].mxu0
  %v419 = vadd.f32 0.0, %v418
  %v420 = vpop.f32.mrb[0].mxu0
  %v421 = vadd.f32 0.0, %v420
  %v422 = vpop.f32.mrb[0].mxu0
  %v423 = vadd.f32 0.0, %v422
  %v424 = vpop.f32.mrb[0].mxu0
  %v425 = vadd.f32 0.0, %v424
  %426 = vmatprep.mubr.bf16.mxu0 0
  %427 = vmatmul.mubr.bf16.gmra.mrb[0].mxu0 %v247
  %v428 = vpop.f32.mrb[0].mxu0
  %v429 = vadd.f32 0.0, %v428
  %v430 = vpop.f32.mrb[0].mxu0
  %v431 = vadd.f32 0.0, %v430
  %v432 = vpop.f32.mrb[0].mxu0
  %v433 = vadd.f32 0.0, %v432
  %v434 = vpop.f32.mrb[0].mxu0
  %v435 = vadd.f32 0.0, %v434
  %436 = vmatprep.mubr.bf16.mxu0 0
  %437 = vmatmul.mubr.bf16.gmra.mrb[0].mxu0 %v250
  %v438 = vpop.f32.mrb[0].mxu0
  %v439 = vadd.f32 0.0, %v438
  %v440 = vpop.f32.mrb[0].mxu0
  %v441 = vadd.f32 0.0, %v440
  %v442 = vpop.f32.mrb[0].mxu0
  %v443 = vadd.f32 0.0, %v442
  %v444 = vpop.f32.mrb[0].mxu0
  %v445 = vadd.f32 0.0, %v444
  %446 = vmatprep.mubr.bf16.mxu0 0
  %447 = vmatmul.mubr.bf16.gmra.mrb[0].mxu0 %v253
  %v448 = vpop.f32.mrb[0].mxu0
  %v449 = vadd.f32 0.0, %v448
  %v450 = vpop.f32.mrb[0].mxu0
  %v451 = vadd.f32 0.0, %v450
  %v452 = vpop.f32.mrb[0].mxu0
  %v453 = vadd.f32 0.0, %v452
  %v454 = vpop.f32.mrb[0].mxu0
  %v455 = vadd.f32 0.0, %v454
  %456 = vmatprep.mubr.bf16.mxu0 0
  %457 = vmatmul.mubr.bf16.gmra.mrb[0].mxu0 %v256
  %v458 = vpop.f32.mrb[0].mxu0
  %v459 = vadd.f32 0.0, %v458
  %v460 = vpop.f32.mrb[0].mxu0
  %v461 = vadd.f32 0.0, %v460
  %v462 = vpop.f32.mrb[0].mxu0
  %v463 = vadd.f32 0.0, %v462
  %v464 = vpop.f32.mrb[0].mxu0
  %v465 = vadd.f32 0.0, %v464
  %466 = vmatprep.mubr.bf16.mxu0 0
  %467 = vmatmul.mubr.bf16.gmra.mrb[0].mxu0 %v259
  %v468 = vpop.f32.mrb[0].mxu0
  %v469 = vadd.f32 0.0, %v468
  %v470 = vpop.f32.mrb[0].mxu0
  %v471 = vadd.f32 0.0, %v470
  %v472 = vpop.f32.mrb[0].mxu0
  %v473 = vadd.f32 0.0, %v472
  %v474 = vpop.f32.mrb[0].mxu0
  %v475 = vadd.f32 0.0, %v474
  %476 = vmatprep.mubr.bf16.mxu0 0
  %477 = vmatmul.mubr.bf16.gmra.mrb[0].mxu0 %v262
  %v478 = vpop.f32.mrb[0].mxu0
  %v479 = vadd.f32 0.0, %v478
  %v480 = vpop.f32.mrb[0].mxu0
  %v481 = vadd.f32 0.0, %v480
  %v482 = vpop.f32.mrb[0].mxu0
  %v483 = vadd.f32 0.0, %v482
  %v484 = vpop.f32.mrb[0].mxu0
  %v485 = vadd.f32 0.0, %v484
  %486 = vmatprep.mubr.bf16.mxu0 0
  %487 = vmatmul.mubr.bf16.gmra.mrb[0].mxu0 %v265
  %v488 = vpop.f32.mrb[0].mxu0
  %v489 = vadd.f32 0.0, %v488
  %v490 = vpop.f32.mrb[0].mxu0
  %v491 = vadd.f32 0.0, %v490
  %v492 = vpop.f32.mrb[0].mxu0
  %v493 = vadd.f32 0.0, %v492
  %v494 = vpop.f32.mrb[0].mxu0
  %v495 = vadd.f32 0.0, %v494
  %496 = vmatprep.mubr.bf16.mxu0 0
  %497 = vmatmul.mubr.bf16.gmra.mrb[0].mxu0 %v268
  %v498 = vpop.f32.mrb[0].mxu0
  %v499 = vadd.f32 0.0, %v498
  %v500 = vpop.f32.mrb[0].mxu0
  %v501 = vadd.f32 0.0, %v500
  %v502 = vpop.f32.mrb[0].mxu0
  %v503 = vadd.f32 0.0, %v502
  %v504 = vpop.f32.mrb[0].mxu0
  %v505 = vadd.f32 0.0, %v504
  %506 = vmatprep.mubr.bf16.mxu0 0
  %507 = vmatmul.mubr.bf16.gmra.mrb[0].mxu0 %v271
  %v508 = vpop.f32.mrb[0].mxu0
  %v509 = vadd.f32 0.0, %v508
  %v510 = vpop.f32.mrb[0].mxu0
  %v511 = vadd.f32 0.0, %v510
  %v512 = vpop.f32.mrb[0].mxu0
  %v513 = vadd.f32 0.0, %v512
  %v514 = vpop.f32.mrb[0].mxu0
  %v515 = vadd.f32 0.0, %v514
  %516 = vmatprep.mubr.bf16.mxu0 0
  %517 = vmatmul.mubr.bf16.gmra.mrb[0].mxu0 %v274
  %v518 = vpop.f32.mrb[0].mxu0
  %v519 = vadd.f32 0.0, %v518
  %v520 = vpop.f32.mrb[0].mxu0
  %v521 = vadd.f32 0.0, %v520
  %v522 = vpop.f32.mrb[0].mxu0
  %v523 = vadd.f32 0.0, %v522
  %v524 = vpop.f32.mrb[0].mxu0
  %v525 = vadd.f32 0.0, %v524
  %526 = vmatprep.mubr.bf16.mxu0 0
  %527 = vmatmul.mubr.bf16.gmra.mrb[0].mxu0 %v277
  %v528 = vpop.f32.mrb[0].mxu0
  %v529 = vadd.f32 0.0, %v528
  %v530 = vpop.f32.mrb[0].mxu0
  %v531 = vadd.f32 0.0, %v530
  %v532 = vpop.f32.mrb[0].mxu0
  %v533 = vadd.f32 0.0, %v532
  %v534 = vpop.f32.mrb[0].mxu0
  %v535 = vadd.f32 0.0, %v534
  %536 = vmatprep.mubr.bf16.mxu0 0
  %537 = vmatmul.mubr.bf16.gmra.mrb[0].mxu0 %v280
  %v538 = vpop.f32.mrb[0].mxu0
  %v539 = vadd.f32 0.0, %v538
  %v540 = vpop.f32.mrb[0].mxu0
  %v541 = vadd.f32 0.0, %v540
  %v542 = vpop.f32.mrb[0].mxu0
  %v543 = vadd.f32 0.0, %v542
  %v544 = vpop.f32.mrb[0].mxu0
  %v545 = vadd.f32 0.0, %v544
  %546 = vmatprep.mubr.bf16.mxu0 0
  %547 = vmatmul.mubr.bf16.gmra.mrb[0].mxu0 %v283
  %v548 = vpop.f32.mrb[0].mxu0
  %v549 = vadd.f32 0.0, %v548
  %v550 = vpop.f32.mrb[0].mxu0
  %v551 = vadd.f32 0.0, %v550
  %v552 = vpop.f32.mrb[0].mxu0
  %v553 = vadd.f32 0.0, %v552
  %v554 = vpop.f32.mrb[0].mxu0
  %v555 = vadd.f32 0.0, %v554
  %556 = vmatprep.mubr.bf16.mxu0 0
  %557 = vmatmul.mubr.bf16.gmra.mrb[0].mxu0 %v286
  %v558 = vpop.f32.mrb[0].mxu0
  %v559 = vadd.f32 0.0, %v558
  %v560 = vpop.f32.mrb[0].mxu0
  %v561 = vadd.f32 0.0, %v560
  %v562 = vpop.f32.mrb[0].mxu0
  %v563 = vadd.f32 0.0, %v562
  %v564 = vpop.f32.mrb[0].mxu0
  %v565 = vadd.f32 0.0, %v564
  %566 = vmatprep.mubr.bf16.mxu0 0
  %567 = vmatmul.mubr.bf16.gmra.mrb[0].mxu0 %v289
  %v568 = vpop.f32.mrb[0].mxu0
  %v569 = vadd.f32 0.0, %v568
  %v570 = vpop.f32.mrb[0].mxu0
  %v571 = vadd.f32 0.0, %v570
  %v572 = vpop.f32.mrb[0].mxu0
  %v573 = vadd.f32 0.0, %v572
  %v574 = vpop.f32.mrb[0].mxu0
  %v575 = vadd.f32 0.0, %v574
  %576 = vdwg.mxu0
  %577 = vmatprep.subr.bf16.mxu0 %v302
  %578 = vmatpush1.bf16.msra.mxu0 %v299
  %579 = vmatprep.subr.bf16.mxu0 0
  %580 = vmatpush1.bf16.msra.mxu0 0
  %581 = vmatprep.subr.bf16.mxu0 0
  %582 = vmatpush1.bf16.msra.mxu0 0
  %583 = vmatprep.subr.bf16.mxu0 0
  %584 = vmatpush1.bf16.msra.mxu0 0
  %585 = vmatprep.subr.bf16.mxu0 0
  %586 = vmatpush1.bf16.msra.mxu0 0
  %587 = vmatprep.subr.bf16.mxu0 0
  %588 = vmatpush1.bf16.msra.mxu0 0
  %589 = vmatprep.subr.bf16.mxu0 0
  %590 = vmatpush1.bf16.msra.mxu0 0
  %591 = vmatprep.subr.bf16.mxu0 0
  %592 = vmatpush1.bf16.msra.mxu0 0
  %593 = vmatprep.subr.bf16.mxu0 0
  %594 = vmatpush1.bf16.msra.mxu0 0
  %595 = vmatprep.subr.bf16.mxu0 0
  %596 = vmatpush1.bf16.msra.mxu0 0
  %597 = vmatprep.subr.bf16.mxu0 0
  %598 = vmatpush1.bf16.msra.mxu0 0
  %599 = vmatprep.subr.bf16.mxu0 0
  %600 = vmatpush1.bf16.msra.mxu0 0
  %601 = vmatprep.subr.bf16.mxu0 0
  %602 = vmatpush1.bf16.msra.mxu0 0
  %603 = vmatprep.subr.bf16.mxu0 0
  %604 = vmatpush1.bf16.msra.mxu0 0
  %605 = vmatprep.subr.bf16.mxu0 0
  %606 = vmatpush1.bf16.msra.mxu0 0
  %607 = vmatprep.subr.bf16.mxu0 0
  %608 = vmatpush1.bf16.msra.mxu0 0
  %609 = vmatprep.mubr.bf16.mxu0 0
  %610 = vmatmul.mubr.bf16.gmra.mrb[0].mxu0 %v220
  %v611 = vpop.f32.mrb[0].mxu0
  %v612 = vadd.f32 0.0, %v611
  %v613 = vpop.f32.mrb[0].mxu0
  %v614 = vadd.f32 0.0, %v613
  %v615 = vpop.f32.mrb[0].mxu0
  %v616 = vadd.f32 0.0, %v615
  %v617 = vpop.f32.mrb[0].mxu0
  %v618 = vadd.f32 0.0, %v617
  %619 = vmatprep.mubr.bf16.mxu0 0
  %620 = vmatmul.mubr.bf16.gmra.mrb[0].mxu0 %v223
  %v621 = vpop.f32.mrb[0].mxu0
  %v622 = vadd.f32 0.0, %v621
  %v623 = vpop.f32.mrb[0].mxu0
  %v624 = vadd.f32 0.0, %v623
  %v625 = vpop.f32.mrb[0].mxu0
  %v626 = vadd.f32 0.0, %v625
  %v627 = vpop.f32.mrb[0].mxu0
  %v628 = vadd.f32 0.0, %v627
  %629 = vmatprep.mubr.bf16.mxu0 0
  %630 = vmatmul.mubr.bf16.gmra.mrb[0].mxu0 %v226
  %v631 = vpop.f32.mrb[0].mxu0
  %v632 = vadd.f32 0.0, %v631
  %v633 = vpop.f32.mrb[0].mxu0
  %v634 = vadd.f32 0.0, %v633
  %v635 = vpop.f32.mrb[0].mxu0
  %v636 = vadd.f32 0.0, %v635
  %v637 = vpop.f32.mrb[0].mxu0
  %v638 = vadd.f32 0.0, %v637
  %639 = vmatprep.mubr.bf16.mxu0 0
  %640 = vmatmul.mubr.bf16.gmra.mrb[0].mxu0 %v229
  %v641 = vpop.f32.mrb[0].mxu0
  %v642 = vadd.f32 0.0, %v641
  %v643 = vpop.f32.mrb[0].mxu0
  %v644 = vadd.f32 0.0, %v643
  %v645 = vpop.f32.mrb[0].mxu0
  %v646 = vadd.f32 0.0, %v645
  %v647 = vpop.f32.mrb[0].mxu0
  %v648 = vadd.f32 0.0, %v647
  %649 = vmatprep.mubr.bf16.mxu0 0
  %650 = vmatmul.mubr.bf16.gmra.mrb[0].mxu0 %v232
  %v651 = vpop.f32.mrb[0].mxu0
  %v652 = vadd.f32 0.0, %v651
  %v653 = vpop.f32.mrb[0].mxu0
  %v654 = vadd.f32 0.0, %v653
  %v655 = vpop.f32.mrb[0].mxu0
  %v656 = vadd.f32 0.0, %v655
  %v657 = vpop.f32.mrb[0].mxu0
  %v658 = vadd.f32 0.0, %v657
  %659 = vmatprep.mubr.bf16.mxu0 0
  %660 = vmatmul.mubr.bf16.gmra.mrb[0].mxu0 %v235
  %v661 = vpop.f32.mrb[0].mxu0
  %v662 = vadd.f32 0.0, %v661
  %v663 = vpop.f32.mrb[0].mxu0
  %v664 = vadd.f32 0.0, %v663
  %v665 = vpop.f32.mrb[0].mxu0
  %v666 = vadd.f32 0.0, %v665
  %v667 = vpop.f32.mrb[0].mxu0
  %v668 = vadd.f32 0.0, %v667
  %669 = vmatprep.mubr.bf16.mxu0 0
  %670 = vmatmul.mubr.bf16.gmra.mrb[0].mxu0 %v238
  %v671 = vpop.f32.mrb[0].mxu0
  %v672 = vadd.f32 0.0, %v671
  %v673 = vpop.f32.mrb[0].mxu0
  %v674 = vadd.f32 0.0, %v673
  %v675 = vpop.f32.mrb[0].mxu0
  %v676 = vadd.f32 0.0, %v675
  %v677 = vpop.f32.mrb[0].mxu0
  %v678 = vadd.f32 0.0, %v677
  %679 = vmatprep.mubr.bf16.mxu0 0
  %680 = vmatmul.mubr.bf16.gmra.mrb[0].mxu0 %v241
  %v681 = vpop.f32.mrb[0].mxu0
  %v682 = vadd.f32 0.0, %v681
  %v683 = vpop.f32.mrb[0].mxu0
  %v684 = vadd.f32 0.0, %v683
  %v685 = vpop.f32.mrb[0].mxu0
  %v686 = vadd.f32 0.0, %v685
  %v687 = vpop.f32.mrb[0].mxu0
  %v688 = vadd.f32 0.0, %v687
  %689 = vmatprep.mubr.bf16.mxu0 0
  %690 = vmatmul.mubr.bf16.gmra.mrb[0].mxu0 %v244
  %v691 = vpop.f32.mrb[0].mxu0
  %v692 = vadd.f32 0.0, %v691
  %v693 = vpop.f32.mrb[0].mxu0
  %v694 = vadd.f32 0.0, %v693
  %v695 = vpop.f32.mrb[0].mxu0
  %v696 = vadd.f32 0.0, %v695
  %v697 = vpop.f32.mrb[0].mxu0
  %v698 = vadd.f32 0.0, %v697
  %699 = vmatprep.mubr.bf16.mxu0 0
  %700 = vmatmul.mubr.bf16.gmra.mrb[0].mxu0 %v247
  %v701 = vpop.f32.mrb[0].mxu0
  %v702 = vadd.f32 0.0, %v701
  %v703 = vpop.f32.mrb[0].mxu0
  %v704 = vadd.f32 0.0, %v703
  %v705 = vpop.f32.mrb[0].mxu0
  %v706 = vadd.f32 0.0, %v705
  %v707 = vpop.f32.mrb[0].mxu0
  %v708 = vadd.f32 0.0, %v707
  %709 = vmatprep.mubr.bf16.mxu0 0
  %710 = vmatmul.mubr.bf16.gmra.mrb[0].mxu0 %v250
  %v711 = vpop.f32.mrb[0].mxu0
  %v712 = vadd.f32 0.0, %v711
  %v713 = vpop.f32.mrb[0].mxu0
  %v714 = vadd.f32 0.0, %v713
  %v715 = vpop.f32.mrb[0].mxu0
  %v716 = vadd.f32 0.0, %v715
  %v717 = vpop.f32.mrb[0].mxu0
  %v718 = vadd.f32 0.0, %v717
  %719 = vmatprep.mubr.bf16.mxu0 0
  %720 = vmatmul.mubr.bf16.gmra.mrb[0].mxu0 %v253
  %v721 = vpop.f32.mrb[0].mxu0
  %v722 = vadd.f32 0.0, %v721
  %v723 = vpop.f32.mrb[0].mxu0
  %v724 = vadd.f32 0.0, %v723
  %v725 = vpop.f32.mrb[0].mxu0
  %v726 = vadd.f32 0.0, %v725
  %v727 = vpop.f32.mrb[0].mxu0
  %v728 = vadd.f32 0.0, %v727
  %729 = vmatprep.mubr.bf16.mxu0 0
  %730 = vmatmul.mubr.bf16.gmra.mrb[0].mxu0 %v256
  %v731 = vpop.f32.mrb[0].mxu0
  %v732 = vadd.f32 0.0, %v731
  %v733 = vpop.f32.mrb[0].mxu0
  %v734 = vadd.f32 0.0, %v733
  %v735 = vpop.f32.mrb[0].mxu0
  %v736 = vadd.f32 0.0, %v735
  %v737 = vpop.f32.mrb[0].mxu0
  %v738 = vadd.f32 0.0, %v737
  %739 = vmatprep.mubr.bf16.mxu0 0
  %740 = vmatmul.mubr.bf16.gmra.mrb[0].mxu0 %v259
  %v741 = vpop.f32.mrb[0].mxu0
  %v742 = vadd.f32 0.0, %v741
  %v743 = vpop.f32.mrb[0].mxu0
  %v744 = vadd.f32 0.0, %v743
  %v745 = vpop.f32.mrb[0].mxu0
  %v746 = vadd.f32 0.0, %v745
  %v747 = vpop.f32.mrb[0].mxu0
  %v748 = vadd.f32 0.0, %v747
  %749 = vmatprep.mubr.bf16.mxu0 0
  %750 = vmatmul.mubr.bf16.gmra.mrb[0].mxu0 %v262
  %v751 = vpop.f32.mrb[0].mxu0
  %v752 = vadd.f32 0.0, %v751
  %v753 = vpop.f32.mrb[0].mxu0
  %v754 = vadd.f32 0.0, %v753
  %v755 = vpop.f32.mrb[0].mxu0
  %v756 = vadd.f32 0.0, %v755
  %v757 = vpop.f32.mrb[0].mxu0
  %v758 = vadd.f32 0.0, %v757
  %759 = vmatprep.mubr.bf16.mxu0 0
  %760 = vmatmul.mubr.bf16.gmra.mrb[0].mxu0 %v265
  %v761 = vpop.f32.mrb[0].mxu0
  %v762 = vadd.f32 0.0, %v761
  %v763 = vpop.f32.mrb[0].mxu0
  %v764 = vadd.f32 0.0, %v763
  %v765 = vpop.f32.mrb[0].mxu0
  %v766 = vadd.f32 0.0, %v765
  %v767 = vpop.f32.mrb[0].mxu0
  %v768 = vadd.f32 0.0, %v767
  %769 = vmatprep.mubr.bf16.mxu0 0
  %770 = vmatmul.mubr.bf16.gmra.mrb[0].mxu0 %v268
  %v771 = vpop.f32.mrb[0].mxu0
  %v772 = vadd.f32 0.0, %v771
  %v773 = vpop.f32.mrb[0].mxu0
  %v774 = vadd.f32 0.0, %v773
  %v775 = vpop.f32.mrb[0].mxu0
  %v776 = vadd.f32 0.0, %v775
  %v777 = vpop.f32.mrb[0].mxu0
  %v778 = vadd.f32 0.0, %v777
  %779 = vmatprep.mubr.bf16.mxu0 0
  %780 = vmatmul.mubr.bf16.gmra.mrb[0].mxu0 %v271
  %v781 = vpop.f32.mrb[0].mxu0
  %v782 = vadd.f32 0.0, %v781
  %v783 = vpop.f32.mrb[0].mxu0
  %v784 = vadd.f32 0.0, %v783
  %v785 = vpop.f32.mrb[0].mxu0
  %v786 = vadd.f32 0.0, %v785
  %v787 = vpop.f32.mrb[0].mxu0
  %v788 = vadd.f32 0.0, %v787
  %789 = vmatprep.mubr.bf16.mxu0 0
  %790 = vmatmul.mubr.bf16.gmra.mrb[0].mxu0 %v274
  %v791 = vpop.f32.mrb[0].mxu0
  %v792 = vadd.f32 0.0, %v791
  %v793 = vpop.f32.mrb[0].mxu0
  %v794 = vadd.f32 0.0, %v793
  %v795 = vpop.f32.mrb[0].mxu0
  %v796 = vadd.f32 0.0, %v795
  %v797 = vpop.f32.mrb[0].mxu0
  %v798 = vadd.f32 0.0, %v797
  %799 = vmatprep.mubr.bf16.mxu0 0
  %800 = vmatmul.mubr.bf16.gmra.mrb[0].mxu0 %v277
  %v801 = vpop.f32.mrb[0].mxu0
  %v802 = vadd.f32 0.0, %v801
  %v803 = vpop.f32.mrb[0].mxu0
  %v804 = vadd.f32 0.0, %v803
  %v805 = vpop.f32.mrb[0].mxu0
  %v806 = vadd.f32 0.0, %v805
  %v807 = vpop.f32.mrb[0].mxu0
  %v808 = vadd.f32 0.0, %v807
  %809 = vmatprep.mubr.bf16.mxu0 0
  %810 = vmatmul.mubr.bf16.gmra.mrb[0].mxu0 %v280
  %v811 = vpop.f32.mrb[0].mxu0
  %v812 = vadd.f32 0.0, %v811
  %v813 = vpop.f32.mrb[0].mxu0
  %v814 = vadd.f32 0.0, %v813
  %v815 = vpop.f32.mrb[0].mxu0
  %v816 = vadd.f32 0.0, %v815
  %v817 = vpop.f32.mrb[0].mxu0
  %v818 = vadd.f32 0.0, %v817
  %819 = vmatprep.mubr.bf16.mxu0 0
  %820 = vmatmul.mubr.bf16.gmra.mrb[0].mxu0 %v283
  %v821 = vpop.f32.mrb[0].mxu0
  %v822 = vadd.f32 0.0, %v821
  %v823 = vpop.f32.mrb[0].mxu0
  %v824 = vadd.f32 0.0, %v823
  %v825 = vpop.f32.mrb[0].mxu0
  %v826 = vadd.f32 0.0, %v825
  %v827 = vpop.f32.mrb[0].mxu0
  %v828 = vadd.f32 0.0, %v827
  %829 = vmatprep.mubr.bf16.mxu0 0
  %830 = vmatmul.mubr.bf16.gmra.mrb[0].mxu0 %v286
  %v831 = vpop.f32.mrb[0].mxu0
  %v832 = vadd.f32 0.0, %v831
  %v833 = vpop.f32.mrb[0].mxu0
  %v834 = vadd.f32 0.0, %v833
  %v835 = vpop.f32.mrb[0].mxu0
  %v836 = vadd.f32 0.0, %v835
  %v837 = vpop.f32.mrb[0].mxu0
  %v838 = vadd.f32 0.0, %v837
  %839 = vmatprep.mubr.bf16.mxu0 0
  %840 = vmatmul.mubr.bf16.gmra.mrb[0].mxu0 %v289
  %v841 = vpop.f32.mrb[0].mxu0
  %v842 = vadd.f32 0.0, %v841
  %v843 = vpop.f32.mrb[0].mxu0
  %v844 = vadd.f32 0.0, %v843
  %v845 = vpop.f32.mrb[0].mxu0
  %v846 = vadd.f32 0.0, %v845
  %v847 = vpop.f32.mrb[0].mxu0
  %v848 = vadd.f32 0.0, %v847
  %849 = vdwg.mxu0
  %v850 = vld [vmem:[%s1] sm:$0x1]
  %v851 = vld [vmem:[%s1 + $0x1] sm:$0x1]
  %v852 = vld [vmem:[%s3] sm:$0xff]
  %v853 = vld [vmem:[%s3 + $0x8] sm:$0xff]
  %v854 = vld [vmem:[%s3 + $0x10] sm:$0xff]
  %v855 = vld [vmem:[%s3 + $0x18] sm:$0xff]
  %v856 = vld [vmem:[%s3 + $0x20] sm:$0xff]
  %v857 = vld [vmem:[%s3 + $0x28] sm:$0xff]
  %v858 = vld [vmem:[%s3 + $0x30] sm:$0xff]
  %v859 = vld [vmem:[%s3 + $0x38] sm:$0xff]
  %v860 = vld [vmem:[%s3 + $0x40] sm:$0xff]
  %v861 = vld [vmem:[%s3 + $0x48] sm:$0xff]
  %v862 = vld [vmem:[%s3 + $0x50] sm:$0xff]
  %v863 = vld [vmem:[%s3 + $0x58] sm:$0xff]
  %v864 = vld [vmem:[%s3 + $0x60] sm:$0xff]
  %v865 = vld [vmem:[%s3 + $0x68] sm:$0xff]
  %v866 = vld [vmem:[%s3 + $0x70] sm:$0xff]
  %v867 = vld [vmem:[%s3 + $0x78] sm:$0xff]
  %v868 = vld [vmem:[%s4] sm:$0xff]
  %v869 = vld [vmem:[%s4 + $0x8] sm:$0xff]
  %v870 = vld [vmem:[%s4 + $0x10] sm:$0xff]
  %v871 = vld [vmem:[%s4 + $0x18] sm:$0xff]
  %v872 = vld [vmem:[%s4 + $0x20] sm:$0xff]
  %v873 = vld [vmem:[%s4 + $0x28] sm:$0xff]
  %v874 = vld [vmem:[%s4 + $0x30] sm:$0xff]
  %v875 = vld [vmem:[%s4 + $0x38] sm:$0xff]
  %v876 = vld [vmem:[%s4 + $0x40] sm:$0xff]
  %v877 = vld [vmem:[%s4 + $0x48] sm:$0xff]
  %v878 = vld [vmem:[%s4 + $0x50] sm:$0xff]
  %v879 = vld [vmem:[%s4 + $0x58] sm:$0xff]
  %v880 = vld [vmem:[%s4 + $0x60] sm:$0xff]
  %v881 = vld [vmem:[%s4 + $0x68] sm:$0xff]
  %v882 = vld [vmem:[%s4 + $0x70] sm:$0xff]
  %v883 = vld [vmem:[%s4 + $0x78] sm:$0xff]
  %885 = vset.pattern.permute.xlu0 0
  %886 = vperm.xlu0 %885, %v868
  %v887 = vpop.permute.xlu0 %886
  %890 = vset.pattern.permute.xlu0 0
  %891 = vperm.xlu0 %890, %v869
  %v892 = vpop.permute.xlu0 %891
  %895 = vset.pattern.permute.xlu0 0
  %896 = vperm.xlu0 %895, %v870
  %v897 = vpop.permute.xlu0 %896
  %900 = vset.pattern.permute.xlu0 0
  %901 = vperm.xlu0 %900, %v871
  %v902 = vpop.permute.xlu0 %901
  %905 = vset.pattern.permute.xlu0 0
  %906 = vperm.xlu0 %905, %v872
  %v907 = vpop.permute.xlu0 %906
  %910 = vset.pattern.permute.xlu0 0
  %911 = vperm.xlu0 %910, %v873
  %v912 = vpop.permute.xlu0 %911
  %915 = vset.pattern.permute.xlu0 0
  %916 = vperm.xlu0 %915, %v874
  %v917 = vpop.permute.xlu0 %916
  %920 = vset.pattern.permute.xlu0 0
  %921 = vperm.xlu0 %920, %v875
  %v922 = vpop.permute.xlu0 %921
  %925 = vset.pattern.permute.xlu0 0
  %926 = vperm.xlu0 %925, %v876
  %v927 = vpop.permute.xlu0 %926
  %930 = vset.pattern.permute.xlu0 0
  %931 = vperm.xlu0 %930, %v877
  %v932 = vpop.permute.xlu0 %931
  %935 = vset.pattern.permute.xlu0 0
  %936 = vperm.xlu0 %935, %v878
  %v937 = vpop.permute.xlu0 %936
  %940 = vset.pattern.permute.xlu0 0
  %941 = vperm.xlu0 %940, %v879
  %v942 = vpop.permute.xlu0 %941
  %945 = vset.pattern.permute.xlu0 0
  %946 = vperm.xlu0 %945, %v880
  %v947 = vpop.permute.xlu0 %946
  %950 = vset.pattern.permute.xlu0 0
  %951 = vperm.xlu0 %950, %v881
  %v952 = vpop.permute.xlu0 %951
  %955 = vset.pattern.permute.xlu0 0
  %956 = vperm.xlu0 %955, %v882
  %v957 = vpop.permute.xlu0 %956
  %960 = vset.pattern.permute.xlu0 0
  %961 = vperm.xlu0 %960, %v883
  %v962 = vpop.permute.xlu0 %961
  %v966 = vcombine.low %v850, %v851
  %v968 = vunpack.c.l.s4 1966171168
  %v969 = vunpack.c.0.s8 %v968
  %v970 = vlaneseq
  %v971 = vshrl.u32 %v970, 7
  %v972 = vsub.s32 %v969, %v971
  %v973 = vrot.slane %v966, %v972
  %v975 = vunpack.c.l.s4 1966171168
  %v976 = vunpack.c.0.s8 %v975
  %v977 = vlaneseq
  %v978 = vshrl.u32 %v977, 7
  %v979 = vsub.s32 %v976, %v978
  %v980 = vrot.slane %v973, %v979
  %982 = vmatprep.subr.mxu0 0.0
  %983 = vmatpush1.xpose.msra.mxu0 %v980
  %984 = vmatprep.subr.mxu0 0.0
  %985 = vmatpush1.xpose.msra.mxu0 0.0
  %986 = vmatprep.subr.mxu0 0.0
  %987 = vmatpush1.xpose.msra.mxu0 0.0
  %988 = vmatprep.subr.mxu0 0.0
  %989 = vmatpush1.xpose.msra.mxu0 0.0
  %990 = vmatprep.subr.mxu0 0.0
  %991 = vmatpush1.xpose.msra.mxu0 0.0
  %992 = vmatprep.subr.mxu0 0.0
  %993 = vmatpush1.xpose.msra.mxu0 0.0
  %994 = vmatprep.subr.mxu0 0.0
  %995 = vmatpush1.xpose.msra.mxu0 0.0
  %996 = vmatprep.subr.mxu0 0.0
  %997 = vmatpush1.xpose.msra.mxu0 0.0
  %998 = vmatprep.subr.mxu0 0.0
  %999 = vmatpush1.xpose.msra.mxu0 0.0
  %1000 = vmatprep.subr.mxu0 0.0
  %1001 = vmatpush1.xpose.msra.mxu0 0.0
  %1002 = vmatprep.subr.mxu0 0.0
  %1003 = vmatpush1.xpose.msra.mxu0 0.0
  %1004 = vmatprep.subr.mxu0 0.0
  %1005 = vmatpush1.xpose.msra.mxu0 0.0
  %1006 = vmatprep.subr.mxu0 0.0
  %1007 = vmatpush1.xpose.msra.mxu0 0.0
  %1008 = vmatprep.subr.mxu0 0.0
  %1009 = vmatpush1.xpose.msra.mxu0 0.0
  %1010 = vmatprep.subr.mxu0 0.0
  %1011 = vmatpush1.xpose.msra.mxu0 0.0
  %1012 = vmatprep.subr.mxu0 0.0
  %1013 = vmatpush1.xpose.msra.mxu0 0.0
  %1014 = vmatprep.subr.mxu0 0.0
  %1015 = vmatpush1.xpose.msra.mxu0 0.0
  %1016 = vmatprep.subr.mxu0 0.0
  %1017 = vmatpush1.xpose.msra.mxu0 0.0
  %1018 = vmatprep.subr.mxu0 0.0
  %1019 = vmatpush1.xpose.msra.mxu0 0.0
  %1020 = vmatprep.subr.mxu0 0.0
  %1021 = vmatpush1.xpose.msra.mxu0 0.0
  %1022 = vmatprep.subr.mxu0 0.0
  %1023 = vmatpush1.xpose.msra.mxu0 0.0
  %1024 = vmatprep.subr.mxu0 0.0
  %1025 = vmatpush1.xpose.msra.mxu0 0.0
  %1026 = vmatprep.subr.mxu0 0.0
  %1027 = vmatpush1.xpose.msra.mxu0 0.0
  %1028 = vmatprep.subr.mxu0 0.0
  %1029 = vmatpush1.xpose.msra.mxu0 0.0
  %1030 = vmatprep.subr.mxu0 0.0
  %1031 = vmatpush1.xpose.msra.mxu0 0.0
  %1032 = vmatprep.subr.mxu0 0.0
  %1033 = vmatpush1.xpose.msra.mxu0 0.0
  %1034 = vmatprep.subr.mxu0 0.0
  %1035 = vmatpush1.xpose.msra.mxu0 0.0
  %1036 = vmatprep.subr.mxu0 0.0
  %1037 = vmatpush1.xpose.msra.mxu0 0.0
  %1038 = vmatprep.subr.mxu0 0.0
  %1039 = vmatpush1.xpose.msra.mxu0 0.0
  %1040 = vmatprep.subr.mxu0 0.0
  %1041 = vmatpush1.xpose.msra.mxu0 0.0
  %1042 = vmatprep.subr.mxu0 0.0
  %1043 = vmatpush1.xpose.msra.mxu0 0.0
  %1044 = vmatprep.subr.mxu0 0.0
  %1045 = vmatpush1.xpose.msra.mxu0 0.0
  %1046 = vmatprep.mubr.f32.mxu0 0.0
  %1047 = vmatmul.mubr.f32.gmra.mrb[0].mxu0 %v852
  %v1048 = vpop.f32.mrb[0].mxu0
  %v1049 = vadd.f32 %v887, %v1048
  %v1050 = vpop.f32.mrb[0].mxu0
  %1051 = vmatprep.mubr.f32.mxu0 0.0
  %1052 = vmatmul.mubr.f32.gmra.mrb[0].mxu0 %v853
  %v1053 = vpop.f32.mrb[0].mxu0
  %v1054 = vadd.f32 %v892, %v1053
  %v1055 = vpop.f32.mrb[0].mxu0
  %1056 = vmatprep.mubr.f32.mxu0 0.0
  %1057 = vmatmul.mubr.f32.gmra.mrb[0].mxu0 %v854
  %v1058 = vpop.f32.mrb[0].mxu0
  %v1059 = vadd.f32 %v897, %v1058
  %v1060 = vpop.f32.mrb[0].mxu0
  %1061 = vmatprep.mubr.f32.mxu0 0.0
  %1062 = vmatmul.mubr.f32.gmra.mrb[0].mxu0 %v855
  %v1063 = vpop.f32.mrb[0].mxu0
  %v1064 = vadd.f32 %v902, %v1063
  %v1065 = vpop.f32.mrb[0].mxu0
  %1066 = vmatprep.mubr.f32.mxu0 0.0
  %1067 = vmatmul.mubr.f32.gmra.mrb[0].mxu0 %v856
  %v1068 = vpop.f32.mrb[0].mxu0
  %v1069 = vadd.f32 %v907, %v1068
  %v1070 = vpop.f32.mrb[0].mxu0
  %1071 = vmatprep.mubr.f32.mxu0 0.0
  %1072 = vmatmul.mubr.f32.gmra.mrb[0].mxu0 %v857
  %v1073 = vpop.f32.mrb[0].mxu0
  %v1074 = vadd.f32 %v912, %v1073
  %v1075 = vpop.f32.mrb[0].mxu0
  %1076 = vmatprep.mubr.f32.mxu0 0.0
  %1077 = vmatmul.mubr.f32.gmra.mrb[0].mxu0 %v858
  %v1078 = vpop.f32.mrb[0].mxu0
  %v1079 = vadd.f32 %v917, %v1078
  %v1080 = vpop.f32.mrb[0].mxu0
  %1081 = vmatprep.mubr.f32.mxu0 0.0
  %1082 = vmatmul.mubr.f32.gmra.mrb[0].mxu0 %v859
  %v1083 = vpop.f32.mrb[0].mxu0
  %v1084 = vadd.f32 %v922, %v1083
  %v1085 = vpop.f32.mrb[0].mxu0
  %1086 = vmatprep.mubr.f32.mxu0 0.0
  %1087 = vmatmul.mubr.f32.gmra.mrb[0].mxu0 %v860
  %v1088 = vpop.f32.mrb[0].mxu0
  %v1089 = vadd.f32 %v927, %v1088
  %v1090 = vpop.f32.mrb[0].mxu0
  %1091 = vmatprep.mubr.f32.mxu0 0.0
  %1092 = vmatmul.mubr.f32.gmra.mrb[0].mxu0 %v861
  %v1093 = vpop.f32.mrb[0].mxu0
  %v1094 = vadd.f32 %v932, %v1093
  %v1095 = vpop.f32.mrb[0].mxu0
  %1096 = vmatprep.mubr.f32.mxu0 0.0
  %1097 = vmatmul.mubr.f32.gmra.mrb[0].mxu0 %v862
  %v1098 = vpop.f32.mrb[0].mxu0
  %v1099 = vadd.f32 %v937, %v1098
  %v1100 = vpop.f32.mrb[0].mxu0
  %1101 = vmatprep.mubr.f32.mxu0 0.0
  %1102 = vmatmul.mubr.f32.gmra.mrb[0].mxu0 %v863
  %v1103 = vpop.f32.mrb[0].mxu0
  %v1104 = vadd.f32 %v942, %v1103
  %v1105 = vpop.f32.mrb[0].mxu0
  %1106 = vmatprep.mubr.f32.mxu0 0.0
  %1107 = vmatmul.mubr.f32.gmra.mrb[0].mxu0 %v864
  %v1108 = vpop.f32.mrb[0].mxu0
  %v1109 = vadd.f32 %v947, %v1108
  %v1110 = vpop.f32.mrb[0].mxu0
  %1111 = vmatprep.mubr.f32.mxu0 0.0
  %1112 = vmatmul.mubr.f32.gmra.mrb[0].mxu0 %v865
  %v1113 = vpop.f32.mrb[0].mxu0
  %v1114 = vadd.f32 %v952, %v1113
  %v1115 = vpop.f32.mrb[0].mxu0
  %1116 = vmatprep.mubr.f32.mxu0 0.0
  %1117 = vmatmul.mubr.f32.gmra.mrb[0].mxu0 %v866
  %v1118 = vpop.f32.mrb[0].mxu0
  %v1119 = vadd.f32 %v957, %v1118
  %v1120 = vpop.f32.mrb[0].mxu0
  %1121 = vmatprep.mubr.f32.mxu0 0.0
  %1122 = vmatmul.mubr.f32.gmra.mrb[0].mxu0 %v867
  %v1123 = vpop.f32.mrb[0].mxu0
  %v1124 = vadd.f32 %v962, %v1123
  %v1125 = vpop.f32.mrb[0].mxu0
  %1126 = vdwg.mxu0
  %v1127 = vld [vmem:[%s5] sm:$0xff]
  %v1128 = vld [vmem:[%s5 + $0x8] sm:$0xff]
  %v1129 = vld [vmem:[%s5 + $0x10] sm:$0xff]
  %v1130 = vld [vmem:[%s5 + $0x18] sm:$0xff]
  %v1131 = vld [vmem:[%s5 + $0x20] sm:$0xff]
  %v1132 = vld [vmem:[%s5 + $0x28] sm:$0xff]
  %v1133 = vld [vmem:[%s5 + $0x30] sm:$0xff]
  %v1134 = vld [vmem:[%s5 + $0x38] sm:$0xff]
  %v1135 = vld [vmem:[%s5 + $0x40] sm:$0xff]
  %v1136 = vld [vmem:[%s5 + $0x48] sm:$0xff]
  %v1137 = vld [vmem:[%s5 + $0x50] sm:$0xff]
  %v1138 = vld [vmem:[%s5 + $0x58] sm:$0xff]
  %v1139 = vld [vmem:[%s5 + $0x60] sm:$0xff]
  %v1140 = vld [vmem:[%s5 + $0x68] sm:$0xff]
  %v1141 = vld [vmem:[%s5 + $0x70] sm:$0xff]
  %v1142 = vld [vmem:[%s5 + $0x78] sm:$0xff]
  %v1143 = vld [vmem:[%s6] sm:$0x1]
  %v1145 = vlaneseq
  %v1146 = vshrl.u32 %v1145, 7
  %v1147 = vsub.s32 0, %v1146
  %v1148 = vrot.slane %v1143, %v1147
  %1150 = vmatprep.subr.mxu0 0.0
  %1151 = vmatpush1.msra.mxu0 %v1127
  %1152 = vmatprep.subr.mxu0 0.0
  %1153 = vmatpush1.msra.mxu0 %v1128
  %1154 = vmatprep.subr.mxu0 0.0
  %1155 = vmatpush1.msra.mxu0 %v1129
  %1156 = vmatprep.subr.mxu0 0.0
  %1157 = vmatpush1.msra.mxu0 %v1130
  %1158 = vmatprep.subr.mxu0 0.0
  %1159 = vmatpush1.msra.mxu0 %v1131
  %1160 = vmatprep.subr.mxu0 0.0
  %1161 = vmatpush1.msra.mxu0 %v1132
  %1162 = vmatprep.subr.mxu0 0.0
  %1163 = vmatpush1.msra.mxu0 %v1133
  %1164 = vmatprep.subr.mxu0 0.0
  %1165 = vmatpush1.msra.mxu0 %v1134
  %1166 = vmatprep.subr.mxu0 0.0
  %1167 = vmatpush1.msra.mxu0 %v1135
  %1168 = vmatprep.subr.mxu0 0.0
  %1169 = vmatpush1.msra.mxu0 %v1136
  %1170 = vmatprep.subr.mxu0 0.0
  %1171 = vmatpush1.msra.mxu0 %v1137
  %1172 = vmatprep.subr.mxu0 0.0
  %1173 = vmatpush1.msra.mxu0 %v1138
  %1174 = vmatprep.subr.mxu0 0.0
  %1175 = vmatpush1.msra.mxu0 %v1139
  %1176 = vmatprep.subr.mxu0 0.0
  %1177 = vmatpush1.msra.mxu0 %v1140
  %1178 = vmatprep.subr.mxu0 0.0
  %1179 = vmatpush1.msra.mxu0 %v1141
  %1180 = vmatprep.subr.mxu0 0.0
  %1181 = vmatpush1.msra.mxu0 %v1142
  %1182 = vmatprep.subr.mxu0 0.0
  %1183 = vmatpush1.msra.mxu0 0.0
  %1184 = vmatprep.subr.mxu0 0.0
  %1185 = vmatpush1.msra.mxu0 0.0
  %1186 = vmatprep.subr.mxu0 0.0
  %1187 = vmatpush1.msra.mxu0 0.0
  %1188 = vmatprep.subr.mxu0 0.0
  %1189 = vmatpush1.msra.mxu0 0.0
  %1190 = vmatprep.subr.mxu0 0.0
  %1191 = vmatpush1.msra.mxu0 0.0
  %1192 = vmatprep.subr.mxu0 0.0
  %1193 = vmatpush1.msra.mxu0 0.0
  %1194 = vmatprep.subr.mxu0 0.0
  %1195 = vmatpush1.msra.mxu0 0.0
  %1196 = vmatprep.subr.mxu0 0.0
  %1197 = vmatpush1.msra.mxu0 0.0
  %1198 = vmatprep.subr.mxu0 0.0
  %1199 = vmatpush1.msra.mxu0 0.0
  %1200 = vmatprep.subr.mxu0 0.0
  %1201 = vmatpush1.msra.mxu0 0.0
  %1202 = vmatprep.subr.mxu0 0.0
  %1203 = vmatpush1.msra.mxu0 0.0
  %1204 = vmatprep.subr.mxu0 0.0
  %1205 = vmatpush1.msra.mxu0 0.0
  %1206 = vmatprep.subr.mxu0 0.0
  %1207 = vmatpush1.msra.mxu0 0.0
  %1208 = vmatprep.subr.mxu0 0.0
  %1209 = vmatpush1.msra.mxu0 0.0
  %1210 = vmatprep.subr.mxu0 0.0
  %1211 = vmatpush1.msra.mxu0 0.0
  %1212 = vmatprep.subr.mxu0 0.0
  %1213 = vmatpush1.msra.mxu0 0.0
  %1214 = vmatprep.mubr.f32.mxu0 0.0
  %1215 = vmatmul.mubr.f32.gmra.mrb[0].mxu0 %v980
  %v1216 = vpop.f32.mrb[0].mxu0
  %v1217 = vadd.f32 %v1148, %v1216
  %v1218 = vpop.f32.mrb[0].mxu0
  %1219 = vdwg.mxu0
  %v1220 = vld [vmem:[%s11] sm:$0xff]
  %v1221 = vld [vmem:[%s11 + $0x8] sm:$0xff]
  %v1222 = vld [vmem:[%s11 + $0x10] sm:$0xff]
  %v1223 = vld [vmem:[%s11 + $0x18] sm:$0xff]
  %v1224 = vld [vmem:[%s11 + $0x20] sm:$0xff]
  %v1225 = vld [vmem:[%s11 + $0x28] sm:$0xff]
  %v1226 = vld [vmem:[%s11 + $0x30] sm:$0xff]
  %v1227 = vld [vmem:[%s11 + $0x38] sm:$0xff]
  %v1228 = vld [vmem:[%s11 + $0x40] sm:$0xff]
  %v1229 = vld [vmem:[%s11 + $0x48] sm:$0xff]
  %v1230 = vld [vmem:[%s11 + $0x50] sm:$0xff]
  %v1231 = vld [vmem:[%s11 + $0x58] sm:$0xff]
  %v1232 = vld [vmem:[%s11 + $0x60] sm:$0xff]
  %v1233 = vld [vmem:[%s11 + $0x68] sm:$0xff]
  %v1234 = vld [vmem:[%s11 + $0x70] sm:$0xff]
  %v1235 = vld [vmem:[%s11 + $0x78] sm:$0xff]
  %v1236 = vld [vmem:[%s7] sm:$0xf]
  %v1237 = vld [vmem:[%s8] sm:$0xff]
  %v1238 = vld [vmem:[%s9] sm:$0xff]
  %v1239 = vld [vmem:[%s10] sm:$0xff]
  %v1240 = vmax.f32 %v339, %v343
  %v1241 = vmax.f32 %v1240, %v349
  %v1242 = vmax.f32 %v1241, %v353
  %v1243 = vrot.slane %v1242, 4
  %v1244 = vmax.f32 %v1242, %v1243
  %v1245 = vrot.slane %v1244, 2
  %v1246 = vmax.f32 %v1244, %v1245
  %v1247 = vrot.slane %v1246, 1
  %v1248 = vmax.f32 %v1246, %v1247
  %v1249 = vmax.f32 %v341, %v345
  %v1250 = vmax.f32 %v1249, %v351
  %v1251 = vmax.f32 %v1250, %v355
  %v1252 = vrot.slane %v1251, 4
  %v1253 = vmax.f32 %v1251, %v1252
  %v1254 = vrot.slane %v1253, 2
  %v1255 = vmax.f32 %v1253, %v1254
  %v1256 = vrot.slane %v1255, 1
  %v1257 = vmax.f32 %v1255, %v1256
  %v1258 = vmax.f32 %v359, %v363
  %v1259 = vmax.f32 %v1258, %v369
  %v1260 = vmax.f32 %v1259, %v373
  %v1261 = vrot.slane %v1260, 4
  %v1262 = vmax.f32 %v1260, %v1261
  %v1263 = vrot.slane %v1262, 2
  %v1264 = vmax.f32 %v1262, %v1263
  %v1265 = vrot.slane %v1264, 1
  %v1266 = vmax.f32 %v1264, %v1265
  %v1267 = vmax.f32 %v361, %v365
  %v1268 = vmax.f32 %v1267, %v371
  %v1269 = vmax.f32 %v1268, %v375
  %v1270 = vrot.slane %v1269, 4
  %v1271 = vmax.f32 %v1269, %v1270
  %v1272 = vrot.slane %v1271, 2
  %v1273 = vmax.f32 %v1271, %v1272
  %v1274 = vrot.slane %v1273, 1
  %v1275 = vmax.f32 %v1273, %v1274
  %v1276 = vmax.f32 %v379, %v383
  %v1277 = vmax.f32 %v1276, %v389
  %v1278 = vmax.f32 %v1277, %v393
  %v1279 = vrot.slane %v1278, 4
  %v1280 = vmax.f32 %v1278, %v1279
  %v1281 = vrot.slane %v1280, 2
  %v1282 = vmax.f32 %v1280, %v1281
  %v1283 = vrot.slane %v1282, 1
  %v1284 = vmax.f32 %v1282, %v1283
  %v1285 = vmax.f32 %v381, %v385
  %v1286 = vmax.f32 %v1285, %v391
  %v1287 = vmax.f32 %v1286, %v395
  %v1288 = vrot.slane %v1287, 4
  %v1289 = vmax.f32 %v1287, %v1288
  %v1290 = vrot.slane %v1289, 2
  %v1291 = vmax.f32 %v1289, %v1290
  %v1292 = vrot.slane %v1291, 1
  %v1293 = vmax.f32 %v1291, %v1292
  %v1294 = vmax.f32 %v399, %v403
  %v1295 = vmax.f32 %v1294, %v409
  %v1296 = vmax.f32 %v1295, %v413
  %v1297 = vrot.slane %v1296, 4
  %v1298 = vmax.f32 %v1296, %v1297
  %v1299 = vrot.slane %v1298, 2
  %v1300 = vmax.f32 %v1298, %v1299
  %v1301 = vrot.slane %v1300, 1
  %v1302 = vmax.f32 %v1300, %v1301
  %v1303 = vmax.f32 %v401, %v405
  %v1304 = vmax.f32 %v1303, %v411
  %v1305 = vmax.f32 %v1304, %v415
  %v1306 = vrot.slane %v1305, 4
  %v1307 = vmax.f32 %v1305, %v1306
  %v1308 = vrot.slane %v1307, 2
  %v1309 = vmax.f32 %v1307, %v1308
  %v1310 = vrot.slane %v1309, 1
  %v1311 = vmax.f32 %v1309, %v1310
  %v1312 = vsub.f32 %v339, %v1248
  %v1313 = vsub.f32 %v341, %v1257
  %v1314 = vsub.f32 %v343, %v1248
  %v1315 = vsub.f32 %v345, %v1257
  %v1316 = vsub.f32 %v349, %v1248
  %v1317 = vsub.f32 %v351, %v1257
  %v1318 = vsub.f32 %v353, %v1248
  %v1319 = vsub.f32 %v355, %v1257
  %v1320 = vsub.f32 %v359, %v1266
  %v1321 = vsub.f32 %v361, %v1275
  %v1322 = vsub.f32 %v363, %v1266
  %v1323 = vsub.f32 %v365, %v1275
  %v1324 = vsub.f32 %v369, %v1266
  %v1325 = vsub.f32 %v371, %v1275
  %v1326 = vsub.f32 %v373, %v1266
  %v1327 = vsub.f32 %v375, %v1275
  %v1328 = vsub.f32 %v379, %v1284
  %v1329 = vsub.f32 %v381, %v1293
  %v1330 = vsub.f32 %v383, %v1284
  %v1331 = vsub.f32 %v385, %v1293
  %v1332 = vsub.f32 %v389, %v1284
  %v1333 = vsub.f32 %v391, %v1293
  %v1334 = vsub.f32 %v393, %v1284
  %v1335 = vsub.f32 %v395, %v1293
  %v1336 = vsub.f32 %v399, %v1302
  %v1337 = vsub.f32 %v401, %v1311
  %v1338 = vsub.f32 %v403, %v1302
  %v1339 = vsub.f32 %v405, %v1311
  %v1340 = vsub.f32 %v409, %v1302
  %v1341 = vsub.f32 %v411, %v1311
  %v1342 = vsub.f32 %v413, %v1302
  %v1343 = vsub.f32 %v415, %v1311
  %v1344 = vmul.f32 %v1312, 1.442695
  %v1345 = vpow.pop %v1344
  %v1346 = vmul.f32 %v1313, 1.442695
  %v1347 = vpow.pop %v1346
  %v1348 = vmul.f32 %v1314, 1.442695
  %v1349 = vpow.pop %v1348
  %v1350 = vmul.f32 %v1315, 1.442695
  %v1351 = vpow.pop %v1350
  %v1352 = vmul.f32 %v1316, 1.442695
  %v1353 = vpow.pop %v1352
  %v1354 = vmul.f32 %v1317, 1.442695
  %v1355 = vpow.pop %v1354
  %v1356 = vmul.f32 %v1318, 1.442695
  %v1357 = vpow.pop %v1356
  %v1358 = vmul.f32 %v1319, 1.442695
  %v1359 = vpow.pop %v1358
  %v1360 = vmul.f32 %v1320, 1.442695
  %v1361 = vpow.pop %v1360
  %v1362 = vmul.f32 %v1321, 1.442695
  %v1363 = vpow.pop %v1362
  %v1364 = vmul.f32 %v1322, 1.442695
  %v1365 = vpow.pop %v1364
  %v1366 = vmul.f32 %v1323, 1.442695
  %v1367 = vpow.pop %v1366
  %v1368 = vmul.f32 %v1324, 1.442695
  %v1369 = vpow.pop %v1368
  %v1370 = vmul.f32 %v1325, 1.442695
  %v1371 = vpow.pop %v1370
  %v1372 = vmul.f32 %v1326, 1.442695
  %v1373 = vpow.pop %v1372
  %v1374 = vmul.f32 %v1327, 1.442695
  %v1375 = vpow.pop %v1374
  %v1376 = vmul.f32 %v1328, 1.442695
  %v1377 = vpow.pop %v1376
  %v1378 = vmul.f32 %v1329, 1.442695
  %v1379 = vpow.pop %v1378
  %v1380 = vmul.f32 %v1330, 1.442695
  %v1381 = vpow.pop %v1380
  %v1382 = vmul.f32 %v1331, 1.442695
  %v1383 = vpow.pop %v1382
  %v1384 = vmul.f32 %v1332, 1.442695
  %v1385 = vpow.pop %v1384
  %v1386 = vmul.f32 %v1333, 1.442695
  %v1387 = vpow.pop %v1386
  %v1388 = vmul.f32 %v1334, 1.442695
  %v1389 = vpow.pop %v1388
  %v1390 = vmul.f32 %v1335, 1.442695
  %v1391 = vpow.pop %v1390
  %v1392 = vmul.f32 %v1336, 1.442695
  %v1393 = vpow.pop %v1392
  %v1394 = vmul.f32 %v1337, 1.442695
  %v1395 = vpow.pop %v1394
  %v1396 = vmul.f32 %v1338, 1.442695
  %v1397 = vpow.pop %v1396
  %v1398 = vmul.f32 %v1339, 1.442695
  %v1399 = vpow.pop %v1398
  %v1400 = vmul.f32 %v1340, 1.442695
  %v1401 = vpow.pop %v1400
  %v1402 = vmul.f32 %v1341, 1.442695
  %v1403 = vpow.pop %v1402
  %v1404 = vmul.f32 %v1342, 1.442695
  %v1405 = vpow.pop %v1404
  %v1406 = vmul.f32 %v1343, 1.442695
  %v1407 = vpow.pop %v1406
  %v1408 = vadd.f32 %v1345, %v1349
  %v1409 = vadd.f32 %v1408, %v1353
  %v1410 = vadd.f32 %v1409, %v1357
  %v1411 = vrot.slane %v1410, 4
  %v1412 = vadd.f32 %v1410, %v1411
  %v1413 = vrot.slane %v1412, 2
  %v1414 = vadd.f32 %v1412, %v1413
  %v1415 = vrot.slane %v1414, 1
  %v1416 = vadd.f32 %v1414, %v1415
  %v1417 = vadd.f32 %v1347, %v1351
  %v1418 = vadd.f32 %v1417, %v1355
  %v1419 = vadd.f32 %v1418, %v1359
  %v1420 = vrot.slane %v1419, 4
  %v1421 = vadd.f32 %v1419, %v1420
  %v1422 = vrot.slane %v1421, 2
  %v1423 = vadd.f32 %v1421, %v1422
  %v1424 = vrot.slane %v1423, 1
  %v1425 = vadd.f32 %v1423, %v1424
  %v1426 = vadd.f32 %v1361, %v1365
  %v1427 = vadd.f32 %v1426, %v1369
  %v1428 = vadd.f32 %v1427, %v1373
  %v1429 = vrot.slane %v1428, 4
  %v1430 = vadd.f32 %v1428, %v1429
  %v1431 = vrot.slane %v1430, 2
  %v1432 = vadd.f32 %v1430, %v1431
  %v1433 = vrot.slane %v1432, 1
  %v1434 = vadd.f32 %v1432, %v1433
  %v1435 = vadd.f32 %v1363, %v1367
  %v1436 = vadd.f32 %v1435, %v1371
  %v1437 = vadd.f32 %v1436, %v1375
  %v1438 = vrot.slane %v1437, 4
  %v1439 = vadd.f32 %v1437, %v1438
  %v1440 = vrot.slane %v1439, 2
  %v1441 = vadd.f32 %v1439, %v1440
  %v1442 = vrot.slane %v1441, 1
  %v1443 = vadd.f32 %v1441, %v1442
  %v1444 = vadd.f32 %v1377, %v1381
  %v1445 = vadd.f32 %v1444, %v1385
  %v1446 = vadd.f32 %v1445, %v1389
  %v1447 = vrot.slane %v1446, 4
  %v1448 = vadd.f32 %v1446, %v1447
  %v1449 = vrot.slane %v1448, 2
  %v1450 = vadd.f32 %v1448, %v1449
  %v1451 = vrot.slane %v1450, 1
  %v1452 = vadd.f32 %v1450, %v1451
  %v1453 = vadd.f32 %v1379, %v1383
  %v1454 = vadd.f32 %v1453, %v1387
  %v1455 = vadd.f32 %v1454, %v1391
  %v1456 = vrot.slane %v1455, 4
  %v1457 = vadd.f32 %v1455, %v1456
  %v1458 = vrot.slane %v1457, 2
  %v1459 = vadd.f32 %v1457, %v1458
  %v1460 = vrot.slane %v1459, 1
  %v1461 = vadd.f32 %v1459, %v1460
  %v1462 = vadd.f32 %v1393, %v1397
  %v1463 = vadd.f32 %v1462, %v1401
  %v1464 = vadd.f32 %v1463, %v1405
  %v1465 = vrot.slane %v1464, 4
  %v1466 = vadd.f32 %v1464, %v1465
  %v1467 = vrot.slane %v1466, 2
  %v1468 = vadd.f32 %v1466, %v1467
  %v1469 = vrot.slane %v1468, 1
  %v1470 = vadd.f32 %v1468, %v1469
  %v1471 = vadd.f32 %v1395, %v1399
  %v1472 = vadd.f32 %v1471, %v1403
  %v1473 = vadd.f32 %v1472, %v1407
  %v1474 = vrot.slane %v1473, 4
  %v1475 = vadd.f32 %v1473, %v1474
  %v1476 = vrot.slane %v1475, 2
  %v1477 = vadd.f32 %v1475, %v1476
  %v1478 = vrot.slane %v1477, 1
  %v1479 = vadd.f32 %v1477, %v1478
  %v1480 = vrcp.pop %v1416
  %v1481 = vrcp.pop %v1425
  %v1482 = vrcp.pop %v1434
  %v1483 = vrcp.pop %v1443
  %v1484 = vrcp.pop %v1452
  %v1485 = vrcp.pop %v1461
  %v1486 = vrcp.pop %v1470
  %v1487 = vrcp.pop %v1479
  %v1488 = vmul.f32 %v1480, 0.17677669
  %v1489 = vmul.f32 %v1481, 0.17677669
  %v1490 = vmul.f32 %v1482, 0.17677669
  %v1491 = vmul.f32 %v1483, 0.17677669
  %v1492 = vmul.f32 %v1484, 0.17677669
  %v1493 = vmul.f32 %v1485, 0.17677669
  %v1494 = vmul.f32 %v1486, 0.17677669
  %v1495 = vmul.f32 %v1487, 0.17677669
  %v1496 = vmul.f32 %v1345, %v1488
  %v1497 = vmul.f32 %v1347, %v1489
  %v1498 = vmul.f32 %v1349, %v1488
  %v1499 = vmul.f32 %v1351, %v1489
  %v1500 = vmul.f32 %v1353, %v1488
  %v1501 = vmul.f32 %v1355, %v1489
  %v1502 = vmul.f32 %v1357, %v1488
  %v1503 = vmul.f32 %v1359, %v1489
  %v1504 = vmul.f32 %v1361, %v1490
  %v1505 = vmul.f32 %v1363, %v1491
  %v1506 = vmul.f32 %v1365, %v1490
  %v1507 = vmul.f32 %v1367, %v1491
  %v1508 = vmul.f32 %v1369, %v1490
  %v1509 = vmul.f32 %v1371, %v1491
  %v1510 = vmul.f32 %v1373, %v1490
  %v1511 = vmul.f32 %v1375, %v1491
  %v1512 = vmul.f32 %v1377, %v1492
  %v1513 = vmul.f32 %v1379, %v1493
  %v1514 = vmul.f32 %v1381, %v1492
  %v1515 = vmul.f32 %v1383, %v1493
  %v1516 = vmul.f32 %v1385, %v1492
  %v1517 = vmul.f32 %v1387, %v1493
  %v1518 = vmul.f32 %v1389, %v1492
  %v1519 = vmul.f32 %v1391, %v1493
  %v1520 = vmul.f32 %v1393, %v1494
  %v1521 = vmul.f32 %v1395, %v1495
  %v1522 = vmul.f32 %v1397, %v1494
  %v1523 = vmul.f32 %v1399, %v1495
  %v1524 = vmul.f32 %v1401, %v1494
  %v1525 = vmul.f32 %v1403, %v1495
  %v1526 = vmul.f32 %v1405, %v1494
  %v1527 = vmul.f32 %v1407, %v1495
  %v1528 = vmax.f32 %v419, %v421
  %1529 = vmax.xlane.f32.xlu0 %v1528
  %v1530 = vpop.xlane.xlu0 %1529
  %v1531 = vmax.f32 %v423, %v425
  %1532 = vmax.xlane.f32.xlu0 %v1531
  %v1533 = vpop.xlane.xlu0 %1532
  %v1534 = vmax.f32 %v429, %v431
  %1535 = vmax.xlane.f32.xlu0 %v1534
  %v1536 = vpop.xlane.xlu0 %1535
  %v1537 = vmax.f32 %v433, %v435
  %1538 = vmax.xlane.f32.xlu0 %v1537
  %v1539 = vpop.xlane.xlu0 %1538
  %v1540 = vmax.f32 %v439, %v441
  %1541 = vmax.xlane.f32.xlu0 %v1540
  %v1542 = vpop.xlane.xlu0 %1541
  %v1543 = vmax.f32 %v443, %v445
  %1544 = vmax.xlane.f32.xlu0 %v1543
  %v1545 = vpop.xlane.xlu0 %1544
  %v1546 = vmax.f32 %v449, %v451
  %1547 = vmax.xlane.f32.xlu0 %v1546
  %v1548 = vpop.xlane.xlu0 %1547
  %v1549 = vmax.f32 %v453, %v455
  %1550 = vmax.xlane.f32.xlu0 %v1549
  %v1551 = vpop.xlane.xlu0 %1550
  %v1552 = vmax.f32 %v459, %v461
  %1553 = vmax.xlane.f32.xlu0 %v1552
  %v1554 = vpop.xlane.xlu0 %1553
  %v1555 = vmax.f32 %v463, %v465
  %1556 = vmax.xlane.f32.xlu0 %v1555
  %v1557 = vpop.xlane.xlu0 %1556
  %v1558 = vmax.f32 %v469, %v471
  %1559 = vmax.xlane.f32.xlu0 %v1558
  %v1560 = vpop.xlane.xlu0 %1559
  %v1561 = vmax.f32 %v473, %v475
  %1562 = vmax.xlane.f32.xlu0 %v1561
  %v1563 = vpop.xlane.xlu0 %1562
  %v1564 = vmax.f32 %v479, %v481
  %1565 = vmax.xlane.f32.xlu0 %v1564
  %v1566 = vpop.xlane.xlu0 %1565
  %v1567 = vmax.f32 %v483, %v485
  %1568 = vmax.xlane.f32.xlu0 %v1567
  %v1569 = vpop.xlane.xlu0 %1568
  %v1570 = vmax.f32 %v489, %v491
  %1571 = vmax.xlane.f32.xlu0 %v1570
  %v1572 = vpop.xlane.xlu0 %1571
  %v1573 = vmax.f32 %v493, %v495
  %1574 = vmax.xlane.f32.xlu0 %v1573
  %v1575 = vpop.xlane.xlu0 %1574
  %v1576 = vmax.f32 %v1530, %v1049
  %v1577 = vmax.f32 %v1533, %v1054
  %v1578 = vmax.f32 %v1536, %v1059
  %v1579 = vmax.f32 %v1539, %v1064
  %v1580 = vmax.f32 %v1542, %v1069
  %v1581 = vmax.f32 %v1545, %v1074
  %v1582 = vmax.f32 %v1548, %v1079
  %v1583 = vmax.f32 %v1551, %v1084
  %v1584 = vmax.f32 %v1554, %v1089
  %v1585 = vmax.f32 %v1557, %v1094
  %v1586 = vmax.f32 %v1560, %v1099
  %v1587 = vmax.f32 %v1563, %v1104
  %v1588 = vmax.f32 %v1566, %v1109
  %v1589 = vmax.f32 %v1569, %v1114
  %v1590 = vmax.f32 %v1572, %v1119
  %v1591 = vmax.f32 %v1575, %v1124
  %1593 = vset.pattern.permute.xlu0 0
  %1594 = vperm.xlu0 %1593, %v1576
  %v1595 = vpop.permute.xlu0 %1594
  %1598 = vset.pattern.permute.xlu0 0
  %1599 = vperm.xlu0 %1598, %v1577
  %v1600 = vpop.permute.xlu0 %1599
  %1603 = vset.pattern.permute.xlu0 0
  %1604 = vperm.xlu0 %1603, %v1578
  %v1605 = vpop.permute.xlu0 %1604
  %1608 = vset.pattern.permute.xlu0 0
  %1609 = vperm.xlu0 %1608, %v1579
  %v1610 = vpop.permute.xlu0 %1609
  %1613 = vset.pattern.permute.xlu0 0
  %1614 = vperm.xlu0 %1613, %v1580
  %v1615 = vpop.permute.xlu0 %1614
  %1618 = vset.pattern.permute.xlu0 0
  %1619 = vperm.xlu0 %1618, %v1581
  %v1620 = vpop.permute.xlu0 %1619
  %1623 = vset.pattern.permute.xlu0 0
  %1624 = vperm.xlu0 %1623, %v1582
  %v1625 = vpop.permute.xlu0 %1624
  %1628 = vset.pattern.permute.xlu0 0
  %1629 = vperm.xlu0 %1628, %v1583
  %v1630 = vpop.permute.xlu0 %1629
  %1633 = vset.pattern.permute.xlu0 0
  %1634 = vperm.xlu0 %1633, %v1584
  %v1635 = vpop.permute.xlu0 %1634
  %1638 = vset.pattern.permute.xlu0 0
  %1639 = vperm.xlu0 %1638, %v1585
  %v1640 = vpop.permute.xlu0 %1639
  %1643 = vset.pattern.permute.xlu0 0
  %1644 = vperm.xlu0 %1643, %v1586
  %v1645 = vpop.permute.xlu0 %1644
  %1648 = vset.pattern.permute.xlu0 0
  %1649 = vperm.xlu0 %1648, %v1587
  %v1650 = vpop.permute.xlu0 %1649
  %1653 = vset.pattern.permute.xlu0 0
  %1654 = vperm.xlu0 %1653, %v1588
  %v1655 = vpop.permute.xlu0 %1654
  %1658 = vset.pattern.permute.xlu0 0
  %1659 = vperm.xlu0 %1658, %v1589
  %v1660 = vpop.permute.xlu0 %1659
  %1663 = vset.pattern.permute.xlu0 0
  %1664 = vperm.xlu0 %1663, %v1590
  %v1665 = vpop.permute.xlu0 %1664
  %1668 = vset.pattern.permute.xlu0 0
  %1669 = vperm.xlu0 %1668, %v1591
  %v1670 = vpop.permute.xlu0 %1669
  %v1672 = vsub.f32 %v419, %v1595
  %v1673 = vsub.f32 %v421, %v1595
  %v1674 = vsub.f32 %v423, %v1600
  %v1675 = vsub.f32 %v425, %v1600
  %v1676 = vsub.f32 %v429, %v1605
  %v1677 = vsub.f32 %v431, %v1605
  %v1678 = vsub.f32 %v433, %v1610
  %v1679 = vsub.f32 %v435, %v1610
  %v1680 = vsub.f32 %v439, %v1615
  %v1681 = vsub.f32 %v441, %v1615
  %v1682 = vsub.f32 %v443, %v1620
  %v1683 = vsub.f32 %v445, %v1620
  %v1684 = vsub.f32 %v449, %v1625
  %v1685 = vsub.f32 %v451, %v1625
  %v1686 = vsub.f32 %v453, %v1630
  %v1687 = vsub.f32 %v455, %v1630
  %v1688 = vsub.f32 %v459, %v1635
  %v1689 = vsub.f32 %v461, %v1635
  %v1690 = vsub.f32 %v463, %v1640
  %v1691 = vsub.f32 %v465, %v1640
  %v1692 = vsub.f32 %v469, %v1645
  %v1693 = vsub.f32 %v471, %v1645
  %v1694 = vsub.f32 %v473, %v1650
  %v1695 = vsub.f32 %v475, %v1650
  %v1696 = vsub.f32 %v479, %v1655
  %v1697 = vsub.f32 %v481, %v1655
  %v1698 = vsub.f32 %v483, %v1660
  %v1699 = vsub.f32 %v485, %v1660
  %v1700 = vsub.f32 %v489, %v1665
  %v1701 = vsub.f32 %v491, %v1665
  %v1702 = vsub.f32 %v493, %v1670
  %v1703 = vsub.f32 %v495, %v1670
  %v1704 = vmul.f32 %v1672, 1.442695
  %v1705 = vpow.pop %v1704
  %v1706 = vmul.f32 %v1673, 1.442695
  %v1707 = vpow.pop %v1706
  %v1708 = vmul.f32 %v1674, 1.442695
  %v1709 = vpow.pop %v1708
  %v1710 = vmul.f32 %v1675, 1.442695
  %v1711 = vpow.pop %v1710
  %v1712 = vmul.f32 %v1676, 1.442695
  %v1713 = vpow.pop %v1712
  %v1714 = vmul.f32 %v1677, 1.442695
  %v1715 = vpow.pop %v1714
  %v1716 = vmul.f32 %v1678, 1.442695
  %v1717 = vpow.pop %v1716
  %v1718 = vmul.f32 %v1679, 1.442695
  %v1719 = vpow.pop %v1718
  %v1720 = vmul.f32 %v1680, 1.442695
  %v1721 = vpow.pop %v1720
  %v1722 = vmul.f32 %v1681, 1.442695
  %v1723 = vpow.pop %v1722
  %v1724 = vmul.f32 %v1682, 1.442695
  %v1725 = vpow.pop %v1724
  %v1726 = vmul.f32 %v1683, 1.442695
  %v1727 = vpow.pop %v1726
  %v1728 = vmul.f32 %v1684, 1.442695
  %v1729 = vpow.pop %v1728
  %v1730 = vmul.f32 %v1685, 1.442695
  %v1731 = vpow.pop %v1730
  %v1732 = vmul.f32 %v1686, 1.442695
  %v1733 = vpow.pop %v1732
  %v1734 = vmul.f32 %v1687, 1.442695
  %v1735 = vpow.pop %v1734
  %v1736 = vmul.f32 %v1688, 1.442695
  %v1737 = vpow.pop %v1736
  %v1738 = vmul.f32 %v1689, 1.442695
  %v1739 = vpow.pop %v1738
  %v1740 = vmul.f32 %v1690, 1.442695
  %v1741 = vpow.pop %v1740
  %v1742 = vmul.f32 %v1691, 1.442695
  %v1743 = vpow.pop %v1742
  %v1744 = vmul.f32 %v1692, 1.442695
  %v1745 = vpow.pop %v1744
  %v1746 = vmul.f32 %v1693, 1.442695
  %v1747 = vpow.pop %v1746
  %v1748 = vmul.f32 %v1694, 1.442695
  %v1749 = vpow.pop %v1748
  %v1750 = vmul.f32 %v1695, 1.442695
  %v1751 = vpow.pop %v1750
  %v1752 = vmul.f32 %v1696, 1.442695
  %v1753 = vpow.pop %v1752
  %v1754 = vmul.f32 %v1697, 1.442695
  %v1755 = vpow.pop %v1754
  %v1756 = vmul.f32 %v1698, 1.442695
  %v1757 = vpow.pop %v1756
  %v1758 = vmul.f32 %v1699, 1.442695
  %v1759 = vpow.pop %v1758
  %v1760 = vmul.f32 %v1700, 1.442695
  %v1761 = vpow.pop %v1760
  %v1762 = vmul.f32 %v1701, 1.442695
  %v1763 = vpow.pop %v1762
  %v1764 = vmul.f32 %v1702, 1.442695
  %v1765 = vpow.pop %v1764
  %v1766 = vmul.f32 %v1703, 1.442695
  %v1767 = vpow.pop %v1766
  %v1768 = vsub.f32 %v1049, %v1576
  %v1769 = vsub.f32 %v1054, %v1577
  %v1770 = vsub.f32 %v1059, %v1578
  %v1771 = vsub.f32 %v1064, %v1579
  %v1772 = vsub.f32 %v1069, %v1580
  %v1773 = vsub.f32 %v1074, %v1581
  %v1774 = vsub.f32 %v1079, %v1582
  %v1775 = vsub.f32 %v1084, %v1583
  %v1776 = vsub.f32 %v1089, %v1584
  %v1777 = vsub.f32 %v1094, %v1585
  %v1778 = vsub.f32 %v1099, %v1586
  %v1779 = vsub.f32 %v1104, %v1587
  %v1780 = vsub.f32 %v1109, %v1588
  %v1781 = vsub.f32 %v1114, %v1589
  %v1782 = vsub.f32 %v1119, %v1590
  %v1783 = vsub.f32 %v1124, %v1591
  %v1784 = vmul.f32 %v1768, 1.442695
  %v1785 = vpow.pop %v1784
  %v1786 = vmul.f32 %v1769, 1.442695
  %v1787 = vpow.pop %v1786
  %v1788 = vmul.f32 %v1770, 1.442695
  %v1789 = vpow.pop %v1788
  %v1790 = vmul.f32 %v1771, 1.442695
  %v1791 = vpow.pop %v1790
  %v1792 = vmul.f32 %v1772, 1.442695
  %v1793 = vpow.pop %v1792
  %v1794 = vmul.f32 %v1773, 1.442695
  %v1795 = vpow.pop %v1794
  %v1796 = vmul.f32 %v1774, 1.442695
  %v1797 = vpow.pop %v1796
  %v1798 = vmul.f32 %v1775, 1.442695
  %v1799 = vpow.pop %v1798
  %v1800 = vmul.f32 %v1776, 1.442695
  %v1801 = vpow.pop %v1800
  %v1802 = vmul.f32 %v1777, 1.442695
  %v1803 = vpow.pop %v1802
  %v1804 = vmul.f32 %v1778, 1.442695
  %v1805 = vpow.pop %v1804
  %v1806 = vmul.f32 %v1779, 1.442695
  %v1807 = vpow.pop %v1806
  %v1808 = vmul.f32 %v1780, 1.442695
  %v1809 = vpow.pop %v1808
  %v1810 = vmul.f32 %v1781, 1.442695
  %v1811 = vpow.pop %v1810
  %v1812 = vmul.f32 %v1782, 1.442695
  %v1813 = vpow.pop %v1812
  %v1814 = vmul.f32 %v1783, 1.442695
  %v1815 = vpow.pop %v1814
  %v1816 = vadd.f32 %v1705, %v1707
  %1817 = vadd.xlane.f32.xlu0 %v1816
  %v1818 = vpop.xlane.xlu0 %1817
  %v1819 = vadd.f32 %v1709, %v1711
  %1820 = vadd.xlane.f32.xlu0 %v1819
  %v1821 = vpop.xlane.xlu0 %1820
  %v1822 = vadd.f32 %v1713, %v1715
  %1823 = vadd.xlane.f32.xlu0 %v1822
  %v1824 = vpop.xlane.xlu0 %1823
  %v1825 = vadd.f32 %v1717, %v1719
  %1826 = vadd.xlane.f32.xlu0 %v1825
  %v1827 = vpop.xlane.xlu0 %1826
  %v1828 = vadd.f32 %v1721, %v1723
  %1829 = vadd.xlane.f32.xlu0 %v1828
  %v1830 = vpop.xlane.xlu0 %1829
  %v1831 = vadd.f32 %v1725, %v1727
  %1832 = vadd.xlane.f32.xlu0 %v1831
  %v1833 = vpop.xlane.xlu0 %1832
  %v1834 = vadd.f32 %v1729, %v1731
  %1835 = vadd.xlane.f32.xlu0 %v1834
  %v1836 = vpop.xlane.xlu0 %1835
  %v1837 = vadd.f32 %v1733, %v1735
  %1838 = vadd.xlane.f32.xlu0 %v1837
  %v1839 = vpop.xlane.xlu0 %1838
  %v1840 = vadd.f32 %v1737, %v1739
  %1841 = vadd.xlane.f32.xlu0 %v1840
  %v1842 = vpop.xlane.xlu0 %1841
  %v1843 = vadd.f32 %v1741, %v1743
  %1844 = vadd.xlane.f32.xlu0 %v1843
  %v1845 = vpop.xlane.xlu0 %1844
  %v1846 = vadd.f32 %v1745, %v1747
  %1847 = vadd.xlane.f32.xlu0 %v1846
  %v1848 = vpop.xlane.xlu0 %1847
  %v1849 = vadd.f32 %v1749, %v1751
  %1850 = vadd.xlane.f32.xlu0 %v1849
  %v1851 = vpop.xlane.xlu0 %1850
  %v1852 = vadd.f32 %v1753, %v1755
  %1853 = vadd.xlane.f32.xlu0 %v1852
  %v1854 = vpop.xlane.xlu0 %1853
  %v1855 = vadd.f32 %v1757, %v1759
  %1856 = vadd.xlane.f32.xlu0 %v1855
  %v1857 = vpop.xlane.xlu0 %1856
  %v1858 = vadd.f32 %v1761, %v1763
  %1859 = vadd.xlane.f32.xlu0 %v1858
  %v1860 = vpop.xlane.xlu0 %1859
  %v1861 = vadd.f32 %v1765, %v1767
  %1862 = vadd.xlane.f32.xlu0 %v1861
  %v1863 = vpop.xlane.xlu0 %1862
  %v1864 = vadd.f32 %v1818, %v1785
  %v1865 = vadd.f32 %v1821, %v1787
  %v1866 = vadd.f32 %v1824, %v1789
  %v1867 = vadd.f32 %v1827, %v1791
  %v1868 = vadd.f32 %v1830, %v1793
  %v1869 = vadd.f32 %v1833, %v1795
  %v1870 = vadd.f32 %v1836, %v1797
  %v1871 = vadd.f32 %v1839, %v1799
  %v1872 = vadd.f32 %v1842, %v1801
  %v1873 = vadd.f32 %v1845, %v1803
  %v1874 = vadd.f32 %v1848, %v1805
  %v1875 = vadd.f32 %v1851, %v1807
  %v1876 = vadd.f32 %v1854, %v1809
  %v1877 = vadd.f32 %v1857, %v1811
  %v1878 = vadd.f32 %v1860, %v1813
  %v1879 = vadd.f32 %v1863, %v1815
  %v1880 = vrcp.pop %v1864
  %v1881 = vrcp.pop %v1865
  %v1882 = vrcp.pop %v1866
  %v1883 = vrcp.pop %v1867
  %v1884 = vrcp.pop %v1868
  %v1885 = vrcp.pop %v1869
  %v1886 = vrcp.pop %v1870
  %v1887 = vrcp.pop %v1871
  %v1888 = vrcp.pop %v1872
  %v1889 = vrcp.pop %v1873
  %v1890 = vrcp.pop %v1874
  %v1891 = vrcp.pop %v1875
  %v1892 = vrcp.pop %v1876
  %v1893 = vrcp.pop %v1877
  %v1894 = vrcp.pop %v1878
  %v1895 = vrcp.pop %v1879
  %1897 = vset.pattern.permute.xlu0 0
  %1898 = vperm.xlu0 %1897, %v1880
  %v1899 = vpop.permute.xlu0 %1898
  %1902 = vset.pattern.permute.xlu0 0
  %1903 = vperm.xlu0 %1902, %v1881
  %v1904 = vpop.permute.xlu0 %1903
  %1907 = vset.pattern.permute.xlu0 0
  %1908 = vperm.xlu0 %1907, %v1882
  %v1909 = vpop.permute.xlu0 %1908
  %1912 = vset.pattern.permute.xlu0 0
  %1913 = vperm.xlu0 %1912, %v1883
  %v1914 = vpop.permute.xlu0 %1913
  %1917 = vset.pattern.permute.xlu0 0
  %1918 = vperm.xlu0 %1917, %v1884
  %v1919 = vpop.permute.xlu0 %1918
  %1922 = vset.pattern.permute.xlu0 0
  %1923 = vperm.xlu0 %1922, %v1885
  %v1924 = vpop.permute.xlu0 %1923
  %1927 = vset.pattern.permute.xlu0 0
  %1928 = vperm.xlu0 %1927, %v1886
  %v1929 = vpop.permute.xlu0 %1928
  %1932 = vset.pattern.permute.xlu0 0
  %1933 = vperm.xlu0 %1932, %v1887
  %v1934 = vpop.permute.xlu0 %1933
  %1937 = vset.pattern.permute.xlu0 0
  %1938 = vperm.xlu0 %1937, %v1888
  %v1939 = vpop.permute.xlu0 %1938
  %1942 = vset.pattern.permute.xlu0 0
  %1943 = vperm.xlu0 %1942, %v1889
  %v1944 = vpop.permute.xlu0 %1943
  %1947 = vset.pattern.permute.xlu0 0
  %1948 = vperm.xlu0 %1947, %v1890
  %v1949 = vpop.permute.xlu0 %1948
  %1952 = vset.pattern.permute.xlu0 0
  %1953 = vperm.xlu0 %1952, %v1891
  %v1954 = vpop.permute.xlu0 %1953
  %1957 = vset.pattern.permute.xlu0 0
  %1958 = vperm.xlu0 %1957, %v1892
  %v1959 = vpop.permute.xlu0 %1958
  %1962 = vset.pattern.permute.xlu0 0
  %1963 = vperm.xlu0 %1962, %v1893
  %v1964 = vpop.permute.xlu0 %1963
  %1967 = vset.pattern.permute.xlu0 0
  %1968 = vperm.xlu0 %1967, %v1894
  %v1969 = vpop.permute.xlu0 %1968
  %1972 = vset.pattern.permute.xlu0 0
  %1973 = vperm.xlu0 %1972, %v1895
  %v1974 = vpop.permute.xlu0 %1973
  %v1976 = vmul.f32 %v1705, %v1899
  %v1977 = vmul.f32 %v1707, %v1899
  %v1978 = vmul.f32 %v1709, %v1904
  %v1979 = vmul.f32 %v1711, %v1904
  %v1980 = vmul.f32 %v1713, %v1909
  %v1981 = vmul.f32 %v1715, %v1909
  %v1982 = vmul.f32 %v1717, %v1914
  %v1983 = vmul.f32 %v1719, %v1914
  %v1984 = vmul.f32 %v1721, %v1919
  %v1985 = vmul.f32 %v1723, %v1919
  %v1986 = vmul.f32 %v1725, %v1924
  %v1987 = vmul.f32 %v1727, %v1924
  %v1988 = vmul.f32 %v1729, %v1929
  %v1989 = vmul.f32 %v1731, %v1929
  %v1990 = vmul.f32 %v1733, %v1934
  %v1991 = vmul.f32 %v1735, %v1934
  %v1992 = vmul.f32 %v1737, %v1939
  %v1993 = vmul.f32 %v1739, %v1939
  %v1994 = vmul.f32 %v1741, %v1944
  %v1995 = vmul.f32 %v1743, %v1944
  %v1996 = vmul.f32 %v1745, %v1949
  %v1997 = vmul.f32 %v1747, %v1949
  %v1998 = vmul.f32 %v1749, %v1954
  %v1999 = vmul.f32 %v1751, %v1954
  %v2000 = vmul.f32 %v1753, %v1959
  %v2001 = vmul.f32 %v1755, %v1959
  %v2002 = vmul.f32 %v1757, %v1964
  %v2003 = vmul.f32 %v1759, %v1964
  %v2004 = vmul.f32 %v1761, %v1969
  %v2005 = vmul.f32 %v1763, %v1969
  %v2006 = vmul.f32 %v1765, %v1974
  %v2007 = vmul.f32 %v1767, %v1974
  %v2008 = vmul.f32 %v1785, %v1880
  %v2009 = vmul.f32 %v1787, %v1881
  %v2010 = vmul.f32 %v1789, %v1882
  %v2011 = vmul.f32 %v1791, %v1883
  %v2012 = vmul.f32 %v1793, %v1884
  %v2013 = vmul.f32 %v1795, %v1885
  %v2014 = vmul.f32 %v1797, %v1886
  %v2015 = vmul.f32 %v1799, %v1887
  %v2016 = vmul.f32 %v1801, %v1888
  %v2017 = vmul.f32 %v1803, %v1889
  %v2018 = vmul.f32 %v1805, %v1890
  %v2019 = vmul.f32 %v1807, %v1891
  %v2020 = vmul.f32 %v1809, %v1892
  %v2021 = vmul.f32 %v1811, %v1893
  %v2022 = vmul.f32 %v1813, %v1894
  %v2023 = vmul.f32 %v1815, %v1895
  %v2024 = vpack.c.bf16 %v1978, %v1976
  %v2025 = vpack.c.bf16 %v1979, %v1977
  %v2026 = vpack.c.bf16 %v1982, %v1980
  %v2027 = vpack.c.bf16 %v1983, %v1981
  %v2028 = vpack.c.bf16 %v1986, %v1984
  %v2029 = vpack.c.bf16 %v1987, %v1985
  %v2030 = vpack.c.bf16 %v1990, %v1988
  %v2031 = vpack.c.bf16 %v1991, %v1989
  %v2032 = vpack.c.bf16 %v1994, %v1992
  %v2033 = vpack.c.bf16 %v1995, %v1993
  %v2034 = vpack.c.bf16 %v1998, %v1996
  %v2035 = vpack.c.bf16 %v1999, %v1997
  %v2036 = vpack.c.bf16 %v2002, %v2000
  %v2037 = vpack.c.bf16 %v2003, %v2001
  %v2038 = vpack.c.bf16 %v2006, %v2004
  %v2039 = vpack.c.bf16 %v2007, %v2005
  %v2040 = vpack.c.bf16 %v503, %v499
  %v2041 = vpack.c.bf16 %v505, %v501
  %v2042 = vpack.c.bf16 %v513, %v509
  %v2043 = vpack.c.bf16 %v515, %v511
  %v2044 = vpack.c.bf16 %v523, %v519
  %v2045 = vpack.c.bf16 %v525, %v521
  %v2046 = vpack.c.bf16 %v533, %v529
  %v2047 = vpack.c.bf16 %v535, %v531
  %v2048 = vpack.c.bf16 %v543, %v539
  %v2049 = vpack.c.bf16 %v545, %v541
  %v2050 = vpack.c.bf16 %v553, %v549
  %v2051 = vpack.c.bf16 %v555, %v551
  %v2052 = vpack.c.bf16 %v563, %v559
  %v2053 = vpack.c.bf16 %v565, %v561
  %v2054 = vpack.c.bf16 %v573, %v569
  %v2055 = vpack.c.bf16 %v575, %v571
  %2057 = vset.pattern.permute.xlu0 0
  %2058 = vperm.xlu0 %2057, %v2008
  %v2059 = vpop.permute.xlu0 %2058
  %2062 = vset.pattern.permute.xlu0 0
  %2063 = vperm.xlu0 %2062, %v2009
  %v2064 = vpop.permute.xlu0 %2063
  %2067 = vset.pattern.permute.xlu0 0
  %2068 = vperm.xlu0 %2067, %v2010
  %v2069 = vpop.permute.xlu0 %2068
  %2072 = vset.pattern.permute.xlu0 0
  %2073 = vperm.xlu0 %2072, %v2011
  %v2074 = vpop.permute.xlu0 %2073
  %2077 = vset.pattern.permute.xlu0 0
  %2078 = vperm.xlu0 %2077, %v2012
  %v2079 = vpop.permute.xlu0 %2078
  %2082 = vset.pattern.permute.xlu0 0
  %2083 = vperm.xlu0 %2082, %v2013
  %v2084 = vpop.permute.xlu0 %2083
  %2087 = vset.pattern.permute.xlu0 0
  %2088 = vperm.xlu0 %2087, %v2014
  %v2089 = vpop.permute.xlu0 %2088
  %2092 = vset.pattern.permute.xlu0 0
  %2093 = vperm.xlu0 %2092, %v2015
  %v2094 = vpop.permute.xlu0 %2093
  %2097 = vset.pattern.permute.xlu0 0
  %2098 = vperm.xlu0 %2097, %v2016
  %v2099 = vpop.permute.xlu0 %2098
  %2102 = vset.pattern.permute.xlu0 0
  %2103 = vperm.xlu0 %2102, %v2017
  %v2104 = vpop.permute.xlu0 %2103
  %2107 = vset.pattern.permute.xlu0 0
  %2108 = vperm.xlu0 %2107, %v2018
  %v2109 = vpop.permute.xlu0 %2108
  %2112 = vset.pattern.permute.xlu0 0
  %2113 = vperm.xlu0 %2112, %v2019
  %v2114 = vpop.permute.xlu0 %2113
  %2117 = vset.pattern.permute.xlu0 0
  %2118 = vperm.xlu0 %2117, %v2020
  %v2119 = vpop.permute.xlu0 %2118
  %2122 = vset.pattern.permute.xlu0 0
  %2123 = vperm.xlu0 %2122, %v2021
  %v2124 = vpop.permute.xlu0 %2123
  %2127 = vset.pattern.permute.xlu0 0
  %2128 = vperm.xlu0 %2127, %v2022
  %v2129 = vpop.permute.xlu0 %2128
  %2132 = vset.pattern.permute.xlu0 0
  %2133 = vperm.xlu0 %2132, %v2023
  %v2134 = vpop.permute.xlu0 %2133
  %v2136 = vlaneseq
  %v2137 = vshrl.u32 %v2136, 7
  %v2138 = vsub.s32 0, %v2137
  %v2139 = vrot.slane %v1217, %v2138
  %v2140 = vmul.f32 %v2059, %v2139
  %v2141 = vmul.f32 %v2064, %v2139
  %v2142 = vmul.f32 %v2069, %v2139
  %v2143 = vmul.f32 %v2074, %v2139
  %v2144 = vmul.f32 %v2079, %v2139
  %v2145 = vmul.f32 %v2084, %v2139
  %v2146 = vmul.f32 %v2089, %v2139
  %v2147 = vmul.f32 %v2094, %v2139
  %v2148 = vmul.f32 %v2099, %v2139
  %v2149 = vmul.f32 %v2104, %v2139
  %v2150 = vmul.f32 %v2109, %v2139
  %v2151 = vmul.f32 %v2114, %v2139
  %v2152 = vmul.f32 %v2119, %v2139
  %v2153 = vmul.f32 %v2124, %v2139
  %v2154 = vmul.f32 %v2129, %v2139
  %v2155 = vmul.f32 %v2134, %v2139
  %2156 = vmatprep.subr.bf16.mxu0 %v2041
  %2157 = vmatpush1.bf16.xpose.msra.mxu0 %v2040
  %2158 = vmatprep.subr.bf16.mxu0 %v2043
  %2159 = vmatpush1.bf16.xpose.msra.mxu0 %v2042
  %2160 = vmatprep.subr.bf16.mxu0 %v2045
  %2161 = vmatpush1.bf16.xpose.msra.mxu0 %v2044
  %2162 = vmatprep.subr.bf16.mxu0 %v2047
  %2163 = vmatpush1.bf16.xpose.msra.mxu0 %v2046
  %2164 = vmatprep.subr.bf16.mxu0 %v2049
  %2165 = vmatpush1.bf16.xpose.msra.mxu0 %v2048
  %2166 = vmatprep.subr.bf16.mxu0 %v2051
  %2167 = vmatpush1.bf16.xpose.msra.mxu0 %v2050
  %2168 = vmatprep.subr.bf16.mxu0 %v2053
  %2169 = vmatpush1.bf16.xpose.msra.mxu0 %v2052
  %2170 = vmatprep.subr.bf16.mxu0 %v2055
  %2171 = vmatpush1.bf16.xpose.msra.mxu0 %v2054
  %2172 = vmatprep.subr.bf16.mxu0 0
  %2173 = vmatpush1.bf16.xpose.msra.mxu0 0
  %2174 = vmatprep.subr.bf16.mxu0 0
  %2175 = vmatpush1.bf16.xpose.msra.mxu0 0
  %2176 = vmatprep.subr.bf16.mxu0 0
  %2177 = vmatpush1.bf16.xpose.msra.mxu0 0
  %2178 = vmatprep.subr.bf16.mxu0 0
  %2179 = vmatpush1.bf16.xpose.msra.mxu0 0
  %2180 = vmatprep.subr.bf16.mxu0 0
  %2181 = vmatpush1.bf16.xpose.msra.mxu0 0
  %2182 = vmatprep.subr.bf16.mxu0 0
  %2183 = vmatpush1.bf16.xpose.msra.mxu0 0
  %2184 = vmatprep.subr.bf16.mxu0 0
  %2185 = vmatpush1.bf16.xpose.msra.mxu0 0
  %2186 = vmatprep.subr.bf16.mxu0 0
  %2187 = vmatpush1.bf16.xpose.msra.mxu0 0
  %2188 = vmatprep.mubr.bf16.mxu0 %v2025
  %2189 = vmatmul.mubr.bf16.gmra.mrb[0].mxu0 %v2024
  %v2190 = vpop.f32.mrb[0].mxu0
  %v2191 = vadd.f32 %v2140, %v2190
  %v2192 = vpop.f32.mrb[0].mxu0
  %v2193 = vpop.f32.mrb[0].mxu0
  %v2194 = vadd.f32 %v2141, %v2193
  %v2195 = vpop.f32.mrb[0].mxu0
  %2196 = vmatprep.mubr.bf16.mxu0 %v2027
  %2197 = vmatmul.mubr.bf16.gmra.mrb[0].mxu0 %v2026
  %v2198 = vpop.f32.mrb[0].mxu0
  %v2199 = vadd.f32 %v2142, %v2198
  %v2200 = vpop.f32.mrb[0].mxu0
  %v2201 = vpop.f32.mrb[0].mxu0
  %v2202 = vadd.f32 %v2143, %v2201
  %v2203 = vpop.f32.mrb[0].mxu0
  %2204 = vmatprep.mubr.bf16.mxu0 %v2029
  %2205 = vmatmul.mubr.bf16.gmra.mrb[0].mxu0 %v2028
  %v2206 = vpop.f32.mrb[0].mxu0
  %v2207 = vadd.f32 %v2144, %v2206
  %v2208 = vpop.f32.mrb[0].mxu0
  %v2209 = vpop.f32.mrb[0].mxu0
  %v2210 = vadd.f32 %v2145, %v2209
  %v2211 = vpop.f32.mrb[0].mxu0
  %2212 = vmatprep.mubr.bf16.mxu0 %v2031
  %2213 = vmatmul.mubr.bf16.gmra.mrb[0].mxu0 %v2030
  %v2214 = vpop.f32.mrb[0].mxu0
  %v2215 = vadd.f32 %v2146, %v2214
  %v2216 = vpop.f32.mrb[0].mxu0
  %v2217 = vpop.f32.mrb[0].mxu0
  %v2218 = vadd.f32 %v2147, %v2217
  %v2219 = vpop.f32.mrb[0].mxu0
  %2220 = vmatprep.mubr.bf16.mxu0 %v2033
  %2221 = vmatmul.mubr.bf16.gmra.mrb[0].mxu0 %v2032
  %v2222 = vpop.f32.mrb[0].mxu0
  %v2223 = vadd.f32 %v2148, %v2222
  %v2224 = vpop.f32.mrb[0].mxu0
  %v2225 = vpop.f32.mrb[0].mxu0
  %v2226 = vadd.f32 %v2149, %v2225
  %v2227 = vpop.f32.mrb[0].mxu0
  %2228 = vmatprep.mubr.bf16.mxu0 %v2035
  %2229 = vmatmul.mubr.bf16.gmra.mrb[0].mxu0 %v2034
  %v2230 = vpop.f32.mrb[0].mxu0
  %v2231 = vadd.f32 %v2150, %v2230
  %v2232 = vpop.f32.mrb[0].mxu0
  %v2233 = vpop.f32.mrb[0].mxu0
  %v2234 = vadd.f32 %v2151, %v2233
  %v2235 = vpop.f32.mrb[0].mxu0
  %2236 = vmatprep.mubr.bf16.mxu0 %v2037
  %2237 = vmatmul.mubr.bf16.gmra.mrb[0].mxu0 %v2036
  %v2238 = vpop.f32.mrb[0].mxu0
  %v2239 = vadd.f32 %v2152, %v2238
  %v2240 = vpop.f32.mrb[0].mxu0
  %v2241 = vpop.f32.mrb[0].mxu0
  %v2242 = vadd.f32 %v2153, %v2241
  %v2243 = vpop.f32.mrb[0].mxu0
  %2244 = vmatprep.mubr.bf16.mxu0 %v2039
  %2245 = vmatmul.mubr.bf16.gmra.mrb[0].mxu0 %v2038
  %v2246 = vpop.f32.mrb[0].mxu0
  %v2247 = vadd.f32 %v2154, %v2246
  %v2248 = vpop.f32.mrb[0].mxu0
  %v2249 = vpop.f32.mrb[0].mxu0
  %v2250 = vadd.f32 %v2155, %v2249
  %v2251 = vpop.f32.mrb[0].mxu0
  %2252 = vdwg.mxu0
  %v2253 = vmul.f32 %v2191, %v1220
  %v2254 = vmul.f32 %v2194, %v1221
  %v2255 = vmul.f32 %v2199, %v1222
  %v2256 = vmul.f32 %v2202, %v1223
  %v2257 = vmul.f32 %v2207, %v1224
  %v2258 = vmul.f32 %v2210, %v1225
  %v2259 = vmul.f32 %v2215, %v1226
  %v2260 = vmul.f32 %v2218, %v1227
  %v2261 = vmul.f32 %v2223, %v1228
  %v2262 = vmul.f32 %v2226, %v1229
  %v2263 = vmul.f32 %v2231, %v1230
  %v2264 = vmul.f32 %v2234, %v1231
  %v2265 = vmul.f32 %v2239, %v1232
  %v2266 = vmul.f32 %v2242, %v1233
  %v2267 = vmul.f32 %v2247, %v1234
  %v2268 = vmul.f32 %v2250, %v1235
  %v2269 = vpack.c.bf16 %v2254, %v2253
  %v2270 = vpack.c.bf16 %v2256, %v2255
  %v2271 = vpack.c.bf16 %v2258, %v2257
  %v2272 = vpack.c.bf16 %v2260, %v2259
  %v2273 = vpack.c.bf16 %v2262, %v2261
  %v2274 = vpack.c.bf16 %v2264, %v2263
  %v2275 = vpack.c.bf16 %v2266, %v2265
  %v2276 = vpack.c.bf16 %v2268, %v2267
  %v2277 = vpack.c.bf16 %v1498, %v1496
  %v2278 = vpack.c.bf16 %v1499, %v1497
  %v2279 = vpack.c.bf16 %v1502, %v1500
  %v2280 = vpack.c.bf16 %v1503, %v1501
  %v2281 = vpack.c.bf16 %v1506, %v1504
  %v2282 = vpack.c.bf16 %v1507, %v1505
  %v2283 = vpack.c.bf16 %v1510, %v1508
  %v2284 = vpack.c.bf16 %v1511, %v1509
  %v2285 = vpack.c.bf16 %v1514, %v1512
  %v2286 = vpack.c.bf16 %v1515, %v1513
  %v2287 = vpack.c.bf16 %v1518, %v1516
  %v2288 = vpack.c.bf16 %v1519, %v1517
  %v2289 = vpack.c.bf16 %v1522, %v1520
  %v2290 = vpack.c.bf16 %v1523, %v1521
  %v2291 = vpack.c.bf16 %v1526, %v1524
  %v2292 = vpack.c.bf16 %v1527, %v1525
  %2293 = vxpose.xlu0.c.b16.start [1/8] %v2269, 128
  %2294 = vxpose.xlu0.c.b16.cont [2/8] %v2270, 128
  %2295 = vxpose.xlu0.c.b16.cont [3/8] %v2271, 128
  %2296 = vxpose.xlu0.c.b16.cont [4/8] %v2272, 128
  %2297 = vxpose.xlu0.c.b16.cont [5/8] %v2273, 128
  %2298 = vxpose.xlu0.c.b16.cont [6/8] %v2274, 128
  %2299 = vxpose.xlu0.c.b16.cont [7/8] %v2275, 128
  %2300 = vxpose.xlu0.c.b16.end [8/8] %v2276, 128
  %v2301 = vpop.trf.xlu0
  %v2302 = vpop.trf.xlu0
  %v2303 = vpop.trf.xlu0
  %v2304 = vpop.trf.xlu0
  %v2305 = vpop.trf.xlu0
  %v2306 = vpop.trf.xlu0
  %v2307 = vpop.trf.xlu0
  %v2308 = vpop.trf.xlu0
  %2309 = vmatprep.subr.bf16.mxu0 %v2278
  %2310 = vmatpush1.bf16.msra.mxu0 %v2277
  %2311 = vmatprep.subr.bf16.mxu0 %v2280
  %2312 = vmatpush1.bf16.msra.mxu0 %v2279
  %2313 = vmatprep.subr.bf16.mxu0 %v2282
  %2314 = vmatpush1.bf16.msra.mxu0 %v2281
  %2315 = vmatprep.subr.bf16.mxu0 %v2284
  %2316 = vmatpush1.bf16.msra.mxu0 %v2283
  %2317 = vmatprep.subr.bf16.mxu0 %v2286
  %2318 = vmatpush1.bf16.msra.mxu0 %v2285
  %2319 = vmatprep.subr.bf16.mxu0 %v2288
  %2320 = vmatpush1.bf16.msra.mxu0 %v2287
  %2321 = vmatprep.subr.bf16.mxu0 %v2290
  %2322 = vmatpush1.bf16.msra.mxu0 %v2289
  %2323 = vmatprep.subr.bf16.mxu0 %v2292
  %2324 = vmatpush1.bf16.msra.mxu0 %v2291
  %2325 = vmatprep.subr.bf16.mxu0 0
  %2326 = vmatpush1.bf16.msra.mxu0 0
  %2327 = vmatprep.subr.bf16.mxu0 0
  %2328 = vmatpush1.bf16.msra.mxu0 0
  %2329 = vmatprep.subr.bf16.mxu0 0
  %2330 = vmatpush1.bf16.msra.mxu0 0
  %2331 = vmatprep.subr.bf16.mxu0 0
  %2332 = vmatpush1.bf16.msra.mxu0 0
  %2333 = vmatprep.subr.bf16.mxu0 0
  %2334 = vmatpush1.bf16.msra.mxu0 0
  %2335 = vmatprep.subr.bf16.mxu0 0
  %2336 = vmatpush1.bf16.msra.mxu0 0
  %2337 = vmatprep.subr.bf16.mxu0 0
  %2338 = vmatpush1.bf16.msra.mxu0 0
  %2339 = vmatprep.subr.bf16.mxu0 0
  %2340 = vmatpush1.bf16.msra.mxu0 0
  %2341 = vmatprep.mubr.bf16.mxu0 0
  %2342 = vmatmul.mubr.bf16.gmra.mrb[0].mxu0 %v2301
  %v2343 = vpop.f32.mrb[0].mxu0
  %v2344 = vadd.f32 0.0, %v2343
  %v2345 = vpop.f32.mrb[0].mxu0
  %v2346 = vadd.f32 0.0, %v2345
  %v2347 = vpop.f32.mrb[0].mxu0
  %v2348 = vadd.f32 0.0, %v2347
  %v2349 = vpop.f32.mrb[0].mxu0
  %v2350 = vadd.f32 0.0, %v2349
  %2351 = vmatprep.mubr.bf16.mxu0 0
  %2352 = vmatmul.mubr.bf16.gmra.mrb[0].mxu0 %v2302
  %v2353 = vpop.f32.mrb[0].mxu0
  %v2354 = vadd.f32 0.0, %v2353
  %v2355 = vpop.f32.mrb[0].mxu0
  %v2356 = vadd.f32 0.0, %v2355
  %v2357 = vpop.f32.mrb[0].mxu0
  %v2358 = vadd.f32 0.0, %v2357
  %v2359 = vpop.f32.mrb[0].mxu0
  %v2360 = vadd.f32 0.0, %v2359
  %2361 = vmatprep.mubr.bf16.mxu0 0
  %2362 = vmatmul.mubr.bf16.gmra.mrb[0].mxu0 %v2303
  %v2363 = vpop.f32.mrb[0].mxu0
  %v2364 = vadd.f32 0.0, %v2363
  %v2365 = vpop.f32.mrb[0].mxu0
  %v2366 = vadd.f32 0.0, %v2365
  %v2367 = vpop.f32.mrb[0].mxu0
  %v2368 = vadd.f32 0.0, %v2367
  %v2369 = vpop.f32.mrb[0].mxu0
  %v2370 = vadd.f32 0.0, %v2369
  %2371 = vmatprep.mubr.bf16.mxu0 0
  %2372 = vmatmul.mubr.bf16.gmra.mrb[0].mxu0 %v2304
  %v2373 = vpop.f32.mrb[0].mxu0
  %v2374 = vadd.f32 0.0, %v2373
  %v2375 = vpop.f32.mrb[0].mxu0
  %v2376 = vadd.f32 0.0, %v2375
  %v2377 = vpop.f32.mrb[0].mxu0
  %v2378 = vadd.f32 0.0, %v2377
  %v2379 = vpop.f32.mrb[0].mxu0
  %v2380 = vadd.f32 0.0, %v2379
  %2381 = vmatprep.mubr.bf16.mxu0 0
  %2382 = vmatmul.mubr.bf16.gmra.mrb[0].mxu0 %v2305
  %v2383 = vpop.f32.mrb[0].mxu0
  %v2384 = vadd.f32 0.0, %v2383
  %v2385 = vpop.f32.mrb[0].mxu0
  %v2386 = vadd.f32 0.0, %v2385
  %v2387 = vpop.f32.mrb[0].mxu0
  %v2388 = vadd.f32 0.0, %v2387
  %v2389 = vpop.f32.mrb[0].mxu0
  %v2390 = vadd.f32 0.0, %v2389
  %2391 = vmatprep.mubr.bf16.mxu0 0
  %2392 = vmatmul.mubr.bf16.gmra.mrb[0].mxu0 %v2306
  %v2393 = vpop.f32.mrb[0].mxu0
  %v2394 = vadd.f32 0.0, %v2393
  %v2395 = vpop.f32.mrb[0].mxu0
  %v2396 = vadd.f32 0.0, %v2395
  %v2397 = vpop.f32.mrb[0].mxu0
  %v2398 = vadd.f32 0.0, %v2397
  %v2399 = vpop.f32.mrb[0].mxu0
  %v2400 = vadd.f32 0.0, %v2399
  %2401 = vmatprep.mubr.bf16.mxu0 0
  %2402 = vmatmul.mubr.bf16.gmra.mrb[0].mxu0 %v2307
  %v2403 = vpop.f32.mrb[0].mxu0
  %v2404 = vadd.f32 0.0, %v2403
  %v2405 = vpop.f32.mrb[0].mxu0
  %v2406 = vadd.f32 0.0, %v2405
  %v2407 = vpop.f32.mrb[0].mxu0
  %v2408 = vadd.f32 0.0, %v2407
  %v2409 = vpop.f32.mrb[0].mxu0
  %v2410 = vadd.f32 0.0, %v2409
  %2411 = vmatprep.mubr.bf16.mxu0 0
  %2412 = vmatmul.mubr.bf16.gmra.mrb[0].mxu0 %v2308
  %v2413 = vpop.f32.mrb[0].mxu0
  %v2414 = vadd.f32 0.0, %v2413
  %v2415 = vpop.f32.mrb[0].mxu0
  %v2416 = vadd.f32 0.0, %v2415
  %v2417 = vpop.f32.mrb[0].mxu0
  %v2418 = vadd.f32 0.0, %v2417
  %v2419 = vpop.f32.mrb[0].mxu0
  %v2420 = vadd.f32 0.0, %v2419
  %2421 = vdwg.mxu0
  %v2422 = vpack.c.bf16 %v2348, %v2344
  %v2423 = vpack.c.bf16 %v2350, %v2346
  %v2424 = vpack.c.bf16 %v2358, %v2354
  %v2425 = vpack.c.bf16 %v2360, %v2356
  %v2426 = vpack.c.bf16 %v2368, %v2364
  %v2427 = vpack.c.bf16 %v2370, %v2366
  %v2428 = vpack.c.bf16 %v2378, %v2374
  %v2429 = vpack.c.bf16 %v2380, %v2376
  %v2430 = vpack.c.bf16 %v2388, %v2384
  %v2431 = vpack.c.bf16 %v2390, %v2386
  %v2432 = vpack.c.bf16 %v2398, %v2394
  %v2433 = vpack.c.bf16 %v2400, %v2396
  %v2434 = vpack.c.bf16 %v2408, %v2404
  %v2435 = vpack.c.bf16 %v2410, %v2406
  %v2436 = vpack.c.bf16 %v2418, %v2414
  %v2437 = vpack.c.bf16 %v2420, %v2416
  %2439 = vset.pattern.permute.xlu0 0
  %2440 = vperm.xlu0 %2439, %v1237
  %v2441 = vpop.permute.xlu0 %2440
  %2443 = vmatprep.subr.bf16.mxu0 %v2423
  %2444 = vmatpush1.bf16.msra.mxu0 %v2422
  %2445 = vmatprep.subr.bf16.mxu0 %v2425
  %2446 = vmatpush1.bf16.msra.mxu0 %v2424
  %2447 = vmatprep.subr.bf16.mxu0 %v2427
  %2448 = vmatpush1.bf16.msra.mxu0 %v2426
  %2449 = vmatprep.subr.bf16.mxu0 %v2429
  %2450 = vmatpush1.bf16.msra.mxu0 %v2428
  %2451 = vmatprep.subr.bf16.mxu0 %v2431
  %2452 = vmatpush1.bf16.msra.mxu0 %v2430
  %2453 = vmatprep.subr.bf16.mxu0 %v2433
  %2454 = vmatpush1.bf16.msra.mxu0 %v2432
  %2455 = vmatprep.subr.bf16.mxu0 %v2435
  %2456 = vmatpush1.bf16.msra.mxu0 %v2434
  %2457 = vmatprep.subr.bf16.mxu0 %v2437
  %2458 = vmatpush1.bf16.msra.mxu0 %v2436
  %2459 = vmatprep.subr.bf16.mxu0 0
  %2460 = vmatpush1.bf16.msra.mxu0 0
  %2461 = vmatprep.subr.bf16.mxu0 0
  %2462 = vmatpush1.bf16.msra.mxu0 0
  %2463 = vmatprep.subr.bf16.mxu0 0
  %2464 = vmatpush1.bf16.msra.mxu0 0
  %2465 = vmatprep.subr.bf16.mxu0 0
  %2466 = vmatpush1.bf16.msra.mxu0 0
  %2467 = vmatprep.subr.bf16.mxu0 0
  %2468 = vmatpush1.bf16.msra.mxu0 0
  %2469 = vmatprep.subr.bf16.mxu0 0
  %2470 = vmatpush1.bf16.msra.mxu0 0
  %2471 = vmatprep.subr.bf16.mxu0 0
  %2472 = vmatpush1.bf16.msra.mxu0 0
  %2473 = vmatprep.subr.bf16.mxu0 0
  %2474 = vmatpush1.bf16.msra.mxu0 0
  %2475 = vmatprep.mubr.bf16.mxu0 0
  %2476 = vmatmul.mubr.bf16.gmra.mrb[0].mxu0 %v1236
  %v2477 = vpop.f32.mrb[0].mxu0
  %v2478 = vadd.f32 %v2441, %v2477
  %v2479 = vpop.f32.mrb[0].mxu0
  %v2480 = vadd.f32 %v2441, %v2479
  %v2481 = vpop.f32.mrb[0].mxu0
  %v2482 = vpop.f32.mrb[0].mxu0
  %2483 = vdwg.mxu0
  %v2484 = vadd.f32 %v2478, %v2480
  %2485 = vadd.xlane.f32.xlu0 %v2484
  %v2486 = vpop.xlane.xlu0 %2485
  %v2487 = vrot.slane %v2486, 4
  %v2488 = vadd.f32 %v2486, %v2487
  %v2489 = vrot.slane %v2488, 2
  %v2490 = vadd.f32 %v2488, %v2489
  %v2491 = vrot.slane %v2490, 1
  %v2492 = vadd.f32 %v2490, %v2491
  %s2493 = vtos %v2492
  %v2494 = vrcp.pop 2048.0
  %s2495 = vtos %v2494
  %s2496 = smul.f32 %s2493, %s2495
  %v2497 = vstv %s2496
  %v2498 = vsub.f32 %v2478, %v2497
  %v2499 = vsub.f32 %v2480, %v2497
  %v2500 = vmul.f32 %v2498, %v2498
  %v2501 = vmul.f32 %v2499, %v2499
  %v2502 = vadd.f32 %v2500, %v2501
  %2503 = vadd.xlane.f32.xlu0 %v2502
  %v2504 = vpop.xlane.xlu0 %2503
  %v2505 = vrot.slane %v2504, 4
  %v2506 = vadd.f32 %v2504, %v2505
  %v2507 = vrot.slane %v2506, 2
  %v2508 = vadd.f32 %v2506, %v2507
  %v2509 = vrot.slane %v2508, 1
  %v2510 = vadd.f32 %v2508, %v2509
  %s2511 = vtos %v2510
  %v2512 = vrcp.pop 2048.0
  %s2513 = vtos %v2512
  %s2514 = smul.f32 %s2511, %s2513
  %s2515 = sadd.f32 %s2514, 1e-05
  %v2516 = vstv %s2515
  %v2517 = vrsqrt.pop %v2516
  %s2518 = vtos %v2517
  %v2519 = vstv %s2518
  %v2520 = vmul.f32 %v2498, %v2519
  %v2521 = vmul.f32 %v2499, %v2519
  %2523 = vset.pattern.permute.xlu0 0
  %2524 = vperm.xlu0 %2523, %v1238
  %v2525 = vpop.permute.xlu0 %2524
  %v2527 = vmul.f32 %v2520, %v2525
  %v2528 = vmul.f32 %v2521, %v2525
  %2530 = vset.pattern.permute.xlu0 0
  %2531 = vperm.xlu0 %2530, %v1239
  %v2532 = vpop.permute.xlu0 %2531
  %v2534 = vadd.f32 %v2527, %v2532
  %v2535 = vadd.f32 %v2528, %v2532
  %2536 = vst [vmem:[%s12] sm:$0xff] %v2534
  %2537 = vst [vmem:[%s12 + $0x8] sm:$0xff] %v2535
  %v2538 = vmax.f32 %v612, %v616
  %v2539 = vmax.f32 %v2538, %v622
  %v2540 = vmax.f32 %v2539, %v626
  %v2541 = vrot.slane %v2540, 4
  %v2542 = vmax.f32 %v2540, %v2541
  %v2543 = vrot.slane %v2542, 2
  %v2544 = vmax.f32 %v2542, %v2543
  %v2545 = vrot.slane %v2544, 1
  %v2546 = vmax.f32 %v2544, %v2545
  %v2547 = vmax.f32 %v614, %v618
  %v2548 = vmax.f32 %v2547, %v624
  %v2549 = vmax.f32 %v2548, %v628
  %v2550 = vrot.slane %v2549, 4
  %v2551 = vmax.f32 %v2549, %v2550
  %v2552 = vrot.slane %v2551, 2
  %v2553 = vmax.f32 %v2551, %v2552
  %v2554 = vrot.slane %v2553, 1
  %v2555 = vmax.f32 %v2553, %v2554
  %v2556 = vmax.f32 %v632, %v636
  %v2557 = vmax.f32 %v2556, %v642
  %v2558 = vmax.f32 %v2557, %v646
  %v2559 = vrot.slane %v2558, 4
  %v2560 = vmax.f32 %v2558, %v2559
  %v2561 = vrot.slane %v2560, 2
  %v2562 = vmax.f32 %v2560, %v2561
  %v2563 = vrot.slane %v2562, 1
  %v2564 = vmax.f32 %v2562, %v2563
  %v2565 = vmax.f32 %v634, %v638
  %v2566 = vmax.f32 %v2565, %v644
  %v2567 = vmax.f32 %v2566, %v648
  %v2568 = vrot.slane %v2567, 4
  %v2569 = vmax.f32 %v2567, %v2568
  %v2570 = vrot.slane %v2569, 2
  %v2571 = vmax.f32 %v2569, %v2570
  %v2572 = vrot.slane %v2571, 1
  %v2573 = vmax.f32 %v2571, %v2572
  %v2574 = vmax.f32 %v652, %v656
  %v2575 = vmax.f32 %v2574, %v662
  %v2576 = vmax.f32 %v2575, %v666
  %v2577 = vrot.slane %v2576, 4
  %v2578 = vmax.f32 %v2576, %v2577
  %v2579 = vrot.slane %v2578, 2
  %v2580 = vmax.f32 %v2578, %v2579
  %v2581 = vrot.slane %v2580, 1
  %v2582 = vmax.f32 %v2580, %v2581
  %v2583 = vmax.f32 %v654, %v658
  %v2584 = vmax.f32 %v2583, %v664
  %v2585 = vmax.f32 %v2584, %v668
  %v2586 = vrot.slane %v2585, 4
  %v2587 = vmax.f32 %v2585, %v2586
  %v2588 = vrot.slane %v2587, 2
  %v2589 = vmax.f32 %v2587, %v2588
  %v2590 = vrot.slane %v2589, 1
  %v2591 = vmax.f32 %v2589, %v2590
  %v2592 = vmax.f32 %v672, %v676
  %v2593 = vmax.f32 %v2592, %v682
  %v2594 = vmax.f32 %v2593, %v686
  %v2595 = vrot.slane %v2594, 4
  %v2596 = vmax.f32 %v2594, %v2595
  %v2597 = vrot.slane %v2596, 2
  %v2598 = vmax.f32 %v2596, %v2597
  %v2599 = vrot.slane %v2598, 1
  %v2600 = vmax.f32 %v2598, %v2599
  %v2601 = vmax.f32 %v674, %v678
  %v2602 = vmax.f32 %v2601, %v684
  %v2603 = vmax.f32 %v2602, %v688
  %v2604 = vrot.slane %v2603, 4
  %v2605 = vmax.f32 %v2603, %v2604
  %v2606 = vrot.slane %v2605, 2
  %v2607 = vmax.f32 %v2605, %v2606
  %v2608 = vrot.slane %v2607, 1
  %v2609 = vmax.f32 %v2607, %v2608
  %v2610 = vsub.f32 %v612, %v2546
  %v2611 = vsub.f32 %v614, %v2555
  %v2612 = vsub.f32 %v616, %v2546
  %v2613 = vsub.f32 %v618, %v2555
  %v2614 = vsub.f32 %v622, %v2546
  %v2615 = vsub.f32 %v624, %v2555
  %v2616 = vsub.f32 %v626, %v2546
  %v2617 = vsub.f32 %v628, %v2555
  %v2618 = vsub.f32 %v632, %v2564
  %v2619 = vsub.f32 %v634, %v2573
  %v2620 = vsub.f32 %v636, %v2564
  %v2621 = vsub.f32 %v638, %v2573
  %v2622 = vsub.f32 %v642, %v2564
  %v2623 = vsub.f32 %v644, %v2573
  %v2624 = vsub.f32 %v646, %v2564
  %v2625 = vsub.f32 %v648, %v2573
  %v2626 = vsub.f32 %v652, %v2582
  %v2627 = vsub.f32 %v654, %v2591
  %v2628 = vsub.f32 %v656, %v2582
  %v2629 = vsub.f32 %v658, %v2591
  %v2630 = vsub.f32 %v662, %v2582
  %v2631 = vsub.f32 %v664, %v2591
  %v2632 = vsub.f32 %v666, %v2582
  %v2633 = vsub.f32 %v668, %v2591
  %v2634 = vsub.f32 %v672, %v2600
  %v2635 = vsub.f32 %v674, %v2609
  %v2636 = vsub.f32 %v676, %v2600
  %v2637 = vsub.f32 %v678, %v2609
  %v2638 = vsub.f32 %v682, %v2600
  %v2639 = vsub.f32 %v684, %v2609
  %v2640 = vsub.f32 %v686, %v2600
  %v2641 = vsub.f32 %v688, %v2609
  %v2642 = vmul.f32 %v2610, 1.442695
  %v2643 = vpow.pop %v2642
  %v2644 = vmul.f32 %v2611, 1.442695
  %v2645 = vpow.pop %v2644
  %v2646 = vmul.f32 %v2612, 1.442695
  %v2647 = vpow.pop %v2646
  %v2648 = vmul.f32 %v2613, 1.442695
  %v2649 = vpow.pop %v2648
  %v2650 = vmul.f32 %v2614, 1.442695
  %v2651 = vpow.pop %v2650
  %v2652 = vmul.f32 %v2615, 1.442695
  %v2653 = vpow.pop %v2652
  %v2654 = vmul.f32 %v2616, 1.442695
  %v2655 = vpow.pop %v2654
  %v2656 = vmul.f32 %v2617, 1.442695
  %v2657 = vpow.pop %v2656
  %v2658 = vmul.f32 %v2618, 1.442695
  %v2659 = vpow.pop %v2658
  %v2660 = vmul.f32 %v2619, 1.442695
  %v2661 = vpow.pop %v2660
  %v2662 = vmul.f32 %v2620, 1.442695
  %v2663 = vpow.pop %v2662
  %v2664 = vmul.f32 %v2621, 1.442695
  %v2665 = vpow.pop %v2664
  %v2666 = vmul.f32 %v2622, 1.442695
  %v2667 = vpow.pop %v2666
  %v2668 = vmul.f32 %v2623, 1.442695
  %v2669 = vpow.pop %v2668
  %v2670 = vmul.f32 %v2624, 1.442695
  %v2671 = vpow.pop %v2670
  %v2672 = vmul.f32 %v2625, 1.442695
  %v2673 = vpow.pop %v2672
  %v2674 = vmul.f32 %v2626, 1.442695
  %v2675 = vpow.pop %v2674
  %v2676 = vmul.f32 %v2627, 1.442695
  %v2677 = vpow.pop %v2676
  %v2678 = vmul.f32 %v2628, 1.442695
  %v2679 = vpow.pop %v2678
  %v2680 = vmul.f32 %v2629, 1.442695
  %v2681 = vpow.pop %v2680
  %v2682 = vmul.f32 %v2630, 1.442695
  %v2683 = vpow.pop %v2682
  %v2684 = vmul.f32 %v2631, 1.442695
  %v2685 = vpow.pop %v2684
  %v2686 = vmul.f32 %v2632, 1.442695
  %v2687 = vpow.pop %v2686
  %v2688 = vmul.f32 %v2633, 1.442695
  %v2689 = vpow.pop %v2688
  %v2690 = vmul.f32 %v2634, 1.442695
  %v2691 = vpow.pop %v2690
  %v2692 = vmul.f32 %v2635, 1.442695
  %v2693 = vpow.pop %v2692
  %v2694 = vmul.f32 %v2636, 1.442695
  %v2695 = vpow.pop %v2694
  %v2696 = vmul.f32 %v2637, 1.442695
  %v2697 = vpow.pop %v2696
  %v2698 = vmul.f32 %v2638, 1.442695
  %v2699 = vpow.pop %v2698
  %v2700 = vmul.f32 %v2639, 1.442695
  %v2701 = vpow.pop %v2700
  %v2702 = vmul.f32 %v2640, 1.442695
  %v2703 = vpow.pop %v2702
  %v2704 = vmul.f32 %v2641, 1.442695
  %v2705 = vpow.pop %v2704
  %v2706 = vadd.f32 %v2643, %v2647
  %v2707 = vadd.f32 %v2706, %v2651
  %v2708 = vadd.f32 %v2707, %v2655
  %v2709 = vrot.slane %v2708, 4
  %v2710 = vadd.f32 %v2708, %v2709
  %v2711 = vrot.slane %v2710, 2
  %v2712 = vadd.f32 %v2710, %v2711
  %v2713 = vrot.slane %v2712, 1
  %v2714 = vadd.f32 %v2712, %v2713
  %v2715 = vadd.f32 %v2645, %v2649
  %v2716 = vadd.f32 %v2715, %v2653
  %v2717 = vadd.f32 %v2716, %v2657
  %v2718 = vrot.slane %v2717, 4
  %v2719 = vadd.f32 %v2717, %v2718
  %v2720 = vrot.slane %v2719, 2
  %v2721 = vadd.f32 %v2719, %v2720
  %v2722 = vrot.slane %v2721, 1
  %v2723 = vadd.f32 %v2721, %v2722
  %v2724 = vadd.f32 %v2659, %v2663
  %v2725 = vadd.f32 %v2724, %v2667
  %v2726 = vadd.f32 %v2725, %v2671
  %v2727 = vrot.slane %v2726, 4
  %v2728 = vadd.f32 %v2726, %v2727
  %v2729 = vrot.slane %v2728, 2
  %v2730 = vadd.f32 %v2728, %v2729
  %v2731 = vrot.slane %v2730, 1
  %v2732 = vadd.f32 %v2730, %v2731
  %v2733 = vadd.f32 %v2661, %v2665
  %v2734 = vadd.f32 %v2733, %v2669
  %v2735 = vadd.f32 %v2734, %v2673
  %v2736 = vrot.slane %v2735, 4
  %v2737 = vadd.f32 %v2735, %v2736
  %v2738 = vrot.slane %v2737, 2
  %v2739 = vadd.f32 %v2737, %v2738
  %v2740 = vrot.slane %v2739, 1
  %v2741 = vadd.f32 %v2739, %v2740
  %v2742 = vadd.f32 %v2675, %v2679
  %v2743 = vadd.f32 %v2742, %v2683
  %v2744 = vadd.f32 %v2743, %v2687
  %v2745 = vrot.slane %v2744, 4
  %v2746 = vadd.f32 %v2744, %v2745
  %v2747 = vrot.slane %v2746, 2
  %v2748 = vadd.f32 %v2746, %v2747
  %v2749 = vrot.slane %v2748, 1
  %v2750 = vadd.f32 %v2748, %v2749
  %v2751 = vadd.f32 %v2677, %v2681
  %v2752 = vadd.f32 %v2751, %v2685
  %v2753 = vadd.f32 %v2752, %v2689
  %v2754 = vrot.slane %v2753, 4
  %v2755 = vadd.f32 %v2753, %v2754
  %v2756 = vrot.slane %v2755, 2
  %v2757 = vadd.f32 %v2755, %v2756
  %v2758 = vrot.slane %v2757, 1
  %v2759 = vadd.f32 %v2757, %v2758
  %v2760 = vadd.f32 %v2691, %v2695
  %v2761 = vadd.f32 %v2760, %v2699
  %v2762 = vadd.f32 %v2761, %v2703
  %v2763 = vrot.slane %v2762, 4
  %v2764 = vadd.f32 %v2762, %v2763
  %v2765 = vrot.slane %v2764, 2
  %v2766 = vadd.f32 %v2764, %v2765
  %v2767 = vrot.slane %v2766, 1
  %v2768 = vadd.f32 %v2766, %v2767
  %v2769 = vadd.f32 %v2693, %v2697
  %v2770 = vadd.f32 %v2769, %v2701
  %v2771 = vadd.f32 %v2770, %v2705
  %v2772 = vrot.slane %v2771, 4
  %v2773 = vadd.f32 %v2771, %v2772
  %v2774 = vrot.slane %v2773, 2
  %v2775 = vadd.f32 %v2773, %v2774
  %v2776 = vrot.slane %v2775, 1
  %v2777 = vadd.f32 %v2775, %v2776
  %v2778 = vrcp.pop %v2714
  %v2779 = vrcp.pop %v2723
  %v2780 = vrcp.pop %v2732
  %v2781 = vrcp.pop %v2741
  %v2782 = vrcp.pop %v2750
  %v2783 = vrcp.pop %v2759
  %v2784 = vrcp.pop %v2768
  %v2785 = vrcp.pop %v2777
  %v2786 = vmul.f32 %v2778, 0.17677669
  %v2787 = vmul.f32 %v2779, 0.17677669
  %v2788 = vmul.f32 %v2780, 0.17677669
  %v2789 = vmul.f32 %v2781, 0.17677669
  %v2790 = vmul.f32 %v2782, 0.17677669
  %v2791 = vmul.f32 %v2783, 0.17677669
  %v2792 = vmul.f32 %v2784, 0.17677669
  %v2793 = vmul.f32 %v2785, 0.17677669
  %v2794 = vmul.f32 %v2643, %v2786
  %v2795 = vmul.f32 %v2645, %v2787
  %v2796 = vmul.f32 %v2647, %v2786
  %v2797 = vmul.f32 %v2649, %v2787
  %v2798 = vmul.f32 %v2651, %v2786
  %v2799 = vmul.f32 %v2653, %v2787
  %v2800 = vmul.f32 %v2655, %v2786
  %v2801 = vmul.f32 %v2657, %v2787
  %v2802 = vmul.f32 %v2659, %v2788
  %v2803 = vmul.f32 %v2661, %v2789
  %v2804 = vmul.f32 %v2663, %v2788
  %v2805 = vmul.f32 %v2665, %v2789
  %v2806 = vmul.f32 %v2667, %v2788
  %v2807 = vmul.f32 %v2669, %v2789
  %v2808 = vmul.f32 %v2671, %v2788
  %v2809 = vmul.f32 %v2673, %v2789
  %v2810 = vmul.f32 %v2675, %v2790
  %v2811 = vmul.f32 %v2677, %v2791
  %v2812 = vmul.f32 %v2679, %v2790
  %v2813 = vmul.f32 %v2681, %v2791
  %v2814 = vmul.f32 %v2683, %v2790
  %v2815 = vmul.f32 %v2685, %v2791
  %v2816 = vmul.f32 %v2687, %v2790
  %v2817 = vmul.f32 %v2689, %v2791
  %v2818 = vmul.f32 %v2691, %v2792
  %v2819 = vmul.f32 %v2693, %v2793
  %v2820 = vmul.f32 %v2695, %v2792
  %v2821 = vmul.f32 %v2697, %v2793
  %v2822 = vmul.f32 %v2699, %v2792
  %v2823 = vmul.f32 %v2701, %v2793
  %v2824 = vmul.f32 %v2703, %v2792
  %v2825 = vmul.f32 %v2705, %v2793
  %v2826 = vmax.f32 %v692, %v694
  %2827 = vmax.xlane.f32.xlu0 %v2826
  %v2828 = vpop.xlane.xlu0 %2827
  %v2829 = vmax.f32 %v696, %v698
  %2830 = vmax.xlane.f32.xlu0 %v2829
  %v2831 = vpop.xlane.xlu0 %2830
  %v2832 = vmax.f32 %v702, %v704
  %2833 = vmax.xlane.f32.xlu0 %v2832
  %v2834 = vpop.xlane.xlu0 %2833
  %v2835 = vmax.f32 %v706, %v708
  %2836 = vmax.xlane.f32.xlu0 %v2835
  %v2837 = vpop.xlane.xlu0 %2836
  %v2838 = vmax.f32 %v712, %v714
  %2839 = vmax.xlane.f32.xlu0 %v2838
  %v2840 = vpop.xlane.xlu0 %2839
  %v2841 = vmax.f32 %v716, %v718
  %2842 = vmax.xlane.f32.xlu0 %v2841
  %v2843 = vpop.xlane.xlu0 %2842
  %v2844 = vmax.f32 %v722, %v724
  %2845 = vmax.xlane.f32.xlu0 %v2844
  %v2846 = vpop.xlane.xlu0 %2845
  %v2847 = vmax.f32 %v726, %v728
  %2848 = vmax.xlane.f32.xlu0 %v2847
  %v2849 = vpop.xlane.xlu0 %2848
  %v2850 = vmax.f32 %v732, %v734
  %2851 = vmax.xlane.f32.xlu0 %v2850
  %v2852 = vpop.xlane.xlu0 %2851
  %v2853 = vmax.f32 %v736, %v738
  %2854 = vmax.xlane.f32.xlu0 %v2853
  %v2855 = vpop.xlane.xlu0 %2854
  %v2856 = vmax.f32 %v742, %v744
  %2857 = vmax.xlane.f32.xlu0 %v2856
  %v2858 = vpop.xlane.xlu0 %2857
  %v2859 = vmax.f32 %v746, %v748
  %2860 = vmax.xlane.f32.xlu0 %v2859
  %v2861 = vpop.xlane.xlu0 %2860
  %v2862 = vmax.f32 %v752, %v754
  %2863 = vmax.xlane.f32.xlu0 %v2862
  %v2864 = vpop.xlane.xlu0 %2863
  %v2865 = vmax.f32 %v756, %v758
  %2866 = vmax.xlane.f32.xlu0 %v2865
  %v2867 = vpop.xlane.xlu0 %2866
  %v2868 = vmax.f32 %v762, %v764
  %2869 = vmax.xlane.f32.xlu0 %v2868
  %v2870 = vpop.xlane.xlu0 %2869
  %v2871 = vmax.f32 %v766, %v768
  %2872 = vmax.xlane.f32.xlu0 %v2871
  %v2873 = vpop.xlane.xlu0 %2872
  %v2874 = vmax.f32 %v2828, %v1049
  %v2875 = vmax.f32 %v2831, %v1054
  %v2876 = vmax.f32 %v2834, %v1059
  %v2877 = vmax.f32 %v2837, %v1064
  %v2878 = vmax.f32 %v2840, %v1069
  %v2879 = vmax.f32 %v2843, %v1074
  %v2880 = vmax.f32 %v2846, %v1079
  %v2881 = vmax.f32 %v2849, %v1084
  %v2882 = vmax.f32 %v2852, %v1089
  %v2883 = vmax.f32 %v2855, %v1094
  %v2884 = vmax.f32 %v2858, %v1099
  %v2885 = vmax.f32 %v2861, %v1104
  %v2886 = vmax.f32 %v2864, %v1109
  %v2887 = vmax.f32 %v2867, %v1114
  %v2888 = vmax.f32 %v2870, %v1119
  %v2889 = vmax.f32 %v2873, %v1124
  %2891 = vset.pattern.permute.xlu0 1
  %2892 = vperm.xlu0 %2891, %v2874
  %v2893 = vpop.permute.xlu0 %2892
  %2896 = vset.pattern.permute.xlu0 1
  %2897 = vperm.xlu0 %2896, %v2875
  %v2898 = vpop.permute.xlu0 %2897
  %2901 = vset.pattern.permute.xlu0 1
  %2902 = vperm.xlu0 %2901, %v2876
  %v2903 = vpop.permute.xlu0 %2902
  %2906 = vset.pattern.permute.xlu0 1
  %2907 = vperm.xlu0 %2906, %v2877
  %v2908 = vpop.permute.xlu0 %2907
  %2911 = vset.pattern.permute.xlu0 1
  %2912 = vperm.xlu0 %2911, %v2878
  %v2913 = vpop.permute.xlu0 %2912
  %2916 = vset.pattern.permute.xlu0 1
  %2917 = vperm.xlu0 %2916, %v2879
  %v2918 = vpop.permute.xlu0 %2917
  %2921 = vset.pattern.permute.xlu0 1
  %2922 = vperm.xlu0 %2921, %v2880
  %v2923 = vpop.permute.xlu0 %2922
  %2926 = vset.pattern.permute.xlu0 1
  %2927 = vperm.xlu0 %2926, %v2881
  %v2928 = vpop.permute.xlu0 %2927
  %2931 = vset.pattern.permute.xlu0 1
  %2932 = vperm.xlu0 %2931, %v2882
  %v2933 = vpop.permute.xlu0 %2932
  %2936 = vset.pattern.permute.xlu0 1
  %2937 = vperm.xlu0 %2936, %v2883
  %v2938 = vpop.permute.xlu0 %2937
  %2941 = vset.pattern.permute.xlu0 1
  %2942 = vperm.xlu0 %2941, %v2884
  %v2943 = vpop.permute.xlu0 %2942
  %2946 = vset.pattern.permute.xlu0 1
  %2947 = vperm.xlu0 %2946, %v2885
  %v2948 = vpop.permute.xlu0 %2947
  %2951 = vset.pattern.permute.xlu0 1
  %2952 = vperm.xlu0 %2951, %v2886
  %v2953 = vpop.permute.xlu0 %2952
  %2956 = vset.pattern.permute.xlu0 1
  %2957 = vperm.xlu0 %2956, %v2887
  %v2958 = vpop.permute.xlu0 %2957
  %2961 = vset.pattern.permute.xlu0 1
  %2962 = vperm.xlu0 %2961, %v2888
  %v2963 = vpop.permute.xlu0 %2962
  %2966 = vset.pattern.permute.xlu0 1
  %2967 = vperm.xlu0 %2966, %v2889
  %v2968 = vpop.permute.xlu0 %2967
  %v2970 = vsub.f32 %v692, %v2893
  %v2971 = vsub.f32 %v694, %v2893
  %v2972 = vsub.f32 %v696, %v2898
  %v2973 = vsub.f32 %v698, %v2898
  %v2974 = vsub.f32 %v702, %v2903
  %v2975 = vsub.f32 %v704, %v2903
  %v2976 = vsub.f32 %v706, %v2908
  %v2977 = vsub.f32 %v708, %v2908
  %v2978 = vsub.f32 %v712, %v2913
  %v2979 = vsub.f32 %v714, %v2913
  %v2980 = vsub.f32 %v716, %v2918
  %v2981 = vsub.f32 %v718, %v2918
  %v2982 = vsub.f32 %v722, %v2923
  %v2983 = vsub.f32 %v724, %v2923
  %v2984 = vsub.f32 %v726, %v2928
  %v2985 = vsub.f32 %v728, %v2928
  %v2986 = vsub.f32 %v732, %v2933
  %v2987 = vsub.f32 %v734, %v2933
  %v2988 = vsub.f32 %v736, %v2938
  %v2989 = vsub.f32 %v738, %v2938
  %v2990 = vsub.f32 %v742, %v2943
  %v2991 = vsub.f32 %v744, %v2943
  %v2992 = vsub.f32 %v746, %v2948
  %v2993 = vsub.f32 %v748, %v2948
  %v2994 = vsub.f32 %v752, %v2953
  %v2995 = vsub.f32 %v754, %v2953
  %v2996 = vsub.f32 %v756, %v2958
  %v2997 = vsub.f32 %v758, %v2958
  %v2998 = vsub.f32 %v762, %v2963
  %v2999 = vsub.f32 %v764, %v2963
  %v3000 = vsub.f32 %v766, %v2968
  %v3001 = vsub.f32 %v768, %v2968
  %v3002 = vmul.f32 %v2970, 1.442695
  %v3003 = vpow.pop %v3002
  %v3004 = vmul.f32 %v2971, 1.442695
  %v3005 = vpow.pop %v3004
  %v3006 = vmul.f32 %v2972, 1.442695
  %v3007 = vpow.pop %v3006
  %v3008 = vmul.f32 %v2973, 1.442695
  %v3009 = vpow.pop %v3008
  %v3010 = vmul.f32 %v2974, 1.442695
  %v3011 = vpow.pop %v3010
  %v3012 = vmul.f32 %v2975, 1.442695
  %v3013 = vpow.pop %v3012
  %v3014 = vmul.f32 %v2976, 1.442695
  %v3015 = vpow.pop %v3014
  %v3016 = vmul.f32 %v2977, 1.442695
  %v3017 = vpow.pop %v3016
  %v3018 = vmul.f32 %v2978, 1.442695
  %v3019 = vpow.pop %v3018
  %v3020 = vmul.f32 %v2979, 1.442695
  %v3021 = vpow.pop %v3020
  %v3022 = vmul.f32 %v2980, 1.442695
  %v3023 = vpow.pop %v3022
  %v3024 = vmul.f32 %v2981, 1.442695
  %v3025 = vpow.pop %v3024
  %v3026 = vmul.f32 %v2982, 1.442695
  %v3027 = vpow.pop %v3026
  %v3028 = vmul.f32 %v2983, 1.442695
  %v3029 = vpow.pop %v3028
  %v3030 = vmul.f32 %v2984, 1.442695
  %v3031 = vpow.pop %v3030
  %v3032 = vmul.f32 %v2985, 1.442695
  %v3033 = vpow.pop %v3032
  %v3034 = vmul.f32 %v2986, 1.442695
  %v3035 = vpow.pop %v3034
  %v3036 = vmul.f32 %v2987, 1.442695
  %v3037 = vpow.pop %v3036
  %v3038 = vmul.f32 %v2988, 1.442695
  %v3039 = vpow.pop %v3038
  %v3040 = vmul.f32 %v2989, 1.442695
  %v3041 = vpow.pop %v3040
  %v3042 = vmul.f32 %v2990, 1.442695
  %v3043 = vpow.pop %v3042
  %v3044 = vmul.f32 %v2991, 1.442695
  %v3045 = vpow.pop %v3044
  %v3046 = vmul.f32 %v2992, 1.442695
  %v3047 = vpow.pop %v3046
  %v3048 = vmul.f32 %v2993, 1.442695
  %v3049 = vpow.pop %v3048
  %v3050 = vmul.f32 %v2994, 1.442695
  %v3051 = vpow.pop %v3050
  %v3052 = vmul.f32 %v2995, 1.442695
  %v3053 = vpow.pop %v3052
  %v3054 = vmul.f32 %v2996, 1.442695
  %v3055 = vpow.pop %v3054
  %v3056 = vmul.f32 %v2997, 1.442695
  %v3057 = vpow.pop %v3056
  %v3058 = vmul.f32 %v2998, 1.442695
  %v3059 = vpow.pop %v3058
  %v3060 = vmul.f32 %v2999, 1.442695
  %v3061 = vpow.pop %v3060
  %v3062 = vmul.f32 %v3000, 1.442695
  %v3063 = vpow.pop %v3062
  %v3064 = vmul.f32 %v3001, 1.442695
  %v3065 = vpow.pop %v3064
  %v3066 = vsub.f32 %v1049, %v2874
  %v3067 = vsub.f32 %v1054, %v2875
  %v3068 = vsub.f32 %v1059, %v2876
  %v3069 = vsub.f32 %v1064, %v2877
  %v3070 = vsub.f32 %v1069, %v2878
  %v3071 = vsub.f32 %v1074, %v2879
  %v3072 = vsub.f32 %v1079, %v2880
  %v3073 = vsub.f32 %v1084, %v2881
  %v3074 = vsub.f32 %v1089, %v2882
  %v3075 = vsub.f32 %v1094, %v2883
  %v3076 = vsub.f32 %v1099, %v2884
  %v3077 = vsub.f32 %v1104, %v2885
  %v3078 = vsub.f32 %v1109, %v2886
  %v3079 = vsub.f32 %v1114, %v2887
  %v3080 = vsub.f32 %v1119, %v2888
  %v3081 = vsub.f32 %v1124, %v2889
  %v3082 = vmul.f32 %v3066, 1.442695
  %v3083 = vpow.pop %v3082
  %v3084 = vmul.f32 %v3067, 1.442695
  %v3085 = vpow.pop %v3084
  %v3086 = vmul.f32 %v3068, 1.442695
  %v3087 = vpow.pop %v3086
  %v3088 = vmul.f32 %v3069, 1.442695
  %v3089 = vpow.pop %v3088
  %v3090 = vmul.f32 %v3070, 1.442695
  %v3091 = vpow.pop %v3090
  %v3092 = vmul.f32 %v3071, 1.442695
  %v3093 = vpow.pop %v3092
  %v3094 = vmul.f32 %v3072, 1.442695
  %v3095 = vpow.pop %v3094
  %v3096 = vmul.f32 %v3073, 1.442695
  %v3097 = vpow.pop %v3096
  %v3098 = vmul.f32 %v3074, 1.442695
  %v3099 = vpow.pop %v3098
  %v3100 = vmul.f32 %v3075, 1.442695
  %v3101 = vpow.pop %v3100
  %v3102 = vmul.f32 %v3076, 1.442695
  %v3103 = vpow.pop %v3102
  %v3104 = vmul.f32 %v3077, 1.442695
  %v3105 = vpow.pop %v3104
  %v3106 = vmul.f32 %v3078, 1.442695
  %v3107 = vpow.pop %v3106
  %v3108 = vmul.f32 %v3079, 1.442695
  %v3109 = vpow.pop %v3108
  %v3110 = vmul.f32 %v3080, 1.442695
  %v3111 = vpow.pop %v3110
  %v3112 = vmul.f32 %v3081, 1.442695
  %v3113 = vpow.pop %v3112
  %v3114 = vadd.f32 %v3003, %v3005
  %3115 = vadd.xlane.f32.xlu0 %v3114
  %v3116 = vpop.xlane.xlu0 %3115
  %v3117 = vadd.f32 %v3007, %v3009
  %3118 = vadd.xlane.f32.xlu0 %v3117
  %v3119 = vpop.xlane.xlu0 %3118
  %v3120 = vadd.f32 %v3011, %v3013
  %3121 = vadd.xlane.f32.xlu0 %v3120
  %v3122 = vpop.xlane.xlu0 %3121
  %v3123 = vadd.f32 %v3015, %v3017
  %3124 = vadd.xlane.f32.xlu0 %v3123
  %v3125 = vpop.xlane.xlu0 %3124
  %v3126 = vadd.f32 %v3019, %v3021
  %3127 = vadd.xlane.f32.xlu0 %v3126
  %v3128 = vpop.xlane.xlu0 %3127
  %v3129 = vadd.f32 %v3023, %v3025
  %3130 = vadd.xlane.f32.xlu0 %v3129
  %v3131 = vpop.xlane.xlu0 %3130
  %v3132 = vadd.f32 %v3027, %v3029
  %3133 = vadd.xlane.f32.xlu0 %v3132
  %v3134 = vpop.xlane.xlu0 %3133
  %v3135 = vadd.f32 %v3031, %v3033
  %3136 = vadd.xlane.f32.xlu0 %v3135
  %v3137 = vpop.xlane.xlu0 %3136
  %v3138 = vadd.f32 %v3035, %v3037
  %3139 = vadd.xlane.f32.xlu0 %v3138
  %v3140 = vpop.xlane.xlu0 %3139
  %v3141 = vadd.f32 %v3039, %v3041
  %3142 = vadd.xlane.f32.xlu0 %v3141
  %v3143 = vpop.xlane.xlu0 %3142
  %v3144 = vadd.f32 %v3043, %v3045
  %3145 = vadd.xlane.f32.xlu0 %v3144
  %v3146 = vpop.xlane.xlu0 %3145
  %v3147 = vadd.f32 %v3047, %v3049
  %3148 = vadd.xlane.f32.xlu0 %v3147
  %v3149 = vpop.xlane.xlu0 %3148
  %v3150 = vadd.f32 %v3051, %v3053
  %3151 = vadd.xlane.f32.xlu0 %v3150
  %v3152 = vpop.xlane.xlu0 %3151
  %v3153 = vadd.f32 %v3055, %v3057
  %3154 = vadd.xlane.f32.xlu0 %v3153
  %v3155 = vpop.xlane.xlu0 %3154
  %v3156 = vadd.f32 %v3059, %v3061
  %3157 = vadd.xlane.f32.xlu0 %v3156
  %v3158 = vpop.xlane.xlu0 %3157
  %v3159 = vadd.f32 %v3063, %v3065
  %3160 = vadd.xlane.f32.xlu0 %v3159
  %v3161 = vpop.xlane.xlu0 %3160
  %v3162 = vadd.f32 %v3116, %v3083
  %v3163 = vadd.f32 %v3119, %v3085
  %v3164 = vadd.f32 %v3122, %v3087
  %v3165 = vadd.f32 %v3125, %v3089
  %v3166 = vadd.f32 %v3128, %v3091
  %v3167 = vadd.f32 %v3131, %v3093
  %v3168 = vadd.f32 %v3134, %v3095
  %v3169 = vadd.f32 %v3137, %v3097
  %v3170 = vadd.f32 %v3140, %v3099
  %v3171 = vadd.f32 %v3143, %v3101
  %v3172 = vadd.f32 %v3146, %v3103
  %v3173 = vadd.f32 %v3149, %v3105
  %v3174 = vadd.f32 %v3152, %v3107
  %v3175 = vadd.f32 %v3155, %v3109
  %v3176 = vadd.f32 %v3158, %v3111
  %v3177 = vadd.f32 %v3161, %v3113
  %v3178 = vrcp.pop %v3162
  %v3179 = vrcp.pop %v3163
  %v3180 = vrcp.pop %v3164
  %v3181 = vrcp.pop %v3165
  %v3182 = vrcp.pop %v3166
  %v3183 = vrcp.pop %v3167
  %v3184 = vrcp.pop %v3168
  %v3185 = vrcp.pop %v3169
  %v3186 = vrcp.pop %v3170
  %v3187 = vrcp.pop %v3171
  %v3188 = vrcp.pop %v3172
  %v3189 = vrcp.pop %v3173
  %v3190 = vrcp.pop %v3174
  %v3191 = vrcp.pop %v3175
  %v3192 = vrcp.pop %v3176
  %v3193 = vrcp.pop %v3177
  %3195 = vset.pattern.permute.xlu0 1
  %3196 = vperm.xlu0 %3195, %v3178
  %v3197 = vpop.permute.xlu0 %3196
  %3200 = vset.pattern.permute.xlu0 1
  %3201 = vperm.xlu0 %3200, %v3179
  %v3202 = vpop.permute.xlu0 %3201
  %3205 = vset.pattern.permute.xlu0 1
  %3206 = vperm.xlu0 %3205, %v3180
  %v3207 = vpop.permute.xlu0 %3206
  %3210 = vset.pattern.permute.xlu0 1
  %3211 = vperm.xlu0 %3210, %v3181
  %v3212 = vpop.permute.xlu0 %3211
  %3215 = vset.pattern.permute.xlu0 1
  %3216 = vperm.xlu0 %3215, %v3182
  %v3217 = vpop.permute.xlu0 %3216
  %3220 = vset.pattern.permute.xlu0 1
  %3221 = vperm.xlu0 %3220, %v3183
  %v3222 = vpop.permute.xlu0 %3221
  %3225 = vset.pattern.permute.xlu0 1
  %3226 = vperm.xlu0 %3225, %v3184
  %v3227 = vpop.permute.xlu0 %3226
  %3230 = vset.pattern.permute.xlu0 1
  %3231 = vperm.xlu0 %3230, %v3185
  %v3232 = vpop.permute.xlu0 %3231
  %3235 = vset.pattern.permute.xlu0 1
  %3236 = vperm.xlu0 %3235, %v3186
  %v3237 = vpop.permute.xlu0 %3236
  %3240 = vset.pattern.permute.xlu0 1
  %3241 = vperm.xlu0 %3240, %v3187
  %v3242 = vpop.permute.xlu0 %3241
  %3245 = vset.pattern.permute.xlu0 1
  %3246 = vperm.xlu0 %3245, %v3188
  %v3247 = vpop.permute.xlu0 %3246
  %3250 = vset.pattern.permute.xlu0 1
  %3251 = vperm.xlu0 %3250, %v3189
  %v3252 = vpop.permute.xlu0 %3251
  %3255 = vset.pattern.permute.xlu0 1
  %3256 = vperm.xlu0 %3255, %v3190
  %v3257 = vpop.permute.xlu0 %3256
  %3260 = vset.pattern.permute.xlu0 1
  %3261 = vperm.xlu0 %3260, %v3191
  %v3262 = vpop.permute.xlu0 %3261
  %3265 = vset.pattern.permute.xlu0 1
  %3266 = vperm.xlu0 %3265, %v3192
  %v3267 = vpop.permute.xlu0 %3266
  %3270 = vset.pattern.permute.xlu0 1
  %3271 = vperm.xlu0 %3270, %v3193
  %v3272 = vpop.permute.xlu0 %3271
  %v3274 = vmul.f32 %v3003, %v3197
  %v3275 = vmul.f32 %v3005, %v3197
  %v3276 = vmul.f32 %v3007, %v3202
  %v3277 = vmul.f32 %v3009, %v3202
  %v3278 = vmul.f32 %v3011, %v3207
  %v3279 = vmul.f32 %v3013, %v3207
  %v3280 = vmul.f32 %v3015, %v3212
  %v3281 = vmul.f32 %v3017, %v3212
  %v3282 = vmul.f32 %v3019, %v3217
  %v3283 = vmul.f32 %v3021, %v3217
  %v3284 = vmul.f32 %v3023, %v3222
  %v3285 = vmul.f32 %v3025, %v3222
  %v3286 = vmul.f32 %v3027, %v3227
  %v3287 = vmul.f32 %v3029, %v3227
  %v3288 = vmul.f32 %v3031, %v3232
  %v3289 = vmul.f32 %v3033, %v3232
  %v3290 = vmul.f32 %v3035, %v3237
  %v3291 = vmul.f32 %v3037, %v3237
  %v3292 = vmul.f32 %v3039, %v3242
  %v3293 = vmul.f32 %v3041, %v3242
  %v3294 = vmul.f32 %v3043, %v3247
  %v3295 = vmul.f32 %v3045, %v3247
  %v3296 = vmul.f32 %v3047, %v3252
  %v3297 = vmul.f32 %v3049, %v3252
  %v3298 = vmul.f32 %v3051, %v3257
  %v3299 = vmul.f32 %v3053, %v3257
  %v3300 = vmul.f32 %v3055, %v3262
  %v3301 = vmul.f32 %v3057, %v3262
  %v3302 = vmul.f32 %v3059, %v3267
  %v3303 = vmul.f32 %v3061, %v3267
  %v3304 = vmul.f32 %v3063, %v3272
  %v3305 = vmul.f32 %v3065, %v3272
  %v3306 = vmul.f32 %v3083, %v3178
  %v3307 = vmul.f32 %v3085, %v3179
  %v3308 = vmul.f32 %v3087, %v3180
  %v3309 = vmul.f32 %v3089, %v3181
  %v3310 = vmul.f32 %v3091, %v3182
  %v3311 = vmul.f32 %v3093, %v3183
  %v3312 = vmul.f32 %v3095, %v3184
  %v3313 = vmul.f32 %v3097, %v3185
  %v3314 = vmul.f32 %v3099, %v3186
  %v3315 = vmul.f32 %v3101, %v3187
  %v3316 = vmul.f32 %v3103, %v3188
  %v3317 = vmul.f32 %v3105, %v3189
  %v3318 = vmul.f32 %v3107, %v3190
  %v3319 = vmul.f32 %v3109, %v3191
  %v3320 = vmul.f32 %v3111, %v3192
  %v3321 = vmul.f32 %v3113, %v3193
  %v3322 = vpack.c.bf16 %v3276, %v3274
  %v3323 = vpack.c.bf16 %v3277, %v3275
  %v3324 = vpack.c.bf16 %v3280, %v3278
  %v3325 = vpack.c.bf16 %v3281, %v3279
  %v3326 = vpack.c.bf16 %v3284, %v3282
  %v3327 = vpack.c.bf16 %v3285, %v3283
  %v3328 = vpack.c.bf16 %v3288, %v3286
  %v3329 = vpack.c.bf16 %v3289, %v3287
  %v3330 = vpack.c.bf16 %v3292, %v3290
  %v3331 = vpack.c.bf16 %v3293, %v3291
  %v3332 = vpack.c.bf16 %v3296, %v3294
  %v3333 = vpack.c.bf16 %v3297, %v3295
  %v3334 = vpack.c.bf16 %v3300, %v3298
  %v3335 = vpack.c.bf16 %v3301, %v3299
  %v3336 = vpack.c.bf16 %v3304, %v3302
  %v3337 = vpack.c.bf16 %v3305, %v3303
  %v3338 = vpack.c.bf16 %v776, %v772
  %v3339 = vpack.c.bf16 %v778, %v774
  %v3340 = vpack.c.bf16 %v786, %v782
  %v3341 = vpack.c.bf16 %v788, %v784
  %v3342 = vpack.c.bf16 %v796, %v792
  %v3343 = vpack.c.bf16 %v798, %v794
  %v3344 = vpack.c.bf16 %v806, %v802
  %v3345 = vpack.c.bf16 %v808, %v804
  %v3346 = vpack.c.bf16 %v816, %v812
  %v3347 = vpack.c.bf16 %v818, %v814
  %v3348 = vpack.c.bf16 %v826, %v822
  %v3349 = vpack.c.bf16 %v828, %v824
  %v3350 = vpack.c.bf16 %v836, %v832
  %v3351 = vpack.c.bf16 %v838, %v834
  %v3352 = vpack.c.bf16 %v846, %v842
  %v3353 = vpack.c.bf16 %v848, %v844
  %3355 = vset.pattern.permute.xlu0 1
  %3356 = vperm.xlu0 %3355, %v3306
  %v3357 = vpop.permute.xlu0 %3356
  %3360 = vset.pattern.permute.xlu0 1
  %3361 = vperm.xlu0 %3360, %v3307
  %v3362 = vpop.permute.xlu0 %3361
  %3365 = vset.pattern.permute.xlu0 1
  %3366 = vperm.xlu0 %3365, %v3308
  %v3367 = vpop.permute.xlu0 %3366
  %3370 = vset.pattern.permute.xlu0 1
  %3371 = vperm.xlu0 %3370, %v3309
  %v3372 = vpop.permute.xlu0 %3371
  %3375 = vset.pattern.permute.xlu0 1
  %3376 = vperm.xlu0 %3375, %v3310
  %v3377 = vpop.permute.xlu0 %3376
  %3380 = vset.pattern.permute.xlu0 1
  %3381 = vperm.xlu0 %3380, %v3311
  %v3382 = vpop.permute.xlu0 %3381
  %3385 = vset.pattern.permute.xlu0 1
  %3386 = vperm.xlu0 %3385, %v3312
  %v3387 = vpop.permute.xlu0 %3386
  %3390 = vset.pattern.permute.xlu0 1
  %3391 = vperm.xlu0 %3390, %v3313
  %v3392 = vpop.permute.xlu0 %3391
  %3395 = vset.pattern.permute.xlu0 1
  %3396 = vperm.xlu0 %3395, %v3314
  %v3397 = vpop.permute.xlu0 %3396
  %3400 = vset.pattern.permute.xlu0 1
  %3401 = vperm.xlu0 %3400, %v3315
  %v3402 = vpop.permute.xlu0 %3401
  %3405 = vset.pattern.permute.xlu0 1
  %3406 = vperm.xlu0 %3405, %v3316
  %v3407 = vpop.permute.xlu0 %3406
  %3410 = vset.pattern.permute.xlu0 1
  %3411 = vperm.xlu0 %3410, %v3317
  %v3412 = vpop.permute.xlu0 %3411
  %3415 = vset.pattern.permute.xlu0 1
  %3416 = vperm.xlu0 %3415, %v3318
  %v3417 = vpop.permute.xlu0 %3416
  %3420 = vset.pattern.permute.xlu0 1
  %3421 = vperm.xlu0 %3420, %v3319
  %v3422 = vpop.permute.xlu0 %3421
  %3425 = vset.pattern.permute.xlu0 1
  %3426 = vperm.xlu0 %3425, %v3320
  %v3427 = vpop.permute.xlu0 %3426
  %3430 = vset.pattern.permute.xlu0 1
  %3431 = vperm.xlu0 %3430, %v3321
  %v3432 = vpop.permute.xlu0 %3431
  %v3434 = vlaneseq
  %v3435 = vshrl.u32 %v3434, 7
  %v3436 = vsub.s32 1, %v3435
  %v3437 = vrot.slane %v1217, %v3436
  %v3438 = vmul.f32 %v3357, %v3437
  %v3439 = vmul.f32 %v3362, %v3437
  %v3440 = vmul.f32 %v3367, %v3437
  %v3441 = vmul.f32 %v3372, %v3437
  %v3442 = vmul.f32 %v3377, %v3437
  %v3443 = vmul.f32 %v3382, %v3437
  %v3444 = vmul.f32 %v3387, %v3437
  %v3445 = vmul.f32 %v3392, %v3437
  %v3446 = vmul.f32 %v3397, %v3437
  %v3447 = vmul.f32 %v3402, %v3437
  %v3448 = vmul.f32 %v3407, %v3437
  %v3449 = vmul.f32 %v3412, %v3437
  %v3450 = vmul.f32 %v3417, %v3437
  %v3451 = vmul.f32 %v3422, %v3437
  %v3452 = vmul.f32 %v3427, %v3437
  %v3453 = vmul.f32 %v3432, %v3437
  %3454 = vmatprep.subr.bf16.mxu0 %v3339
  %3455 = vmatpush1.bf16.xpose.msra.mxu0 %v3338
  %3456 = vmatprep.subr.bf16.mxu0 %v3341
  %3457 = vmatpush1.bf16.xpose.msra.mxu0 %v3340
  %3458 = vmatprep.subr.bf16.mxu0 %v3343
  %3459 = vmatpush1.bf16.xpose.msra.mxu0 %v3342
  %3460 = vmatprep.subr.bf16.mxu0 %v3345
  %3461 = vmatpush1.bf16.xpose.msra.mxu0 %v3344
  %3462 = vmatprep.subr.bf16.mxu0 %v3347
  %3463 = vmatpush1.bf16.xpose.msra.mxu0 %v3346
  %3464 = vmatprep.subr.bf16.mxu0 %v3349
  %3465 = vmatpush1.bf16.xpose.msra.mxu0 %v3348
  %3466 = vmatprep.subr.bf16.mxu0 %v3351
  %3467 = vmatpush1.bf16.xpose.msra.mxu0 %v3350
  %3468 = vmatprep.subr.bf16.mxu0 %v3353
  %3469 = vmatpush1.bf16.xpose.msra.mxu0 %v3352
  %3470 = vmatprep.subr.bf16.mxu0 0
  %3471 = vmatpush1.bf16.xpose.msra.mxu0 0
  %3472 = vmatprep.subr.bf16.mxu0 0
  %3473 = vmatpush1.bf16.xpose.msra.mxu0 0
  %3474 = vmatprep.subr.bf16.mxu0 0
  %3475 = vmatpush1.bf16.xpose.msra.mxu0 0
  %3476 = vmatprep.subr.bf16.mxu0 0
  %3477 = vmatpush1.bf16.xpose.msra.mxu0 0
  %3478 = vmatprep.subr.bf16.mxu0 0
  %3479 = vmatpush1.bf16.xpose.msra.mxu0 0
  %3480 = vmatprep.subr.bf16.mxu0 0
  %3481 = vmatpush1.bf16.xpose.msra.mxu0 0
  %3482 = vmatprep.subr.bf16.mxu0 0
  %3483 = vmatpush1.bf16.xpose.msra.mxu0 0
  %3484 = vmatprep.subr.bf16.mxu0 0
  %3485 = vmatpush1.bf16.xpose.msra.mxu0 0
  %3486 = vmatprep.mubr.bf16.mxu0 %v3323
  %3487 = vmatmul.mubr.bf16.gmra.mrb[0].mxu0 %v3322
  %v3488 = vpop.f32.mrb[0].mxu0
  %v3489 = vadd.f32 %v3438, %v3488
  %v3490 = vpop.f32.mrb[0].mxu0
  %v3491 = vpop.f32.mrb[0].mxu0
  %v3492 = vadd.f32 %v3439, %v3491
  %v3493 = vpop.f32.mrb[0].mxu0
  %3494 = vmatprep.mubr.bf16.mxu0 %v3325
  %3495 = vmatmul.mubr.bf16.gmra.mrb[0].mxu0 %v3324
  %v3496 = vpop.f32.mrb[0].mxu0
  %v3497 = vadd.f32 %v3440, %v3496
  %v3498 = vpop.f32.mrb[0].mxu0
  %v3499 = vpop.f32.mrb[0].mxu0
  %v3500 = vadd.f32 %v3441, %v3499
  %v3501 = vpop.f32.mrb[0].mxu0
  %3502 = vmatprep.mubr.bf16.mxu0 %v3327
  %3503 = vmatmul.mubr.bf16.gmra.mrb[0].mxu0 %v3326
  %v3504 = vpop.f32.mrb[0].mxu0
  %v3505 = vadd.f32 %v3442, %v3504
  %v3506 = vpop.f32.mrb[0].mxu0
  %v3507 = vpop.f32.mrb[0].mxu0
  %v3508 = vadd.f32 %v3443, %v3507
  %v3509 = vpop.f32.mrb[0].mxu0
  %3510 = vmatprep.mubr.bf16.mxu0 %v3329
  %3511 = vmatmul.mubr.bf16.gmra.mrb[0].mxu0 %v3328
  %v3512 = vpop.f32.mrb[0].mxu0
  %v3513 = vadd.f32 %v3444, %v3512
  %v3514 = vpop.f32.mrb[0].mxu0
  %v3515 = vpop.f32.mrb[0].mxu0
  %v3516 = vadd.f32 %v3445, %v3515
  %v3517 = vpop.f32.mrb[0].mxu0
  %3518 = vmatprep.mubr.bf16.mxu0 %v3331
  %3519 = vmatmul.mubr.bf16.gmra.mrb[0].mxu0 %v3330
  %v3520 = vpop.f32.mrb[0].mxu0
  %v3521 = vadd.f32 %v3446, %v3520
  %v3522 = vpop.f32.mrb[0].mxu0
  %v3523 = vpop.f32.mrb[0].mxu0
  %v3524 = vadd.f32 %v3447, %v3523
  %v3525 = vpop.f32.mrb[0].mxu0
  %3526 = vmatprep.mubr.bf16.mxu0 %v3333
  %3527 = vmatmul.mubr.bf16.gmra.mrb[0].mxu0 %v3332
  %v3528 = vpop.f32.mrb[0].mxu0
  %v3529 = vadd.f32 %v3448, %v3528
  %v3530 = vpop.f32.mrb[0].mxu0
  %v3531 = vpop.f32.mrb[0].mxu0
  %v3532 = vadd.f32 %v3449, %v3531
  %v3533 = vpop.f32.mrb[0].mxu0
  %3534 = vmatprep.mubr.bf16.mxu0 %v3335
  %3535 = vmatmul.mubr.bf16.gmra.mrb[0].mxu0 %v3334
  %v3536 = vpop.f32.mrb[0].mxu0
  %v3537 = vadd.f32 %v3450, %v3536
  %v3538 = vpop.f32.mrb[0].mxu0
  %v3539 = vpop.f32.mrb[0].mxu0
  %v3540 = vadd.f32 %v3451, %v3539
  %v3541 = vpop.f32.mrb[0].mxu0
  %3542 = vmatprep.mubr.bf16.mxu0 %v3337
  %3543 = vmatmul.mubr.bf16.gmra.mrb[0].mxu0 %v3336
  %v3544 = vpop.f32.mrb[0].mxu0
  %v3545 = vadd.f32 %v3452, %v3544
  %v3546 = vpop.f32.mrb[0].mxu0
  %v3547 = vpop.f32.mrb[0].mxu0
  %v3548 = vadd.f32 %v3453, %v3547
  %v3549 = vpop.f32.mrb[0].mxu0
  %3550 = vdwg.mxu0
  %v3551 = vmul.f32 %v3489, %v1220
  %v3552 = vmul.f32 %v3492, %v1221
  %v3553 = vmul.f32 %v3497, %v1222
  %v3554 = vmul.f32 %v3500, %v1223
  %v3555 = vmul.f32 %v3505, %v1224
  %v3556 = vmul.f32 %v3508, %v1225
  %v3557 = vmul.f32 %v3513, %v1226
  %v3558 = vmul.f32 %v3516, %v1227
  %v3559 = vmul.f32 %v3521, %v1228
  %v3560 = vmul.f32 %v3524, %v1229
  %v3561 = vmul.f32 %v3529, %v1230
  %v3562 = vmul.f32 %v3532, %v1231
  %v3563 = vmul.f32 %v3537, %v1232
  %v3564 = vmul.f32 %v3540, %v1233
  %v3565 = vmul.f32 %v3545, %v1234
  %v3566 = vmul.f32 %v3548, %v1235
  %v3567 = vpack.c.bf16 %v3552, %v3551
  %v3568 = vpack.c.bf16 %v3554, %v3553
  %v3569 = vpack.c.bf16 %v3556, %v3555
  %v3570 = vpack.c.bf16 %v3558, %v3557
  %v3571 = vpack.c.bf16 %v3560, %v3559
  %v3572 = vpack.c.bf16 %v3562, %v3561
  %v3573 = vpack.c.bf16 %v3564, %v3563
  %v3574 = vpack.c.bf16 %v3566, %v3565
  %v3575 = vpack.c.bf16 %v2796, %v2794
  %v3576 = vpack.c.bf16 %v2797, %v2795
  %v3577 = vpack.c.bf16 %v2800, %v2798
  %v3578 = vpack.c.bf16 %v2801, %v2799
  %v3579 = vpack.c.bf16 %v2804, %v2802
  %v3580 = vpack.c.bf16 %v2805, %v2803
  %v3581 = vpack.c.bf16 %v2808, %v2806
  %v3582 = vpack.c.bf16 %v2809, %v2807
  %v3583 = vpack.c.bf16 %v2812, %v2810
  %v3584 = vpack.c.bf16 %v2813, %v2811
  %v3585 = vpack.c.bf16 %v2816, %v2814
  %v3586 = vpack.c.bf16 %v2817, %v2815
  %v3587 = vpack.c.bf16 %v2820, %v2818
  %v3588 = vpack.c.bf16 %v2821, %v2819
  %v3589 = vpack.c.bf16 %v2824, %v2822
  %v3590 = vpack.c.bf16 %v2825, %v2823
  %3591 = vxpose.xlu0.c.b16.start [1/8] %v3567, 128
  %3592 = vxpose.xlu0.c.b16.cont [2/8] %v3568, 128
  %3593 = vxpose.xlu0.c.b16.cont [3/8] %v3569, 128
  %3594 = vxpose.xlu0.c.b16.cont [4/8] %v3570, 128
  %3595 = vxpose.xlu0.c.b16.cont [5/8] %v3571, 128
  %3596 = vxpose.xlu0.c.b16.cont [6/8] %v3572, 128
  %3597 = vxpose.xlu0.c.b16.cont [7/8] %v3573, 128
  %3598 = vxpose.xlu0.c.b16.end [8/8] %v3574, 128
  %v3599 = vpop.trf.xlu0
  %v3600 = vpop.trf.xlu0
  %v3601 = vpop.trf.xlu0
  %v3602 = vpop.trf.xlu0
  %v3603 = vpop.trf.xlu0
  %v3604 = vpop.trf.xlu0
  %v3605 = vpop.trf.xlu0
  %v3606 = vpop.trf.xlu0
  %3607 = vmatprep.subr.bf16.mxu0 %v3576
  %3608 = vmatpush1.bf16.msra.mxu0 %v3575
  %3609 = vmatprep.subr.bf16.mxu0 %v3578
  %3610 = vmatpush1.bf16.msra.mxu0 %v3577
  %3611 = vmatprep.subr.bf16.mxu0 %v3580
  %3612 = vmatpush1.bf16.msra.mxu0 %v3579
  %3613 = vmatprep.subr.bf16.mxu0 %v3582
  %3614 = vmatpush1.bf16.msra.mxu0 %v3581
  %3615 = vmatprep.subr.bf16.mxu0 %v3584
  %3616 = vmatpush1.bf16.msra.mxu0 %v3583
  %3617 = vmatprep.subr.bf16.mxu0 %v3586
  %3618 = vmatpush1.bf16.msra.mxu0 %v3585
  %3619 = vmatprep.subr.bf16.mxu0 %v3588
  %3620 = vmatpush1.bf16.msra.mxu0 %v3587
  %3621 = vmatprep.subr.bf16.mxu0 %v3590
  %3622 = vmatpush1.bf16.msra.mxu0 %v3589
  %3623 = vmatprep.subr.bf16.mxu0 0
  %3624 = vmatpush1.bf16.msra.mxu0 0
  %3625 = vmatprep.subr.bf16.mxu0 0
  %3626 = vmatpush1.bf16.msra.mxu0 0
  %3627 = vmatprep.subr.bf16.mxu0 0
  %3628 = vmatpush1.bf16.msra.mxu0 0
  %3629 = vmatprep.subr.bf16.mxu0 0
  %3630 = vmatpush1.bf16.msra.mxu0 0
  %3631 = vmatprep.subr.bf16.mxu0 0
  %3632 = vmatpush1.bf16.msra.mxu0 0
  %3633 = vmatprep.subr.bf16.mxu0 0
  %3634 = vmatpush1.bf16.msra.mxu0 0
  %3635 = vmatprep.subr.bf16.mxu0 0
  %3636 = vmatpush1.bf16.msra.mxu0 0
  %3637 = vmatprep.subr.bf16.mxu0 0
  %3638 = vmatpush1.bf16.msra.mxu0 0
  %3639 = vmatprep.mubr.bf16.mxu0 0
  %3640 = vmatmul.mubr.bf16.gmra.mrb[0].mxu0 %v3599
  %v3641 = vpop.f32.mrb[0].mxu0
  %v3642 = vadd.f32 0.0, %v3641
  %v3643 = vpop.f32.mrb[0].mxu0
  %v3644 = vadd.f32 0.0, %v3643
  %v3645 = vpop.f32.mrb[0].mxu0
  %v3646 = vadd.f32 0.0, %v3645
  %v3647 = vpop.f32.mrb[0].mxu0
  %v3648 = vadd.f32 0.0, %v3647
  %3649 = vmatprep.mubr.bf16.mxu0 0
  %3650 = vmatmul.mubr.bf16.gmra.mrb[0].mxu0 %v3600
  %v3651 = vpop.f32.mrb[0].mxu0
  %v3652 = vadd.f32 0.0, %v3651
  %v3653 = vpop.f32.mrb[0].mxu0
  %v3654 = vadd.f32 0.0, %v3653
  %v3655 = vpop.f32.mrb[0].mxu0
  %v3656 = vadd.f32 0.0, %v3655
  %v3657 = vpop.f32.mrb[0].mxu0
  %v3658 = vadd.f32 0.0, %v3657
  %3659 = vmatprep.mubr.bf16.mxu0 0
  %3660 = vmatmul.mubr.bf16.gmra.mrb[0].mxu0 %v3601
  %v3661 = vpop.f32.mrb[0].mxu0
  %v3662 = vadd.f32 0.0, %v3661
  %v3663 = vpop.f32.mrb[0].mxu0
  %v3664 = vadd.f32 0.0, %v3663
  %v3665 = vpop.f32.mrb[0].mxu0
  %v3666 = vadd.f32 0.0, %v3665
  %v3667 = vpop.f32.mrb[0].mxu0
  %v3668 = vadd.f32 0.0, %v3667
  %3669 = vmatprep.mubr.bf16.mxu0 0
  %3670 = vmatmul.mubr.bf16.gmra.mrb[0].mxu0 %v3602
  %v3671 = vpop.f32.mrb[0].mxu0
  %v3672 = vadd.f32 0.0, %v3671
  %v3673 = vpop.f32.mrb[0].mxu0
  %v3674 = vadd.f32 0.0, %v3673
  %v3675 = vpop.f32.mrb[0].mxu0
  %v3676 = vadd.f32 0.0, %v3675
  %v3677 = vpop.f32.mrb[0].mxu0
  %v3678 = vadd.f32 0.0, %v3677
  %3679 = vmatprep.mubr.bf16.mxu0 0
  %3680 = vmatmul.mubr.bf16.gmra.mrb[0].mxu0 %v3603
  %v3681 = vpop.f32.mrb[0].mxu0
  %v3682 = vadd.f32 0.0, %v3681
  %v3683 = vpop.f32.mrb[0].mxu0
  %v3684 = vadd.f32 0.0, %v3683
  %v3685 = vpop.f32.mrb[0].mxu0
  %v3686 = vadd.f32 0.0, %v3685
  %v3687 = vpop.f32.mrb[0].mxu0
  %v3688 = vadd.f32 0.0, %v3687
  %3689 = vmatprep.mubr.bf16.mxu0 0
  %3690 = vmatmul.mubr.bf16.gmra.mrb[0].mxu0 %v3604
  %v3691 = vpop.f32.mrb[0].mxu0
  %v3692 = vadd.f32 0.0, %v3691
  %v3693 = vpop.f32.mrb[0].mxu0
  %v3694 = vadd.f32 0.0, %v3693
  %v3695 = vpop.f32.mrb[0].mxu0
  %v3696 = vadd.f32 0.0, %v3695
  %v3697 = vpop.f32.mrb[0].mxu0
  %v3698 = vadd.f32 0.0, %v3697
  %3699 = vmatprep.mubr.bf16.mxu0 0
  %3700 = vmatmul.mubr.bf16.gmra.mrb[0].mxu0 %v3605
  %v3701 = vpop.f32.mrb[0].mxu0
  %v3702 = vadd.f32 0.0, %v3701
  %v3703 = vpop.f32.mrb[0].mxu0
  %v3704 = vadd.f32 0.0, %v3703
  %v3705 = vpop.f32.mrb[0].mxu0
  %v3706 = vadd.f32 0.0, %v3705
  %v3707 = vpop.f32.mrb[0].mxu0
  %v3708 = vadd.f32 0.0, %v3707
  %3709 = vmatprep.mubr.bf16.mxu0 0
  %3710 = vmatmul.mubr.bf16.gmra.mrb[0].mxu0 %v3606
  %v3711 = vpop.f32.mrb[0].mxu0
  %v3712 = vadd.f32 0.0, %v3711
  %v3713 = vpop.f32.mrb[0].mxu0
  %v3714 = vadd.f32 0.0, %v3713
  %v3715 = vpop.f32.mrb[0].mxu0
  %v3716 = vadd.f32 0.0, %v3715
  %v3717 = vpop.f32.mrb[0].mxu0
  %v3718 = vadd.f32 0.0, %v3717
  %3719 = vdwg.mxu0
  %v3720 = vpack.c.bf16 %v3646, %v3642
  %v3721 = vpack.c.bf16 %v3648, %v3644
  %v3722 = vpack.c.bf16 %v3656, %v3652
  %v3723 = vpack.c.bf16 %v3658, %v3654
  %v3724 = vpack.c.bf16 %v3666, %v3662
  %v3725 = vpack.c.bf16 %v3668, %v3664
  %v3726 = vpack.c.bf16 %v3676, %v3672
  %v3727 = vpack.c.bf16 %v3678, %v3674
  %v3728 = vpack.c.bf16 %v3686, %v3682
  %v3729 = vpack.c.bf16 %v3688, %v3684
  %v3730 = vpack.c.bf16 %v3696, %v3692
  %v3731 = vpack.c.bf16 %v3698, %v3694
  %v3732 = vpack.c.bf16 %v3706, %v3702
  %v3733 = vpack.c.bf16 %v3708, %v3704
  %v3734 = vpack.c.bf16 %v3716, %v3712
  %v3735 = vpack.c.bf16 %v3718, %v3714
  %3736 = vmatprep.subr.bf16.mxu0 %v3721
  %3737 = vmatpush1.bf16.msra.mxu0 %v3720
  %3738 = vmatprep.subr.bf16.mxu0 %v3723
  %3739 = vmatpush1.bf16.msra.mxu0 %v3722
  %3740 = vmatprep.subr.bf16.mxu0 %v3725
  %3741 = vmatpush1.bf16.msra.mxu0 %v3724
  %3742 = vmatprep.subr.bf16.mxu0 %v3727
  %3743 = vmatpush1.bf16.msra.mxu0 %v3726
  %3744 = vmatprep.subr.bf16.mxu0 %v3729
  %3745 = vmatpush1.bf16.msra.mxu0 %v3728
  %3746 = vmatprep.subr.bf16.mxu0 %v3731
  %3747 = vmatpush1.bf16.msra.mxu0 %v3730
  %3748 = vmatprep.subr.bf16.mxu0 %v3733
  %3749 = vmatpush1.bf16.msra.mxu0 %v3732
  %3750 = vmatprep.subr.bf16.mxu0 %v3735
  %3751 = vmatpush1.bf16.msra.mxu0 %v3734
  %3752 = vmatprep.subr.bf16.mxu0 0
  %3753 = vmatpush1.bf16.msra.mxu0 0
  %3754 = vmatprep.subr.bf16.mxu0 0
  %3755 = vmatpush1.bf16.msra.mxu0 0
  %3756 = vmatprep.subr.bf16.mxu0 0
  %3757 = vmatpush1.bf16.msra.mxu0 0
  %3758 = vmatprep.subr.bf16.mxu0 0
  %3759 = vmatpush1.bf16.msra.mxu0 0
  %3760 = vmatprep.subr.bf16.mxu0 0
  %3761 = vmatpush1.bf16.msra.mxu0 0
  %3762 = vmatprep.subr.bf16.mxu0 0
  %3763 = vmatpush1.bf16.msra.mxu0 0
  %3764 = vmatprep.subr.bf16.mxu0 0
  %3765 = vmatpush1.bf16.msra.mxu0 0
  %3766 = vmatprep.subr.bf16.mxu0 0
  %3767 = vmatpush1.bf16.msra.mxu0 0
  %3768 = vmatprep.mubr.bf16.mxu0 0
  %3769 = vmatmul.mubr.bf16.gmra.mrb[0].mxu0 %v1236
  %v3770 = vpop.f32.mrb[0].mxu0
  %v3771 = vadd.f32 %v2441, %v3770
  %v3772 = vpop.f32.mrb[0].mxu0
  %v3773 = vadd.f32 %v2441, %v3772
  %v3774 = vpop.f32.mrb[0].mxu0
  %v3775 = vpop.f32.mrb[0].mxu0
  %3776 = vdwg.mxu0
  %v3777 = vadd.f32 %v3771, %v3773
  %3778 = vadd.xlane.f32.xlu0 %v3777
  %v3779 = vpop.xlane.xlu0 %3778
  %v3780 = vrot.slane %v3779, 4
  %v3781 = vadd.f32 %v3779, %v3780
  %v3782 = vrot.slane %v3781, 2
  %v3783 = vadd.f32 %v3781, %v3782
  %v3784 = vrot.slane %v3783, 1
  %v3785 = vadd.f32 %v3783, %v3784
  %s3786 = vtos %v3785
  %v3787 = vrcp.pop 2048.0
  %s3788 = vtos %v3787
  %s3789 = smul.f32 %s3786, %s3788
  %v3790 = vstv %s3789
  %v3791 = vsub.f32 %v3771, %v3790
  %v3792 = vsub.f32 %v3773, %v3790
  %v3793 = vmul.f32 %v3791, %v3791
  %v3794 = vmul.f32 %v3792, %v3792
  %v3795 = vadd.f32 %v3793, %v3794
  %3796 = vadd.xlane.f32.xlu0 %v3795
  %v3797 = vpop.xlane.xlu0 %3796
  %v3798 = vrot.slane %v3797, 4
  %v3799 = vadd.f32 %v3797, %v3798
  %v3800 = vrot.slane %v3799, 2
  %v3801 = vadd.f32 %v3799, %v3800
  %v3802 = vrot.slane %v3801, 1
  %v3803 = vadd.f32 %v3801, %v3802
  %s3804 = vtos %v3803
  %v3805 = vrcp.pop 2048.0
  %s3806 = vtos %v3805
  %s3807 = smul.f32 %s3804, %s3806
  %s3808 = sadd.f32 %s3807, 1e-05
  %v3809 = vstv %s3808
  %v3810 = vrsqrt.pop %v3809
  %s3811 = vtos %v3810
  %v3812 = vstv %s3811
  %v3813 = vmul.f32 %v3791, %v3812
  %v3814 = vmul.f32 %v3792, %v3812
  %v3815 = vmul.f32 %v3813, %v2525
  %v3816 = vmul.f32 %v3814, %v2525
  %v3817 = vadd.f32 %v3815, %v2532
  %v3818 = vadd.f32 %v3816, %v2532
  %3819 = vst [vmem:[%s12 + $0x10] sm:$0xff] %v3817
  %3820 = vst [vmem:[%s12 + $0x18] sm:$0xff] %v3818
  // Predicated region
  $region50: #{linear_cross_attention.1} parent=0 // pred_check
    _
  $region51: #{linear_cross_attention.1} parent=0 // pred_check_branch
    %3822 = sbr.rel (0) target = $region53
  $region52: #{linear_cross_attention.1} parent=0 // pred_region
    _
  $region53: #{linear_cross_attention.1} parent=0 // pred_fallthru
    _
  // Predicated region
  $region54: #{linear_cross_attention.1} parent=0 // pred_check
    _
  $region55: #{linear_cross_attention.1} parent=0 // pred_check_branch
    %3824 = sbr.rel (0) target = $region57
  $region56: #{linear_cross_attention.1} parent=0 // pred_region
    _
  $region57: #{linear_cross_attention.1} parent=0 // pred_fallthru
    _

</llo_original>
